<compile_context>
chip_gen: v7x
topology: tpu7x:2x2x1
jax: 0.10.0
libtpu: 0.0.40
codegen_flags: <defaults>
</compile_context>

<pallas_src>
import jax
import jax.numpy as jnp
from jax.experimental import pallas as pl
from jax.experimental.pallas import tpu as pltpu

EPS = 1e-3


def _bn_kernel(x_ref, p_ref, o_ref):
    # x_ref: (C_TILE, L) activation tile.
    # p_ref: (C, 2) whole packed [gamma, beta] array (resident across steps).
    # o_ref: (C_TILE, L) output tile.
    c_tile, L = o_ref.shape
    inv_L = 1.0 / L

    x = x_ref[...].astype(jnp.float32)

    # Lane reductions on the idle MXU (vector-extended slot) instead of XLU.
    ones = jnp.ones((L, 1), dtype=jnp.float32)
    s1 = jnp.dot(x, ones, preferred_element_type=jnp.float32)      # (c_tile, 1)
    mean = s1 * inv_L

    # Centered (two-pass) variance: numerically robust, VMEM-resident.
    xc = x - mean
    s2 = jnp.dot(xc * xc, ones, preferred_element_type=jnp.float32)
    var = s2 * inv_L                                                # biased variance

    # Per-channel gamma/beta slice for this grid step out of the resident
    # whole-array params block.
    start = pl.multiple_of(pl.program_id(0) * c_tile, 8)
    gb = p_ref[pl.ds(start, c_tile), :]                             # (c_tile, 2)
    gamma = gb[:, 0:1]
    beta = gb[:, 1:2]

    scale = gamma * jax.lax.rsqrt(var + EPS)                        # rsqrt -> EUP slot
    # Single normalize/store pass: 2 VALU ops per element.
    o_ref[...] = (xc * scale + beta).astype(o_ref.dtype)


def pack_bn_params(gamma, beta):
    """Pack gamma/beta into one (C, 2) f32 array.  Precompute once (hoisted
    out of the per-call hot path)."""
    return jnp.stack(
        [gamma.astype(jnp.float32), beta.astype(jnp.float32)], axis=1
    )


def batchnorm2d(x_nchw, packed_params, *, c_tile=672):
    """Training-mode BatchNorm2d forward (batch statistics over N, H, W).

    `packed_params` is the (C, 2) array from `pack_bn_params`.  Output dtype
    matches the input dtype (stats math is always f32).
    """
    N, C, H, W = x_nchw.shape
    assert C % c_tile == 0 and c_tile % 16 == 0, (C, c_tile)
    assert packed_params.shape == (C, 2)
    L = N * H * W

    # Glue: NCHW -> (C, N*H*W).  For N == 1 this is a pure (zero-copy) reshape.
    if N == 1:
        x2d = x_nchw.reshape(C, H * W)
    else:
        # TODO(synk): for N > 1 fold the batch axis into the in-kernel
        # reduction instead of materializing this HBM transpose.
        x2d = jnp.transpose(x_nchw, (1, 0, 2, 3)).reshape(C, L)

    out2d = pl.pallas_call(
        _bn_kernel,
        out_shape=jax.ShapeDtypeStruct((C, L), x2d.dtype),
        grid_spec=pltpu.PrefetchScalarGridSpec(
            num_scalar_prefetch=0,
            grid=(C // c_tile,),
            in_specs=[
                pl.BlockSpec((c_tile, L), lambda i: (i, 0)),
                # Whole params array, same block every step -> loaded once and
                # kept resident (no per-step side DMA).
                pl.BlockSpec((C, 2), lambda i: (0, 0)),
            ],
            out_specs=pl.BlockSpec((c_tile, L), lambda i: (i, 0)),
        ),
        compiler_params=pltpu.CompilerParams(
            dimension_semantics=("parallel",),
        ),
    )(x2d, packed_params)

    # Glue back: (C, N*H*W) -> NCHW.
    if N == 1:
        return out2d.reshape(1, C, H, W)
    return jnp.transpose(out2d.reshape(C, N, H, W), (1, 0, 2, 3))


def batchnorm2d_ref(x, gamma, beta):
    mean = jnp.mean(x, axis=(0, 2, 3), keepdims=True)
    var = jnp.mean((x - mean) ** 2, axis=(0, 2, 3), keepdims=True)
    g = gamma.reshape(1, -1, 1, 1)
    b = beta.reshape(1, -1, 1, 1)
    return g * (x - mean) * jax.lax.rsqrt(var + EPS) + b


if __name__ == "__main__":
    # Shapes consistent with the module: BatchNorm2d(1344) applied to
    # x526 = torch.randn([1, 1344, 14, 14]).
    N, C, H, W = 1, 1344, 14, 14
    key = jax.random.PRNGKey(0)
    kx, kg, kb = jax.random.split(key, 3)
    x = jax.random.normal(kx, (N, C, H, W), dtype=jnp.float32)
    # PyTorch default init is gamma=1, beta=0; perturb so the affine path is
    # actually exercised.
    gamma = 1.0 + 0.1 * jax.random.normal(kg, (C,), dtype=jnp.float32)
    beta = 0.1 * jax.random.normal(kb, (C,), dtype=jnp.float32)

    # Hoisted param packing (done once, outside the hot path).
    params = pack_bn_params(gamma, beta)

    # f32 path (matches the PyTorch module's dtype).
    out = jax.block_until_ready(batchnorm2d(x, params))
    ref = batchnorm2d_ref(x, gamma, beta)
    assert out.shape == (N, C, H, W)
    assert out.dtype == x.dtype
    assert jnp.allclose(out, ref, atol=1e-4, rtol=1e-4)

    # bf16 I/O path (stats still f32): halves HBM bytes on the mem-bound op.
    x_bf16 = x.astype(jnp.bfloat16)
    out_bf16 = jax.block_until_ready(batchnorm2d(x_bf16, params))
    ref_bf16 = batchnorm2d_ref(x_bf16.astype(jnp.float32), gamma, beta)
    assert out_bf16.dtype == jnp.bfloat16
    assert jnp.allclose(out_bf16.astype(jnp.float32), ref_bf16, atol=5e-2, rtol=5e-2)

    print("KERNEL_OK")
</pallas_src>

<mosaic_0001>
module attributes {stable_mosaic.version = 11 : i64} {
  func.func @_bn_kernel(%arg0: i32, %arg1: memref<672x196xf32, #tpu.memory_space<vmem>>, %arg2: memref<1344x2xf32, #tpu.memory_space<vmem>>, %arg3: memref<672x196xf32, #tpu.memory_space<vmem>>) attributes {dimension_semantics = [#tpu.dimension_semantics<parallel>], iteration_bounds = array<i64: 2>, scalar_prefetch = 0 : i64, scratch_operands = 0 : i64, tpu.core_type = #tpu.core_type<tc>, window_params = [{transform_indices = @transform_0, window_bounds = array<i64: 672, 196>}, {pipeline_mode = #tpu.pipeline_mode<synchronous>, transform_indices = @transform_1, window_bounds = array<i64: 1344, 2>}, {transform_indices = @transform_2, window_bounds = array<i64: 672, 196>}]} {
    %c0 = arith.constant 0 : index
    %c0_0 = arith.constant 0 : index
    %0 = vector.load %arg1[%c0, %c0_0] : memref<672x196xf32, #tpu.memory_space<vmem>>, vector<672x196xf32>
    %cst = arith.constant 1.000000e+00 : f32
    %1 = vector.broadcast %cst : f32 to vector<196x1xf32>
    %cst_1 = arith.constant dense<0.000000e+00> : vector<672x1xf32>
    %2 = tpu.matmul %0, %1, %cst_1 {dimension_numbers = #tpu.dot_dimension_numbers<[1], [0], [0], [1], [0, 0, 1, 1], [], []>} : vector<672x196xf32>, vector<196x1xf32>, vector<672x1xf32> -> vector<672x1xf32>
    %cst_2 = arith.constant 0.00510204071 : f32
    %3 = vector.broadcast %cst_2 : f32 to vector<672x1xf32>
    %4 = arith.mulf %2, %3 : vector<672x1xf32>
    %5 = vector.broadcast %4 : vector<672x1xf32> to vector<672x196xf32>
    %6 = arith.subf %0, %5 : vector<672x196xf32>
    %7 = arith.mulf %6, %6 : vector<672x196xf32>
    %cst_3 = arith.constant dense<0.000000e+00> : vector<672x1xf32>
    %8 = tpu.matmul %7, %1, %cst_3 {dimension_numbers = #tpu.dot_dimension_numbers<[1], [0], [0], [1], [0, 0, 1, 1], [], []>} : vector<672x196xf32>, vector<196x1xf32>, vector<672x1xf32> -> vector<672x1xf32>
    %cst_4 = arith.constant 0.00510204071 : f32
    %9 = vector.broadcast %cst_4 : f32 to vector<672x1xf32>
    %10 = arith.mulf %8, %9 : vector<672x1xf32>
    %c672_i32 = arith.constant 672 : i32
    %11 = arith.muli %arg0, %c672_i32 : i32
    %12 = tpu.assume_multiple %11, 8 : i32
    %13 = arith.index_cast %12 : i32 to index
    %c0_5 = arith.constant 0 : index
    %14 = vector.load %arg2[%13, %c0_5] : memref<1344x2xf32, #tpu.memory_space<vmem>>, vector<672x2xf32>
    %15 = vector.extract_strided_slice %14 {offsets = [0, 0], sizes = [672, 1], strides = [1, 1]} : vector<672x2xf32> to vector<672x1xf32>
    %16 = vector.extract_strided_slice %14 {offsets = [0, 1], sizes = [672, 1], strides = [1, 1]} : vector<672x2xf32> to vector<672x1xf32>
    %cst_6 = arith.constant 1.000000e-03 : f32
    %17 = vector.broadcast %cst_6 : f32 to vector<672x1xf32>
    %18 = arith.addf %10, %17 : vector<672x1xf32>
    %19 = math.rsqrt %18 : vector<672x1xf32>
    %20 = arith.mulf %15, %19 : vector<672x1xf32>
    %21 = vector.broadcast %20 : vector<672x1xf32> to vector<672x196xf32>
    %22 = arith.mulf %6, %21 : vector<672x196xf32>
    %23 = vector.broadcast %16 : vector<672x1xf32> to vector<672x196xf32>
    %24 = arith.addf %22, %23 : vector<672x196xf32>
    %c0_7 = arith.constant 0 : index
    %c0_8 = arith.constant 0 : index
    %25 = vector.load %arg3[%c0_7, %c0_8] : memref<672x196xf32, #tpu.memory_space<vmem>>, vector<672x196xf32>
    tpu.vector_store %arg3[%c0_7, %c0_8], %24 {strides = array<i32>} : memref<672x196xf32, #tpu.memory_space<vmem>>, vector<672x196xf32>,
    return
  }
  func.func @transform_0(%arg0: i32) -> (i32, i32) {
    %c0_i32 = arith.constant 0 : i32
    %c0_i32_0 = arith.constant 0 : i32
    return %arg0, %c0_i32 : i32, i32
  }
  func.func @transform_1(%arg0: i32) -> (i32, i32) {
    %c0_i32 = arith.constant 0 : i32
    %c0_i32_0 = arith.constant 0 : i32
    %c0_i32_1 = arith.constant 0 : i32
    return %c0_i32, %c0_i32_0 : i32, i32
  }
  func.func @transform_2(%arg0: i32) -> (i32, i32) {
    %c0_i32 = arith.constant 0 : i32
    %c0_i32_0 = arith.constant 0 : i32
    return %arg0, %c0_i32 : i32, i32
  }
}

</mosaic_0001>

<llo_original>
// kernel: tpu_custom_call.1
$region0: #{tpu_custom_call.1}
  #allocation0 [shape = 'u32[]', space=smem, size = 0x4, offset = 0x4, fixed_abs, tag = 'smem constant byte address 0x4 - core index']
  #allocation1 [shape = 'u32[144,128]{1,0:T(1,128)}', space=vmem, size = 0x12000, scoped, tag = 'internal scratch']
  %s0 = inlined_call_operand.vmem [shape: f32[1344,196], index: 0, kind: input, shape index: {}]
  %s1 = inlined_call_operand.vmem [shape: f32[1344,2], index: 1, kind: input, shape index: {}]
  %s2 = inlined_call_operand.vmem [shape: f32[1344,196], index: 2, kind: output, shape index: {}]
  %s3 = sld [smem:[#allocation0]]
  $region41: #{tpu_custom_call.1} parent=0
    _
  %s5 = ssub.s32 1, %s3
  %s6 = scalar_select 0, %s5, %s3
  loop: start=0, step=1, limit=4
  $region2: #{tpu_custom_call.1} parent=0 // loop_pre_header
    _
  $region3: #{tpu_custom_call.1} parent=0 // loop_header
    %s8 = sphi 0, %s12
    %p9 = scmp.ge.s32.totalorder %s8, 4
    %s18 = sphi 0, %s20
    %s21 = sphi 0, %s18
    %s22 = sphi 0, %s21
    %s38 = sphi 0, %s22
    %s42 = sphi 0, %s42
    %s44 = sphi 0, %s42
    %s45 = sphi 0, %s44
    %s59 = sphi 0, %s45
    %s65 = sphi 0, %s67
    %s68 = sphi 0, %s65
    %s69 = sphi 0, %s68
    %s85 = sphi 0, %s69
  $region4: #{tpu_custom_call.1} parent=0 // loop_header_branch
    %11 = sbr.rel (%p9) target = $region8
  $region5: #{tpu_custom_call.1} parent=0 // loop_body
    %s13 = ssub.s32 %s8, 1
    %s14 = ssub.s32 %s8, 2
    %s15 = sadd.s32 %s8, 1
    %s16 = ssub.s32 %s8, %s15
    %p17 = scmp.eq.s32.totalorder %s16, 0
    %s19 = sadd.s32 %s18, 1
    %s20 = scalar_select %p17, %s18, %s19
    %p23 = pneg %p17
    %p24 = scmp.eq.s32.totalorder %s8, 1
    %p25 = por %p23, %p24
    %p26 = scmp.ne.s32.totalorder %s18, %s21
    %p27 = scmp.eq.s32.totalorder %s8, 0
    %p28 = por %p26, %p27
    %p29 = scmp.ne.s32.totalorder %s18, %s21
    %p30 = scmp.eq.s32.totalorder %s13, 1
    %p31 = por %p29, %p30
    %p32 = scmp.ne.s32.totalorder %s21, %s22
    %p33 = scmp.eq.s32.totalorder %s13, 0
    %p34 = por %p32, %p33
    %p35 = scmp.ne.s32.totalorder %s21, %s22
    %p36 = scmp.eq.s32.totalorder %s14, 1
    %p37 = por %p35, %p36
    %p39 = scmp.ne.s32.totalorder %s22, %s38
    %p40 = scmp.eq.s32.totalorder %s14, 0
    %p41 = por %p39, %p40
    %s43 = sadd.s32 %s42, 1
    %p46 = scmp.eq.s32.totalorder %s8, 1
    %p47 = scmp.ne.s32.totalorder %s42, %s44
    %p48 = scmp.eq.s32.totalorder %s8, 0
    %p49 = por %p47, %p48
    %p50 = scmp.ne.s32.totalorder %s42, %s44
    %p51 = scmp.eq.s32.totalorder %s13, 1
    %p52 = por %p50, %p51
    %p53 = scmp.ne.s32.totalorder %s44, %s45
    %p54 = scmp.eq.s32.totalorder %s13, 0
    %p55 = por %p53, %p54
    %p56 = scmp.ne.s32.totalorder %s44, %s45
    %p57 = scmp.eq.s32.totalorder %s14, 1
    %p58 = por %p56, %p57
    %p60 = scmp.ne.s32.totalorder %s45, %s59
    %p61 = scmp.eq.s32.totalorder %s14, 0
    %p62 = por %p60, %p61
    %s63 = ssub.s32 %s8, %s15
    %p64 = scmp.eq.s32.totalorder %s63, 0
    %s66 = sadd.s32 %s65, 1
    %s67 = scalar_select %p64, %s65, %s66
    %p70 = pneg %p64
    %p71 = scmp.eq.s32.totalorder %s8, 1
    %p72 = por %p70, %p71
    %p73 = scmp.ne.s32.totalorder %s65, %s68
    %p74 = scmp.eq.s32.totalorder %s8, 0
    %p75 = por %p73, %p74
    %p76 = scmp.ne.s32.totalorder %s65, %s68
    %p77 = scmp.eq.s32.totalorder %s13, 1
    %p78 = por %p76, %p77
    %p79 = scmp.ne.s32.totalorder %s68, %s69
    %p80 = scmp.eq.s32.totalorder %s13, 0
    %p81 = por %p79, %p80
    %p82 = scmp.ne.s32.totalorder %s68, %s69
    %p83 = scmp.eq.s32.totalorder %s14, 1
    %p84 = por %p82, %p83
    %p86 = scmp.ne.s32.totalorder %s69, %s85
    %p87 = scmp.eq.s32.totalorder %s14, 0
    %p88 = por %p86, %p87
    %p89 = scmp.le.s32.totalorder 1, %s8
    %p90 = scmp.lt.s32.totalorder %s8, 3
    %p91 = pnand %p89, %p90
    %p92 = pneg %p91
    // Predicated region
    $region9: #{tpu_custom_call.1} parent=5 // pred_check
      _
    $region10: #{tpu_custom_call.1} parent=5 // pred_check_branch
      %94 = sbr.rel (%p91) target = $region12
    $region11: #{tpu_custom_call.1} parent=5 // pred_region
      %s95 = ssub.s32 %s8, 1
      // Predicated region
      $region13: #{tpu_custom_call.1} parent=11 // pred_check
        %p96 = pneg %p55
      $region14: #{tpu_custom_call.1} parent=11 // pred_check_branch
        %98 = sbr.rel (%p96) target = $region16
      $region15: #{tpu_custom_call.1} parent=11 // pred_region
        _
      $region16: #{tpu_custom_call.1} parent=11 // pred_fallthru
        _
    $region12: #{tpu_custom_call.1} parent=5 // pred_fallthru
      _
    %p99 = scmp.lt.s32.totalorder %s8, 2
    // Predicated region
    $region17: #{tpu_custom_call.1} parent=5 // pred_check
      %p100 = pneg %p99
    $region18: #{tpu_custom_call.1} parent=5 // pred_check_branch
      %102 = sbr.rel (%p100) target = $region20
    $region19: #{tpu_custom_call.1} parent=5 // pred_region
      // Predicated region
      $region21: #{tpu_custom_call.1} parent=19 // pred_check
        %p103 = pneg %p28
      $region22: #{tpu_custom_call.1} parent=19 // pred_check_branch
        %105 = sbr.rel (%p103) target = $region24
      $region23: #{tpu_custom_call.1} parent=19 // pred_region
        %s106 = smul.u32 84, %s8
        %p107 = scmp.lt.s32.totalorder %s106, 167
        %s108 = scalar_select %p107, %s106, 167
        %s109 = smul.addr %s108, 2
        %s110 = smul.addr %s109, 8
        %s111 = scalar_lea.vmem %s0, %s110
        %s112 = smul.u32 84, %s8
      $region24: #{tpu_custom_call.1} parent=19 // pred_fallthru
        _
    $region20: #{tpu_custom_call.1} parent=5 // pred_fallthru
      _
    %p113 = scmp.le.s32.totalorder 1, %s8
    %p114 = scmp.lt.s32.totalorder %s8, 3
    %p115 = pnand %p113, %p114
    %p116 = pneg %p115
    // Predicated region
    $region25: #{tpu_custom_call.1} parent=5 // pred_check
      _
    $region26: #{tpu_custom_call.1} parent=5 // pred_check_branch
      %118 = sbr.rel (%p115) target = $region28
    $region27: #{tpu_custom_call.1} parent=5 // pred_region
      %s119 = ssub.s32 %s8, 1
      %s120 = smul.u32 84, %s13
      %p121 = scmp.lt.s32.totalorder %s120, 167
      %s122 = scalar_select %p121, %s120, 167
      %s123 = smul.addr %s122, 2
      %s124 = smul.addr %s123, 8
      %s125 = scalar_lea.vmem %s0, %s124
      %p126 = pneg %p34
      %p127 = pneg %p31
      %p128 = pneg %p55
      %p129 = pneg %p52
      %p130 = pneg %p81
      %p131 = pneg %p78
      %s132 = smul.u32 84, %s13
      %p133 = scmp.lt.s32.totalorder %s132, 167
      %s134 = scalar_select %p133, %s132, 167
      %s135 = smul.addr %s134, 2
      %s136 = smul.addr %s135, 8
      %s137 = scalar_lea.vmem %s2, %s136
      %s138 = smul.u32 84, %s13
      %p139 = scmp.lt.s32.totalorder %s138, 167
      %s140 = scalar_select %p139, %s138, 167
      %s141 = smul.addr %s140, 2
      %s142 = smul.addr %s141, 8
      %s143 = scalar_lea.vmem %s0, %s142
      %s144 = smul.u32 84, %s13
      %s145 = smul.u32 84, %s13
      %p146 = scmp.lt.s32.totalorder %s145, 167
      %s147 = scalar_select %p146, %s145, 167
      %s148 = smul.addr %s147, 2
      %s149 = smul.addr %s148, 8
      %s150 = scalar_lea.vmem %s2, %s149
      %s151 = smul.u32 84, %s13
      %v152 = vld [vmem:[%s143] sm:$0xff]
      %v153 = vld [vmem:[%s143 + $0x8] sm:$0xff]
      %v154 = vld [vmem:[%s143 + $0x10] sm:$0xff]
      %v155 = vld [vmem:[%s143 + $0x18] sm:$0xff]
      %v156 = vld [vmem:[%s143 + $0x20] sm:$0xff]
      %v157 = vld [vmem:[%s143 + $0x28] sm:$0xff]
      %v158 = vld [vmem:[%s143 + $0x30] sm:$0xff]
      %v159 = vld [vmem:[%s143 + $0x38] sm:$0xff]
      %v160 = vld [vmem:[%s143 + $0x40] sm:$0xff]
      %v161 = vld [vmem:[%s143 + $0x48] sm:$0xff]
      %v162 = vld [vmem:[%s143 + $0x50] sm:$0xff]
      %v163 = vld [vmem:[%s143 + $0x58] sm:$0xff]
      %v164 = vld [vmem:[%s143 + $0x60] sm:$0xff]
      %v165 = vld [vmem:[%s143 + $0x68] sm:$0xff]
      %v166 = vld [vmem:[%s143 + $0x70] sm:$0xff]
      %v167 = vld [vmem:[%s143 + $0x78] sm:$0xff]
      %v168 = vld [vmem:[%s143 + $0x80] sm:$0xff]
      %v169 = vld [vmem:[%s143 + $0x88] sm:$0xff]
      %v170 = vld [vmem:[%s143 + $0x90] sm:$0xff]
      %v171 = vld [vmem:[%s143 + $0x98] sm:$0xff]
      %v172 = vld [vmem:[%s143 + $0xa0] sm:$0xff]
      %v173 = vld [vmem:[%s143 + $0xa8] sm:$0xff]
      %v174 = vld [vmem:[%s143 + $0xb0] sm:$0xff]
      %v175 = vld [vmem:[%s143 + $0xb8] sm:$0xff]
      %v176 = vld [vmem:[%s143 + $0xc0] sm:$0xff]
      %v177 = vld [vmem:[%s143 + $0xc8] sm:$0xff]
      %v178 = vld [vmem:[%s143 + $0xd0] sm:$0xff]
      %v179 = vld [vmem:[%s143 + $0xd8] sm:$0xff]
      %v180 = vld [vmem:[%s143 + $0xe0] sm:$0xff]
      %v181 = vld [vmem:[%s143 + $0xe8] sm:$0xff]
      %v182 = vld [vmem:[%s143 + $0xf0] sm:$0xff]
      %v183 = vld [vmem:[%s143 + $0xf8] sm:$0xff]
      %v184 = vld [vmem:[%s143 + $0x100] sm:$0xff]
      %v185 = vld [vmem:[%s143 + $0x108] sm:$0xff]
      %v186 = vld [vmem:[%s143 + $0x110] sm:$0xff]
      %v187 = vld [vmem:[%s143 + $0x118] sm:$0xff]
      %v188 = vld [vmem:[%s143 + $0x120] sm:$0xff]
      %v189 = vld [vmem:[%s143 + $0x128] sm:$0xff]
      %v190 = vld [vmem:[%s143 + $0x130] sm:$0xff]
      %v191 = vld [vmem:[%s143 + $0x138] sm:$0xff]
      %v192 = vld [vmem:[%s143 + $0x140] sm:$0xff]
      %v193 = vld [vmem:[%s143 + $0x148] sm:$0xff]
      %v194 = vld [vmem:[%s143 + $0x150] sm:$0xff]
      %v195 = vld [vmem:[%s143 + $0x158] sm:$0xff]
      %v196 = vld [vmem:[%s143 + $0x160] sm:$0xff]
      %v197 = vld [vmem:[%s143 + $0x168] sm:$0xff]
      %v198 = vld [vmem:[%s143 + $0x170] sm:$0xff]
      %v199 = vld [vmem:[%s143 + $0x178] sm:$0xff]
      %v200 = vld [vmem:[%s143 + $0x180] sm:$0xff]
      %v201 = vld [vmem:[%s143 + $0x188] sm:$0xff]
      %v202 = vld [vmem:[%s143 + $0x190] sm:$0xff]
      %v203 = vld [vmem:[%s143 + $0x198] sm:$0xff]
      %v204 = vld [vmem:[%s143 + $0x1a0] sm:$0xff]
      %v205 = vld [vmem:[%s143 + $0x1a8] sm:$0xff]
      %v206 = vld [vmem:[%s143 + $0x1b0] sm:$0xff]
      %v207 = vld [vmem:[%s143 + $0x1b8] sm:$0xff]
      %v208 = vld [vmem:[%s143 + $0x1c0] sm:$0xff]
      %v209 = vld [vmem:[%s143 + $0x1c8] sm:$0xff]
      %v210 = vld [vmem:[%s143 + $0x1d0] sm:$0xff]
      %v211 = vld [vmem:[%s143 + $0x1d8] sm:$0xff]
      %v212 = vld [vmem:[%s143 + $0x1e0] sm:$0xff]
      %v213 = vld [vmem:[%s143 + $0x1e8] sm:$0xff]
      %v214 = vld [vmem:[%s143 + $0x1f0] sm:$0xff]
      %v215 = vld [vmem:[%s143 + $0x1f8] sm:$0xff]
      %v216 = vld [vmem:[%s143 + $0x200] sm:$0xff]
      %v217 = vld [vmem:[%s143 + $0x208] sm:$0xff]
      %v218 = vld [vmem:[%s143 + $0x210] sm:$0xff]
      %v219 = vld [vmem:[%s143 + $0x218] sm:$0xff]
      %v220 = vld [vmem:[%s143 + $0x220] sm:$0xff]
      %v221 = vld [vmem:[%s143 + $0x228] sm:$0xff]
      %v222 = vld [vmem:[%s143 + $0x230] sm:$0xff]
      %v223 = vld [vmem:[%s143 + $0x238] sm:$0xff]
      %v224 = vld [vmem:[%s143 + $0x240] sm:$0xff]
      %v225 = vld [vmem:[%s143 + $0x248] sm:$0xff]
      %v226 = vld [vmem:[%s143 + $0x250] sm:$0xff]
      %v227 = vld [vmem:[%s143 + $0x258] sm:$0xff]
      %v228 = vld [vmem:[%s143 + $0x260] sm:$0xff]
      %v229 = vld [vmem:[%s143 + $0x268] sm:$0xff]
      %v230 = vld [vmem:[%s143 + $0x270] sm:$0xff]
      %v231 = vld [vmem:[%s143 + $0x278] sm:$0xff]
      %v232 = vld [vmem:[%s143 + $0x280] sm:$0xff]
      %v233 = vld [vmem:[%s143 + $0x288] sm:$0xff]
      %v234 = vld [vmem:[%s143 + $0x290] sm:$0xff]
      %v235 = vld [vmem:[%s143 + $0x298] sm:$0xff]
      %v236 = vld [vmem:[%s143 + $0x2a0] sm:$0xff]
      %v237 = vld [vmem:[%s143 + $0x2a8] sm:$0xff]
      %v238 = vld [vmem:[%s143 + $0x2b0] sm:$0xff]
      %v239 = vld [vmem:[%s143 + $0x2b8] sm:$0xff]
      %v240 = vld [vmem:[%s143 + $0x2c0] sm:$0xff]
      %v241 = vld [vmem:[%s143 + $0x2c8] sm:$0xff]
      %v242 = vld [vmem:[%s143 + $0x2d0] sm:$0xff]
      %v243 = vld [vmem:[%s143 + $0x2d8] sm:$0xff]
      %v244 = vld [vmem:[%s143 + $0x2e0] sm:$0xff]
      %v245 = vld [vmem:[%s143 + $0x2e8] sm:$0xff]
      %v246 = vld [vmem:[%s143 + $0x2f0] sm:$0xff]
      %v247 = vld [vmem:[%s143 + $0x2f8] sm:$0xff]
      %v248 = vld [vmem:[%s143 + $0x300] sm:$0xff]
      %v249 = vld [vmem:[%s143 + $0x308] sm:$0xff]
      %v250 = vld [vmem:[%s143 + $0x310] sm:$0xff]
      %v251 = vld [vmem:[%s143 + $0x318] sm:$0xff]
      %v252 = vld [vmem:[%s143 + $0x320] sm:$0xff]
      %v253 = vld [vmem:[%s143 + $0x328] sm:$0xff]
      %v254 = vld [vmem:[%s143 + $0x330] sm:$0xff]
      %v255 = vld [vmem:[%s143 + $0x338] sm:$0xff]
      %v256 = vld [vmem:[%s143 + $0x340] sm:$0xff]
      %v257 = vld [vmem:[%s143 + $0x348] sm:$0xff]
      %v258 = vld [vmem:[%s143 + $0x350] sm:$0xff]
      %v259 = vld [vmem:[%s143 + $0x358] sm:$0xff]
      %v260 = vld [vmem:[%s143 + $0x360] sm:$0xff]
      %v261 = vld [vmem:[%s143 + $0x368] sm:$0xff]
      %v262 = vld [vmem:[%s143 + $0x370] sm:$0xff]
      %v263 = vld [vmem:[%s143 + $0x378] sm:$0xff]
      %v264 = vld [vmem:[%s143 + $0x380] sm:$0xff]
      %v265 = vld [vmem:[%s143 + $0x388] sm:$0xff]
      %v266 = vld [vmem:[%s143 + $0x390] sm:$0xff]
      %v267 = vld [vmem:[%s143 + $0x398] sm:$0xff]
      %v268 = vld [vmem:[%s143 + $0x3a0] sm:$0xff]
      %v269 = vld [vmem:[%s143 + $0x3a8] sm:$0xff]
      %v270 = vld [vmem:[%s143 + $0x3b0] sm:$0xff]
      %v271 = vld [vmem:[%s143 + $0x3b8] sm:$0xff]
      %v272 = vld [vmem:[%s143 + $0x3c0] sm:$0xff]
      %v273 = vld [vmem:[%s143 + $0x3c8] sm:$0xff]
      %v274 = vld [vmem:[%s143 + $0x3d0] sm:$0xff]
      %v275 = vld [vmem:[%s143 + $0x3d8] sm:$0xff]
      %v276 = vld [vmem:[%s143 + $0x3e0] sm:$0xff]
      %v277 = vld [vmem:[%s143 + $0x3e8] sm:$0xff]
      %v278 = vld [vmem:[%s143 + $0x3f0] sm:$0xff]
      %v279 = vld [vmem:[%s143 + $0x3f8] sm:$0xff]
      %v280 = vld [vmem:[%s143 + $0x400] sm:$0xff]
      %v281 = vld [vmem:[%s143 + $0x408] sm:$0xff]
      %v282 = vld [vmem:[%s143 + $0x410] sm:$0xff]
      %v283 = vld [vmem:[%s143 + $0x418] sm:$0xff]
      %v284 = vld [vmem:[%s143 + $0x420] sm:$0xff]
      %v285 = vld [vmem:[%s143 + $0x428] sm:$0xff]
      %v286 = vld [vmem:[%s143 + $0x430] sm:$0xff]
      %v287 = vld [vmem:[%s143 + $0x438] sm:$0xff]
      %v288 = vld [vmem:[%s143 + $0x440] sm:$0xff]
      %v289 = vld [vmem:[%s143 + $0x448] sm:$0xff]
      %v290 = vld [vmem:[%s143 + $0x450] sm:$0xff]
      %v291 = vld [vmem:[%s143 + $0x458] sm:$0xff]
      %v292 = vld [vmem:[%s143 + $0x460] sm:$0xff]
      %v293 = vld [vmem:[%s143 + $0x468] sm:$0xff]
      %v294 = vld [vmem:[%s143 + $0x470] sm:$0xff]
      %v295 = vld [vmem:[%s143 + $0x478] sm:$0xff]
      %v296 = vld [vmem:[%s143 + $0x480] sm:$0xff]
      %v297 = vld [vmem:[%s143 + $0x488] sm:$0xff]
      %v298 = vld [vmem:[%s143 + $0x490] sm:$0xff]
      %v299 = vld [vmem:[%s143 + $0x498] sm:$0xff]
      %v300 = vld [vmem:[%s143 + $0x4a0] sm:$0xff]
      %v301 = vld [vmem:[%s143 + $0x4a8] sm:$0xff]
      %v302 = vld [vmem:[%s143 + $0x4b0] sm:$0xff]
      %v303 = vld [vmem:[%s143 + $0x4b8] sm:$0xff]
      %v304 = vld [vmem:[%s143 + $0x4c0] sm:$0xff]
      %v305 = vld [vmem:[%s143 + $0x4c8] sm:$0xff]
      %v306 = vld [vmem:[%s143 + $0x4d0] sm:$0xff]
      %v307 = vld [vmem:[%s143 + $0x4d8] sm:$0xff]
      %v308 = vld [vmem:[%s143 + $0x4e0] sm:$0xff]
      %v309 = vld [vmem:[%s143 + $0x4e8] sm:$0xff]
      %v310 = vld [vmem:[%s143 + $0x4f0] sm:$0xff]
      %v311 = vld [vmem:[%s143 + $0x4f8] sm:$0xff]
      %v312 = vld [vmem:[%s143 + $0x500] sm:$0xff]
      %v313 = vld [vmem:[%s143 + $0x508] sm:$0xff]
      %v314 = vld [vmem:[%s143 + $0x510] sm:$0xff]
      %v315 = vld [vmem:[%s143 + $0x518] sm:$0xff]
      %v316 = vld [vmem:[%s143 + $0x520] sm:$0xff]
      %v317 = vld [vmem:[%s143 + $0x528] sm:$0xff]
      %v318 = vld [vmem:[%s143 + $0x530] sm:$0xff]
      %v319 = vld [vmem:[%s143 + $0x538] sm:$0xff]
      %vm320 = vcmask 556032
      %v322 = vsel %vm320, %v153, 0
      %v325 = vsel %vm320, %v155, 0
      %v328 = vsel %vm320, %v157, 0
      %v331 = vsel %vm320, %v159, 0
      %v334 = vsel %vm320, %v161, 0
      %v337 = vsel %vm320, %v163, 0
      %v340 = vsel %vm320, %v165, 0
      %v343 = vsel %vm320, %v167, 0
      %v346 = vsel %vm320, %v169, 0
      %v349 = vsel %vm320, %v171, 0
      %v352 = vsel %vm320, %v173, 0
      %v355 = vsel %vm320, %v175, 0
      %v358 = vsel %vm320, %v177, 0
      %v361 = vsel %vm320, %v179, 0
      %v364 = vsel %vm320, %v181, 0
      %v367 = vsel %vm320, %v183, 0
      %v370 = vsel %vm320, %v185, 0
      %v373 = vsel %vm320, %v187, 0
      %v376 = vsel %vm320, %v189, 0
      %v379 = vsel %vm320, %v191, 0
      %v382 = vsel %vm320, %v193, 0
      %v385 = vsel %vm320, %v195, 0
      %v388 = vsel %vm320, %v197, 0
      %v391 = vsel %vm320, %v199, 0
      %v394 = vsel %vm320, %v201, 0
      %v397 = vsel %vm320, %v203, 0
      %v400 = vsel %vm320, %v205, 0
      %v403 = vsel %vm320, %v207, 0
      %v406 = vsel %vm320, %v209, 0
      %v409 = vsel %vm320, %v211, 0
      %v412 = vsel %vm320, %v213, 0
      %v415 = vsel %vm320, %v215, 0
      %v418 = vsel %vm320, %v217, 0
      %v421 = vsel %vm320, %v219, 0
      %v424 = vsel %vm320, %v221, 0
      %v427 = vsel %vm320, %v223, 0
      %v430 = vsel %vm320, %v225, 0
      %v433 = vsel %vm320, %v227, 0
      %v436 = vsel %vm320, %v229, 0
      %v439 = vsel %vm320, %v231, 0
      %v442 = vsel %vm320, %v233, 0
      %v445 = vsel %vm320, %v235, 0
      %v448 = vsel %vm320, %v237, 0
      %v451 = vsel %vm320, %v239, 0
      %v454 = vsel %vm320, %v241, 0
      %v457 = vsel %vm320, %v243, 0
      %v460 = vsel %vm320, %v245, 0
      %v463 = vsel %vm320, %v247, 0
      %v466 = vsel %vm320, %v249, 0
      %v469 = vsel %vm320, %v251, 0
      %v472 = vsel %vm320, %v253, 0
      %v475 = vsel %vm320, %v255, 0
      %v478 = vsel %vm320, %v257, 0
      %v481 = vsel %vm320, %v259, 0
      %v484 = vsel %vm320, %v261, 0
      %v487 = vsel %vm320, %v263, 0
      %v490 = vsel %vm320, %v265, 0
      %v493 = vsel %vm320, %v267, 0
      %v496 = vsel %vm320, %v269, 0
      %v499 = vsel %vm320, %v271, 0
      %v502 = vsel %vm320, %v273, 0
      %v505 = vsel %vm320, %v275, 0
      %v508 = vsel %vm320, %v277, 0
      %v511 = vsel %vm320, %v279, 0
      %v514 = vsel %vm320, %v281, 0
      %v517 = vsel %vm320, %v283, 0
      %v520 = vsel %vm320, %v285, 0
      %v523 = vsel %vm320, %v287, 0
      %v526 = vsel %vm320, %v289, 0
      %v529 = vsel %vm320, %v291, 0
      %v532 = vsel %vm320, %v293, 0
      %v535 = vsel %vm320, %v295, 0
      %v538 = vsel %vm320, %v297, 0
      %v541 = vsel %vm320, %v299, 0
      %v544 = vsel %vm320, %v301, 0
      %v547 = vsel %vm320, %v303, 0
      %v550 = vsel %vm320, %v305, 0
      %v553 = vsel %vm320, %v307, 0
      %v556 = vsel %vm320, %v309, 0
      %v559 = vsel %vm320, %v311, 0
      %v562 = vsel %vm320, %v313, 0
      %v565 = vsel %vm320, %v315, 0
      %v568 = vsel %vm320, %v317, 0
      %v571 = vsel %vm320, %v319, 0
      %vm573 = vcmask 1043456
      %v575 = vsel %vm573, 1.0, 0
      %577 = vmatprep.subr.mxu0 0.0
      %578 = vmatpush1.msra.mxu0 1.0
      %579 = vmatprep.subr.mxu0 0.0
      %580 = vmatpush1.msra.mxu0 1.0
      %581 = vmatprep.subr.mxu0 0.0
      %582 = vmatpush1.msra.mxu0 1.0
      %583 = vmatprep.subr.mxu0 0.0
      %584 = vmatpush1.msra.mxu0 1.0
      %585 = vmatprep.subr.mxu0 0.0
      %586 = vmatpush1.msra.mxu0 1.0
      %587 = vmatprep.subr.mxu0 0.0
      %588 = vmatpush1.msra.mxu0 1.0
      %589 = vmatprep.subr.mxu0 0.0
      %590 = vmatpush1.msra.mxu0 1.0
      %591 = vmatprep.subr.mxu0 0.0
      %592 = vmatpush1.msra.mxu0 1.0
      %593 = vmatprep.subr.mxu0 0.0
      %594 = vmatpush1.msra.mxu0 1.0
      %595 = vmatprep.subr.mxu0 0.0
      %596 = vmatpush1.msra.mxu0 1.0
      %597 = vmatprep.subr.mxu0 0.0
      %598 = vmatpush1.msra.mxu0 1.0
      %599 = vmatprep.subr.mxu0 0.0
      %600 = vmatpush1.msra.mxu0 1.0
      %601 = vmatprep.subr.mxu0 0.0
      %602 = vmatpush1.msra.mxu0 1.0
      %603 = vmatprep.subr.mxu0 0.0
      %604 = vmatpush1.msra.mxu0 1.0
      %605 = vmatprep.subr.mxu0 0.0
      %606 = vmatpush1.msra.mxu0 1.0
      %607 = vmatprep.subr.mxu0 0.0
      %608 = vmatpush1.msra.mxu0 1.0
      %609 = vmatprep.subr.mxu0 0.0
      %610 = vmatpush1.msra.mxu0 1.0
      %611 = vmatprep.subr.mxu0 0.0
      %612 = vmatpush1.msra.mxu0 1.0
      %613 = vmatprep.subr.mxu0 0.0
      %614 = vmatpush1.msra.mxu0 1.0
      %615 = vmatprep.subr.mxu0 0.0
      %616 = vmatpush1.msra.mxu0 1.0
      %617 = vmatprep.subr.mxu0 0.0
      %618 = vmatpush1.msra.mxu0 1.0
      %619 = vmatprep.subr.mxu0 0.0
      %620 = vmatpush1.msra.mxu0 1.0
      %621 = vmatprep.subr.mxu0 0.0
      %622 = vmatpush1.msra.mxu0 1.0
      %623 = vmatprep.subr.mxu0 0.0
      %624 = vmatpush1.msra.mxu0 1.0
      %625 = vmatprep.subr.mxu0 0.0
      %626 = vmatpush1.msra.mxu0 %v575
      %627 = vmatprep.subr.mxu0 0.0
      %628 = vmatpush1.msra.mxu0 0.0
      %629 = vmatprep.subr.mxu0 0.0
      %630 = vmatpush1.msra.mxu0 0.0
      %631 = vmatprep.subr.mxu0 0.0
      %632 = vmatpush1.msra.mxu0 0.0
      %633 = vmatprep.subr.mxu0 0.0
      %634 = vmatpush1.msra.mxu0 0.0
      %635 = vmatprep.subr.mxu0 0.0
      %636 = vmatpush1.msra.mxu0 0.0
      %637 = vmatprep.subr.mxu0 0.0
      %638 = vmatpush1.msra.mxu0 0.0
      %639 = vmatprep.subr.mxu0 0.0
      %640 = vmatpush1.msra.mxu0 0.0
      %641 = vmatprep.mubr.f32.mxu0 %v322
      %642 = vmatmul.mubr.f32.gmra.mrb[0].mxu0 %v152
      %v643 = vpop.f32.mrb[0].mxu0
      %v644 = vadd.f32 0.0, %v643
      %v645 = vpop.f32.mrb[0].mxu0
      %646 = vmatprep.mubr.f32.mxu0 %v325
      %647 = vmatmul.mubr.f32.gmra.mrb[0].mxu0 %v154
      %v648 = vpop.f32.mrb[0].mxu0
      %v649 = vadd.f32 0.0, %v648
      %v650 = vpop.f32.mrb[0].mxu0
      %651 = vmatprep.mubr.f32.mxu0 %v328
      %652 = vmatmul.mubr.f32.gmra.mrb[0].mxu0 %v156
      %v653 = vpop.f32.mrb[0].mxu0
      %v654 = vadd.f32 0.0, %v653
      %v655 = vpop.f32.mrb[0].mxu0
      %656 = vmatprep.mubr.f32.mxu0 %v331
      %657 = vmatmul.mubr.f32.gmra.mrb[0].mxu0 %v158
      %v658 = vpop.f32.mrb[0].mxu0
      %v659 = vadd.f32 0.0, %v658
      %v660 = vpop.f32.mrb[0].mxu0
      %661 = vmatprep.mubr.f32.mxu0 %v334
      %662 = vmatmul.mubr.f32.gmra.mrb[0].mxu0 %v160
      %v663 = vpop.f32.mrb[0].mxu0
      %v664 = vadd.f32 0.0, %v663
      %v665 = vpop.f32.mrb[0].mxu0
      %666 = vmatprep.mubr.f32.mxu0 %v337
      %667 = vmatmul.mubr.f32.gmra.mrb[0].mxu0 %v162
      %v668 = vpop.f32.mrb[0].mxu0
      %v669 = vadd.f32 0.0, %v668
      %v670 = vpop.f32.mrb[0].mxu0
      %671 = vmatprep.mubr.f32.mxu0 %v340
      %672 = vmatmul.mubr.f32.gmra.mrb[0].mxu0 %v164
      %v673 = vpop.f32.mrb[0].mxu0
      %v674 = vadd.f32 0.0, %v673
      %v675 = vpop.f32.mrb[0].mxu0
      %676 = vmatprep.mubr.f32.mxu0 %v343
      %677 = vmatmul.mubr.f32.gmra.mrb[0].mxu0 %v166
      %v678 = vpop.f32.mrb[0].mxu0
      %v679 = vadd.f32 0.0, %v678
      %v680 = vpop.f32.mrb[0].mxu0
      %681 = vmatprep.mubr.f32.mxu0 %v346
      %682 = vmatmul.mubr.f32.gmra.mrb[0].mxu0 %v168
      %v683 = vpop.f32.mrb[0].mxu0
      %v684 = vadd.f32 0.0, %v683
      %v685 = vpop.f32.mrb[0].mxu0
      %686 = vmatprep.mubr.f32.mxu0 %v349
      %687 = vmatmul.mubr.f32.gmra.mrb[0].mxu0 %v170
      %v688 = vpop.f32.mrb[0].mxu0
      %v689 = vadd.f32 0.0, %v688
      %v690 = vpop.f32.mrb[0].mxu0
      %691 = vmatprep.mubr.f32.mxu0 %v352
      %692 = vmatmul.mubr.f32.gmra.mrb[0].mxu0 %v172
      %v693 = vpop.f32.mrb[0].mxu0
      %v694 = vadd.f32 0.0, %v693
      %v695 = vpop.f32.mrb[0].mxu0
      %696 = vmatprep.mubr.f32.mxu0 %v355
      %697 = vmatmul.mubr.f32.gmra.mrb[0].mxu0 %v174
      %v698 = vpop.f32.mrb[0].mxu0
      %v699 = vadd.f32 0.0, %v698
      %v700 = vpop.f32.mrb[0].mxu0
      %701 = vmatprep.mubr.f32.mxu0 %v358
      %702 = vmatmul.mubr.f32.gmra.mrb[0].mxu0 %v176
      %v703 = vpop.f32.mrb[0].mxu0
      %v704 = vadd.f32 0.0, %v703
      %v705 = vpop.f32.mrb[0].mxu0
      %706 = vmatprep.mubr.f32.mxu0 %v361
      %707 = vmatmul.mubr.f32.gmra.mrb[0].mxu0 %v178
      %v708 = vpop.f32.mrb[0].mxu0
      %v709 = vadd.f32 0.0, %v708
      %v710 = vpop.f32.mrb[0].mxu0
      %711 = vmatprep.mubr.f32.mxu0 %v364
      %712 = vmatmul.mubr.f32.gmra.mrb[0].mxu0 %v180
      %v713 = vpop.f32.mrb[0].mxu0
      %v714 = vadd.f32 0.0, %v713
      %v715 = vpop.f32.mrb[0].mxu0
      %716 = vmatprep.mubr.f32.mxu0 %v367
      %717 = vmatmul.mubr.f32.gmra.mrb[0].mxu0 %v182
      %v718 = vpop.f32.mrb[0].mxu0
      %v719 = vadd.f32 0.0, %v718
      %v720 = vpop.f32.mrb[0].mxu0
      %721 = vmatprep.mubr.f32.mxu0 %v370
      %722 = vmatmul.mubr.f32.gmra.mrb[0].mxu0 %v184
      %v723 = vpop.f32.mrb[0].mxu0
      %v724 = vadd.f32 0.0, %v723
      %v725 = vpop.f32.mrb[0].mxu0
      %726 = vmatprep.mubr.f32.mxu0 %v373
      %727 = vmatmul.mubr.f32.gmra.mrb[0].mxu0 %v186
      %v728 = vpop.f32.mrb[0].mxu0
      %v729 = vadd.f32 0.0, %v728
      %v730 = vpop.f32.mrb[0].mxu0
      %731 = vmatprep.mubr.f32.mxu0 %v376
      %732 = vmatmul.mubr.f32.gmra.mrb[0].mxu0 %v188
      %v733 = vpop.f32.mrb[0].mxu0
      %v734 = vadd.f32 0.0, %v733
      %v735 = vpop.f32.mrb[0].mxu0
      %736 = vmatprep.mubr.f32.mxu0 %v379
      %737 = vmatmul.mubr.f32.gmra.mrb[0].mxu0 %v190
      %v738 = vpop.f32.mrb[0].mxu0
      %v739 = vadd.f32 0.0, %v738
      %v740 = vpop.f32.mrb[0].mxu0
      %741 = vmatprep.mubr.f32.mxu0 %v382
      %742 = vmatmul.mubr.f32.gmra.mrb[0].mxu0 %v192
      %v743 = vpop.f32.mrb[0].mxu0
      %v744 = vadd.f32 0.0, %v743
      %v745 = vpop.f32.mrb[0].mxu0
      %746 = vmatprep.mubr.f32.mxu0 %v385
      %747 = vmatmul.mubr.f32.gmra.mrb[0].mxu0 %v194
      %v748 = vpop.f32.mrb[0].mxu0
      %v749 = vadd.f32 0.0, %v748
      %v750 = vpop.f32.mrb[0].mxu0
      %751 = vmatprep.mubr.f32.mxu0 %v388
      %752 = vmatmul.mubr.f32.gmra.mrb[0].mxu0 %v196
      %v753 = vpop.f32.mrb[0].mxu0
      %v754 = vadd.f32 0.0, %v753
      %v755 = vpop.f32.mrb[0].mxu0
      %756 = vmatprep.mubr.f32.mxu0 %v391
      %757 = vmatmul.mubr.f32.gmra.mrb[0].mxu0 %v198
      %v758 = vpop.f32.mrb[0].mxu0
      %v759 = vadd.f32 0.0, %v758
      %v760 = vpop.f32.mrb[0].mxu0
      %761 = vmatprep.mubr.f32.mxu0 %v394
      %762 = vmatmul.mubr.f32.gmra.mrb[0].mxu0 %v200
      %v763 = vpop.f32.mrb[0].mxu0
      %v764 = vadd.f32 0.0, %v763
      %v765 = vpop.f32.mrb[0].mxu0
      %766 = vmatprep.mubr.f32.mxu0 %v397
      %767 = vmatmul.mubr.f32.gmra.mrb[0].mxu0 %v202
      %v768 = vpop.f32.mrb[0].mxu0
      %v769 = vadd.f32 0.0, %v768
      %v770 = vpop.f32.mrb[0].mxu0
      %771 = vmatprep.mubr.f32.mxu0 %v400
      %772 = vmatmul.mubr.f32.gmra.mrb[0].mxu0 %v204
      %v773 = vpop.f32.mrb[0].mxu0
      %v774 = vadd.f32 0.0, %v773
      %v775 = vpop.f32.mrb[0].mxu0
      %776 = vmatprep.mubr.f32.mxu0 %v403
      %777 = vmatmul.mubr.f32.gmra.mrb[0].mxu0 %v206
      %v778 = vpop.f32.mrb[0].mxu0
      %v779 = vadd.f32 0.0, %v778
      %v780 = vpop.f32.mrb[0].mxu0
      %781 = vmatprep.mubr.f32.mxu0 %v406
      %782 = vmatmul.mubr.f32.gmra.mrb[0].mxu0 %v208
      %v783 = vpop.f32.mrb[0].mxu0
      %v784 = vadd.f32 0.0, %v783
      %v785 = vpop.f32.mrb[0].mxu0
      %786 = vmatprep.mubr.f32.mxu0 %v409
      %787 = vmatmul.mubr.f32.gmra.mrb[0].mxu0 %v210
      %v788 = vpop.f32.mrb[0].mxu0
      %v789 = vadd.f32 0.0, %v788
      %v790 = vpop.f32.mrb[0].mxu0
      %791 = vmatprep.mubr.f32.mxu0 %v412
      %792 = vmatmul.mubr.f32.gmra.mrb[0].mxu0 %v212
      %v793 = vpop.f32.mrb[0].mxu0
      %v794 = vadd.f32 0.0, %v793
      %v795 = vpop.f32.mrb[0].mxu0
      %796 = vmatprep.mubr.f32.mxu0 %v415
      %797 = vmatmul.mubr.f32.gmra.mrb[0].mxu0 %v214
      %v798 = vpop.f32.mrb[0].mxu0
      %v799 = vadd.f32 0.0, %v798
      %v800 = vpop.f32.mrb[0].mxu0
      %801 = vmatprep.mubr.f32.mxu0 %v418
      %802 = vmatmul.mubr.f32.gmra.mrb[0].mxu0 %v216
      %v803 = vpop.f32.mrb[0].mxu0
      %v804 = vadd.f32 0.0, %v803
      %v805 = vpop.f32.mrb[0].mxu0
      %806 = vmatprep.mubr.f32.mxu0 %v421
      %807 = vmatmul.mubr.f32.gmra.mrb[0].mxu0 %v218
      %v808 = vpop.f32.mrb[0].mxu0
      %v809 = vadd.f32 0.0, %v808
      %v810 = vpop.f32.mrb[0].mxu0
      %811 = vmatprep.mubr.f32.mxu0 %v424
      %812 = vmatmul.mubr.f32.gmra.mrb[0].mxu0 %v220
      %v813 = vpop.f32.mrb[0].mxu0
      %v814 = vadd.f32 0.0, %v813
      %v815 = vpop.f32.mrb[0].mxu0
      %816 = vmatprep.mubr.f32.mxu0 %v427
      %817 = vmatmul.mubr.f32.gmra.mrb[0].mxu0 %v222
      %v818 = vpop.f32.mrb[0].mxu0
      %v819 = vadd.f32 0.0, %v818
      %v820 = vpop.f32.mrb[0].mxu0
      %821 = vmatprep.mubr.f32.mxu0 %v430
      %822 = vmatmul.mubr.f32.gmra.mrb[0].mxu0 %v224
      %v823 = vpop.f32.mrb[0].mxu0
      %v824 = vadd.f32 0.0, %v823
      %v825 = vpop.f32.mrb[0].mxu0
      %826 = vmatprep.mubr.f32.mxu0 %v433
      %827 = vmatmul.mubr.f32.gmra.mrb[0].mxu0 %v226
      %v828 = vpop.f32.mrb[0].mxu0
      %v829 = vadd.f32 0.0, %v828
      %v830 = vpop.f32.mrb[0].mxu0
      %831 = vmatprep.mubr.f32.mxu0 %v436
      %832 = vmatmul.mubr.f32.gmra.mrb[0].mxu0 %v228
      %v833 = vpop.f32.mrb[0].mxu0
      %v834 = vadd.f32 0.0, %v833
      %v835 = vpop.f32.mrb[0].mxu0
      %836 = vmatprep.mubr.f32.mxu0 %v439
      %837 = vmatmul.mubr.f32.gmra.mrb[0].mxu0 %v230
      %v838 = vpop.f32.mrb[0].mxu0
      %v839 = vadd.f32 0.0, %v838
      %v840 = vpop.f32.mrb[0].mxu0
      %841 = vmatprep.mubr.f32.mxu0 %v442
      %842 = vmatmul.mubr.f32.gmra.mrb[0].mxu0 %v232
      %v843 = vpop.f32.mrb[0].mxu0
      %v844 = vadd.f32 0.0, %v843
      %v845 = vpop.f32.mrb[0].mxu0
      %846 = vmatprep.mubr.f32.mxu0 %v445
      %847 = vmatmul.mubr.f32.gmra.mrb[0].mxu0 %v234
      %v848 = vpop.f32.mrb[0].mxu0
      %v849 = vadd.f32 0.0, %v848
      %v850 = vpop.f32.mrb[0].mxu0
      %851 = vmatprep.mubr.f32.mxu0 %v448
      %852 = vmatmul.mubr.f32.gmra.mrb[0].mxu0 %v236
      %v853 = vpop.f32.mrb[0].mxu0
      %v854 = vadd.f32 0.0, %v853
      %v855 = vpop.f32.mrb[0].mxu0
      %856 = vmatprep.mubr.f32.mxu0 %v451
      %857 = vmatmul.mubr.f32.gmra.mrb[0].mxu0 %v238
      %v858 = vpop.f32.mrb[0].mxu0
      %v859 = vadd.f32 0.0, %v858
      %v860 = vpop.f32.mrb[0].mxu0
      %861 = vmatprep.mubr.f32.mxu0 %v454
      %862 = vmatmul.mubr.f32.gmra.mrb[0].mxu0 %v240
      %v863 = vpop.f32.mrb[0].mxu0
      %v864 = vadd.f32 0.0, %v863
      %v865 = vpop.f32.mrb[0].mxu0
      %866 = vmatprep.mubr.f32.mxu0 %v457
      %867 = vmatmul.mubr.f32.gmra.mrb[0].mxu0 %v242
      %v868 = vpop.f32.mrb[0].mxu0
      %v869 = vadd.f32 0.0, %v868
      %v870 = vpop.f32.mrb[0].mxu0
      %871 = vmatprep.mubr.f32.mxu0 %v460
      %872 = vmatmul.mubr.f32.gmra.mrb[0].mxu0 %v244
      %v873 = vpop.f32.mrb[0].mxu0
      %v874 = vadd.f32 0.0, %v873
      %v875 = vpop.f32.mrb[0].mxu0
      %876 = vmatprep.mubr.f32.mxu0 %v463
      %877 = vmatmul.mubr.f32.gmra.mrb[0].mxu0 %v246
      %v878 = vpop.f32.mrb[0].mxu0
      %v879 = vadd.f32 0.0, %v878
      %v880 = vpop.f32.mrb[0].mxu0
      %881 = vmatprep.mubr.f32.mxu0 %v466
      %882 = vmatmul.mubr.f32.gmra.mrb[0].mxu0 %v248
      %v883 = vpop.f32.mrb[0].mxu0
      %v884 = vadd.f32 0.0, %v883
      %v885 = vpop.f32.mrb[0].mxu0
      %886 = vmatprep.mubr.f32.mxu0 %v469
      %887 = vmatmul.mubr.f32.gmra.mrb[0].mxu0 %v250
      %v888 = vpop.f32.mrb[0].mxu0
      %v889 = vadd.f32 0.0, %v888
      %v890 = vpop.f32.mrb[0].mxu0
      %891 = vmatprep.mubr.f32.mxu0 %v472
      %892 = vmatmul.mubr.f32.gmra.mrb[0].mxu0 %v252
      %v893 = vpop.f32.mrb[0].mxu0
      %v894 = vadd.f32 0.0, %v893
      %v895 = vpop.f32.mrb[0].mxu0
      %896 = vmatprep.mubr.f32.mxu0 %v475
      %897 = vmatmul.mubr.f32.gmra.mrb[0].mxu0 %v254
      %v898 = vpop.f32.mrb[0].mxu0
      %v899 = vadd.f32 0.0, %v898
      %v900 = vpop.f32.mrb[0].mxu0
      %901 = vmatprep.mubr.f32.mxu0 %v478
      %902 = vmatmul.mubr.f32.gmra.mrb[0].mxu0 %v256
      %v903 = vpop.f32.mrb[0].mxu0
      %v904 = vadd.f32 0.0, %v903
      %v905 = vpop.f32.mrb[0].mxu0
      %906 = vmatprep.mubr.f32.mxu0 %v481
      %907 = vmatmul.mubr.f32.gmra.mrb[0].mxu0 %v258
      %v908 = vpop.f32.mrb[0].mxu0
      %v909 = vadd.f32 0.0, %v908
      %v910 = vpop.f32.mrb[0].mxu0
      %911 = vmatprep.mubr.f32.mxu0 %v484
      %912 = vmatmul.mubr.f32.gmra.mrb[0].mxu0 %v260
      %v913 = vpop.f32.mrb[0].mxu0
      %v914 = vadd.f32 0.0, %v913
      %v915 = vpop.f32.mrb[0].mxu0
      %916 = vmatprep.mubr.f32.mxu0 %v487
      %917 = vmatmul.mubr.f32.gmra.mrb[0].mxu0 %v262
      %v918 = vpop.f32.mrb[0].mxu0
      %v919 = vadd.f32 0.0, %v918
      %v920 = vpop.f32.mrb[0].mxu0
      %921 = vmatprep.mubr.f32.mxu0 %v490
      %922 = vmatmul.mubr.f32.gmra.mrb[0].mxu0 %v264
      %v923 = vpop.f32.mrb[0].mxu0
      %v924 = vadd.f32 0.0, %v923
      %v925 = vpop.f32.mrb[0].mxu0
      %926 = vmatprep.mubr.f32.mxu0 %v493
      %927 = vmatmul.mubr.f32.gmra.mrb[0].mxu0 %v266
      %v928 = vpop.f32.mrb[0].mxu0
      %v929 = vadd.f32 0.0, %v928
      %v930 = vpop.f32.mrb[0].mxu0
      %931 = vmatprep.mubr.f32.mxu0 %v496
      %932 = vmatmul.mubr.f32.gmra.mrb[0].mxu0 %v268
      %v933 = vpop.f32.mrb[0].mxu0
      %v934 = vadd.f32 0.0, %v933
      %v935 = vpop.f32.mrb[0].mxu0
      %936 = vmatprep.mubr.f32.mxu0 %v499
      %937 = vmatmul.mubr.f32.gmra.mrb[0].mxu0 %v270
      %v938 = vpop.f32.mrb[0].mxu0
      %v939 = vadd.f32 0.0, %v938
      %v940 = vpop.f32.mrb[0].mxu0
      %941 = vmatprep.mubr.f32.mxu0 %v502
      %942 = vmatmul.mubr.f32.gmra.mrb[0].mxu0 %v272
      %v943 = vpop.f32.mrb[0].mxu0
      %v944 = vadd.f32 0.0, %v943
      %v945 = vpop.f32.mrb[0].mxu0
      %946 = vmatprep.mubr.f32.mxu0 %v505
      %947 = vmatmul.mubr.f32.gmra.mrb[0].mxu0 %v274
      %v948 = vpop.f32.mrb[0].mxu0
      %v949 = vadd.f32 0.0, %v948
      %v950 = vpop.f32.mrb[0].mxu0
      %951 = vmatprep.mubr.f32.mxu0 %v508
      %952 = vmatmul.mubr.f32.gmra.mrb[0].mxu0 %v276
      %v953 = vpop.f32.mrb[0].mxu0
      %v954 = vadd.f32 0.0, %v953
      %v955 = vpop.f32.mrb[0].mxu0
      %956 = vmatprep.mubr.f32.mxu0 %v511
      %957 = vmatmul.mubr.f32.gmra.mrb[0].mxu0 %v278
      %v958 = vpop.f32.mrb[0].mxu0
      %v959 = vadd.f32 0.0, %v958
      %v960 = vpop.f32.mrb[0].mxu0
      %961 = vmatprep.mubr.f32.mxu0 %v514
      %962 = vmatmul.mubr.f32.gmra.mrb[0].mxu0 %v280
      %v963 = vpop.f32.mrb[0].mxu0
      %v964 = vadd.f32 0.0, %v963
      %v965 = vpop.f32.mrb[0].mxu0
      %966 = vmatprep.mubr.f32.mxu0 %v517
      %967 = vmatmul.mubr.f32.gmra.mrb[0].mxu0 %v282
      %v968 = vpop.f32.mrb[0].mxu0
      %v969 = vadd.f32 0.0, %v968
      %v970 = vpop.f32.mrb[0].mxu0
      %971 = vmatprep.mubr.f32.mxu0 %v520
      %972 = vmatmul.mubr.f32.gmra.mrb[0].mxu0 %v284
      %v973 = vpop.f32.mrb[0].mxu0
      %v974 = vadd.f32 0.0, %v973
      %v975 = vpop.f32.mrb[0].mxu0
      %976 = vmatprep.mubr.f32.mxu0 %v523
      %977 = vmatmul.mubr.f32.gmra.mrb[0].mxu0 %v286
      %v978 = vpop.f32.mrb[0].mxu0
      %v979 = vadd.f32 0.0, %v978
      %v980 = vpop.f32.mrb[0].mxu0
      %981 = vmatprep.mubr.f32.mxu0 %v526
      %982 = vmatmul.mubr.f32.gmra.mrb[0].mxu0 %v288
      %v983 = vpop.f32.mrb[0].mxu0
      %v984 = vadd.f32 0.0, %v983
      %v985 = vpop.f32.mrb[0].mxu0
      %986 = vmatprep.mubr.f32.mxu0 %v529
      %987 = vmatmul.mubr.f32.gmra.mrb[0].mxu0 %v290
      %v988 = vpop.f32.mrb[0].mxu0
      %v989 = vadd.f32 0.0, %v988
      %v990 = vpop.f32.mrb[0].mxu0
      %991 = vmatprep.mubr.f32.mxu0 %v532
      %992 = vmatmul.mubr.f32.gmra.mrb[0].mxu0 %v292
      %v993 = vpop.f32.mrb[0].mxu0
      %v994 = vadd.f32 0.0, %v993
      %v995 = vpop.f32.mrb[0].mxu0
      %996 = vmatprep.mubr.f32.mxu0 %v535
      %997 = vmatmul.mubr.f32.gmra.mrb[0].mxu0 %v294
      %v998 = vpop.f32.mrb[0].mxu0
      %v999 = vadd.f32 0.0, %v998
      %v1000 = vpop.f32.mrb[0].mxu0
      %1001 = vmatprep.mubr.f32.mxu0 %v538
      %1002 = vmatmul.mubr.f32.gmra.mrb[0].mxu0 %v296
      %v1003 = vpop.f32.mrb[0].mxu0
      %v1004 = vadd.f32 0.0, %v1003
      %v1005 = vpop.f32.mrb[0].mxu0
      %1006 = vmatprep.mubr.f32.mxu0 %v541
      %1007 = vmatmul.mubr.f32.gmra.mrb[0].mxu0 %v298
      %v1008 = vpop.f32.mrb[0].mxu0
      %v1009 = vadd.f32 0.0, %v1008
      %v1010 = vpop.f32.mrb[0].mxu0
      %1011 = vmatprep.mubr.f32.mxu0 %v544
      %1012 = vmatmul.mubr.f32.gmra.mrb[0].mxu0 %v300
      %v1013 = vpop.f32.mrb[0].mxu0
      %v1014 = vadd.f32 0.0, %v1013
      %v1015 = vpop.f32.mrb[0].mxu0
      %1016 = vmatprep.mubr.f32.mxu0 %v547
      %1017 = vmatmul.mubr.f32.gmra.mrb[0].mxu0 %v302
      %v1018 = vpop.f32.mrb[0].mxu0
      %v1019 = vadd.f32 0.0, %v1018
      %v1020 = vpop.f32.mrb[0].mxu0
      %1021 = vmatprep.mubr.f32.mxu0 %v550
      %1022 = vmatmul.mubr.f32.gmra.mrb[0].mxu0 %v304
      %v1023 = vpop.f32.mrb[0].mxu0
      %v1024 = vadd.f32 0.0, %v1023
      %v1025 = vpop.f32.mrb[0].mxu0
      %1026 = vmatprep.mubr.f32.mxu0 %v553
      %1027 = vmatmul.mubr.f32.gmra.mrb[0].mxu0 %v306
      %v1028 = vpop.f32.mrb[0].mxu0
      %v1029 = vadd.f32 0.0, %v1028
      %v1030 = vpop.f32.mrb[0].mxu0
      %1031 = vmatprep.mubr.f32.mxu0 %v556
      %1032 = vmatmul.mubr.f32.gmra.mrb[0].mxu0 %v308
      %v1033 = vpop.f32.mrb[0].mxu0
      %v1034 = vadd.f32 0.0, %v1033
      %v1035 = vpop.f32.mrb[0].mxu0
      %1036 = vmatprep.mubr.f32.mxu0 %v559
      %1037 = vmatmul.mubr.f32.gmra.mrb[0].mxu0 %v310
      %v1038 = vpop.f32.mrb[0].mxu0
      %v1039 = vadd.f32 0.0, %v1038
      %v1040 = vpop.f32.mrb[0].mxu0
      %1041 = vmatprep.mubr.f32.mxu0 %v562
      %1042 = vmatmul.mubr.f32.gmra.mrb[0].mxu0 %v312
      %v1043 = vpop.f32.mrb[0].mxu0
      %v1044 = vadd.f32 0.0, %v1043
      %v1045 = vpop.f32.mrb[0].mxu0
      %1046 = vmatprep.mubr.f32.mxu0 %v565
      %1047 = vmatmul.mubr.f32.gmra.mrb[0].mxu0 %v314
      %v1048 = vpop.f32.mrb[0].mxu0
      %v1049 = vadd.f32 0.0, %v1048
      %v1050 = vpop.f32.mrb[0].mxu0
      %1051 = vmatprep.mubr.f32.mxu0 %v568
      %1052 = vmatmul.mubr.f32.gmra.mrb[0].mxu0 %v316
      %v1053 = vpop.f32.mrb[0].mxu0
      %v1054 = vadd.f32 0.0, %v1053
      %v1055 = vpop.f32.mrb[0].mxu0
      %1056 = vmatprep.mubr.f32.mxu0 %v571
      %1057 = vmatmul.mubr.f32.gmra.mrb[0].mxu0 %v318
      %v1058 = vpop.f32.mrb[0].mxu0
      %v1059 = vadd.f32 0.0, %v1058
      %v1060 = vpop.f32.mrb[0].mxu0
      %1061 = vdwg.mxu0
      %v1062 = vmul.f32 %v644, 0.0051020407
      %v1063 = vmul.f32 %v649, 0.0051020407
      %v1064 = vmul.f32 %v654, 0.0051020407
      %v1065 = vmul.f32 %v659, 0.0051020407
      %v1066 = vmul.f32 %v664, 0.0051020407
      %v1067 = vmul.f32 %v669, 0.0051020407
      %v1068 = vmul.f32 %v674, 0.0051020407
      %v1069 = vmul.f32 %v679, 0.0051020407
      %v1070 = vmul.f32 %v684, 0.0051020407
      %v1071 = vmul.f32 %v689, 0.0051020407
      %v1072 = vmul.f32 %v694, 0.0051020407
      %v1073 = vmul.f32 %v699, 0.0051020407
      %v1074 = vmul.f32 %v704, 0.0051020407
      %v1075 = vmul.f32 %v709, 0.0051020407
      %v1076 = vmul.f32 %v714, 0.0051020407
      %v1077 = vmul.f32 %v719, 0.0051020407
      %v1078 = vmul.f32 %v724, 0.0051020407
      %v1079 = vmul.f32 %v729, 0.0051020407
      %v1080 = vmul.f32 %v734, 0.0051020407
      %v1081 = vmul.f32 %v739, 0.0051020407
      %v1082 = vmul.f32 %v744, 0.0051020407
      %v1083 = vmul.f32 %v749, 0.0051020407
      %v1084 = vmul.f32 %v754, 0.0051020407
      %v1085 = vmul.f32 %v759, 0.0051020407
      %v1086 = vmul.f32 %v764, 0.0051020407
      %v1087 = vmul.f32 %v769, 0.0051020407
      %v1088 = vmul.f32 %v774, 0.0051020407
      %v1089 = vmul.f32 %v779, 0.0051020407
      %v1090 = vmul.f32 %v784, 0.0051020407
      %v1091 = vmul.f32 %v789, 0.0051020407
      %v1092 = vmul.f32 %v794, 0.0051020407
      %v1093 = vmul.f32 %v799, 0.0051020407
      %v1094 = vmul.f32 %v804, 0.0051020407
      %v1095 = vmul.f32 %v809, 0.0051020407
      %v1096 = vmul.f32 %v814, 0.0051020407
      %v1097 = vmul.f32 %v819, 0.0051020407
      %v1098 = vmul.f32 %v824, 0.0051020407
      %v1099 = vmul.f32 %v829, 0.0051020407
      %v1100 = vmul.f32 %v834, 0.0051020407
      %v1101 = vmul.f32 %v839, 0.0051020407
      %v1102 = vmul.f32 %v844, 0.0051020407
      %v1103 = vmul.f32 %v849, 0.0051020407
      %v1104 = vmul.f32 %v854, 0.0051020407
      %v1105 = vmul.f32 %v859, 0.0051020407
      %v1106 = vmul.f32 %v864, 0.0051020407
      %v1107 = vmul.f32 %v869, 0.0051020407
      %v1108 = vmul.f32 %v874, 0.0051020407
      %v1109 = vmul.f32 %v879, 0.0051020407
      %v1110 = vmul.f32 %v884, 0.0051020407
      %v1111 = vmul.f32 %v889, 0.0051020407
      %v1112 = vmul.f32 %v894, 0.0051020407
      %v1113 = vmul.f32 %v899, 0.0051020407
      %v1114 = vmul.f32 %v904, 0.0051020407
      %v1115 = vmul.f32 %v909, 0.0051020407
      %v1116 = vmul.f32 %v914, 0.0051020407
      %v1117 = vmul.f32 %v919, 0.0051020407
      %v1118 = vmul.f32 %v924, 0.0051020407
      %v1119 = vmul.f32 %v929, 0.0051020407
      %v1120 = vmul.f32 %v934, 0.0051020407
      %v1121 = vmul.f32 %v939, 0.0051020407
      %v1122 = vmul.f32 %v944, 0.0051020407
      %v1123 = vmul.f32 %v949, 0.0051020407
      %v1124 = vmul.f32 %v954, 0.0051020407
      %v1125 = vmul.f32 %v959, 0.0051020407
      %v1126 = vmul.f32 %v964, 0.0051020407
      %v1127 = vmul.f32 %v969, 0.0051020407
      %v1128 = vmul.f32 %v974, 0.0051020407
      %v1129 = vmul.f32 %v979, 0.0051020407
      %v1130 = vmul.f32 %v984, 0.0051020407
      %v1131 = vmul.f32 %v989, 0.0051020407
      %v1132 = vmul.f32 %v994, 0.0051020407
      %v1133 = vmul.f32 %v999, 0.0051020407
      %v1134 = vmul.f32 %v1004, 0.0051020407
      %v1135 = vmul.f32 %v1009, 0.0051020407
      %v1136 = vmul.f32 %v1014, 0.0051020407
      %v1137 = vmul.f32 %v1019, 0.0051020407
      %v1138 = vmul.f32 %v1024, 0.0051020407
      %v1139 = vmul.f32 %v1029, 0.0051020407
      %v1140 = vmul.f32 %v1034, 0.0051020407
      %v1141 = vmul.f32 %v1039, 0.0051020407
      %v1142 = vmul.f32 %v1044, 0.0051020407
      %v1143 = vmul.f32 %v1049, 0.0051020407
      %v1144 = vmul.f32 %v1054, 0.0051020407
      %v1145 = vmul.f32 %v1059, 0.0051020407
      %1147 = vset.pattern.permute.xlu0 0
      %1148 = vperm.xlu0 %1147, %v1062
      %v1149 = vpop.permute.xlu0 %1148
      %1152 = vset.pattern.permute.xlu0 0
      %1153 = vperm.xlu0 %1152, %v1063
      %v1154 = vpop.permute.xlu0 %1153
      %1157 = vset.pattern.permute.xlu0 0
      %1158 = vperm.xlu0 %1157, %v1064
      %v1159 = vpop.permute.xlu0 %1158
      %1162 = vset.pattern.permute.xlu0 0
      %1163 = vperm.xlu0 %1162, %v1065
      %v1164 = vpop.permute.xlu0 %1163
      %1167 = vset.pattern.permute.xlu0 0
      %1168 = vperm.xlu0 %1167, %v1066
      %v1169 = vpop.permute.xlu0 %1168
      %1172 = vset.pattern.permute.xlu0 0
      %1173 = vperm.xlu0 %1172, %v1067
      %v1174 = vpop.permute.xlu0 %1173
      %1177 = vset.pattern.permute.xlu0 0
      %1178 = vperm.xlu0 %1177, %v1068
      %v1179 = vpop.permute.xlu0 %1178
      %1182 = vset.pattern.permute.xlu0 0
      %1183 = vperm.xlu0 %1182, %v1069
      %v1184 = vpop.permute.xlu0 %1183
      %1187 = vset.pattern.permute.xlu0 0
      %1188 = vperm.xlu0 %1187, %v1070
      %v1189 = vpop.permute.xlu0 %1188
      %1192 = vset.pattern.permute.xlu0 0
      %1193 = vperm.xlu0 %1192, %v1071
      %v1194 = vpop.permute.xlu0 %1193
      %1197 = vset.pattern.permute.xlu0 0
      %1198 = vperm.xlu0 %1197, %v1072
      %v1199 = vpop.permute.xlu0 %1198
      %1202 = vset.pattern.permute.xlu0 0
      %1203 = vperm.xlu0 %1202, %v1073
      %v1204 = vpop.permute.xlu0 %1203
      %1207 = vset.pattern.permute.xlu0 0
      %1208 = vperm.xlu0 %1207, %v1074
      %v1209 = vpop.permute.xlu0 %1208
      %1212 = vset.pattern.permute.xlu0 0
      %1213 = vperm.xlu0 %1212, %v1075
      %v1214 = vpop.permute.xlu0 %1213
      %1217 = vset.pattern.permute.xlu0 0
      %1218 = vperm.xlu0 %1217, %v1076
      %v1219 = vpop.permute.xlu0 %1218
      %1222 = vset.pattern.permute.xlu0 0
      %1223 = vperm.xlu0 %1222, %v1077
      %v1224 = vpop.permute.xlu0 %1223
      %1227 = vset.pattern.permute.xlu0 0
      %1228 = vperm.xlu0 %1227, %v1078
      %v1229 = vpop.permute.xlu0 %1228
      %1232 = vset.pattern.permute.xlu0 0
      %1233 = vperm.xlu0 %1232, %v1079
      %v1234 = vpop.permute.xlu0 %1233
      %1237 = vset.pattern.permute.xlu0 0
      %1238 = vperm.xlu0 %1237, %v1080
      %v1239 = vpop.permute.xlu0 %1238
      %1242 = vset.pattern.permute.xlu0 0
      %1243 = vperm.xlu0 %1242, %v1081
      %v1244 = vpop.permute.xlu0 %1243
      %1247 = vset.pattern.permute.xlu0 0
      %1248 = vperm.xlu0 %1247, %v1082
      %v1249 = vpop.permute.xlu0 %1248
      %1252 = vset.pattern.permute.xlu0 0
      %1253 = vperm.xlu0 %1252, %v1083
      %v1254 = vpop.permute.xlu0 %1253
      %1257 = vset.pattern.permute.xlu0 0
      %1258 = vperm.xlu0 %1257, %v1084
      %v1259 = vpop.permute.xlu0 %1258
      %1262 = vset.pattern.permute.xlu0 0
      %1263 = vperm.xlu0 %1262, %v1085
      %v1264 = vpop.permute.xlu0 %1263
      %1267 = vset.pattern.permute.xlu0 0
      %1268 = vperm.xlu0 %1267, %v1086
      %v1269 = vpop.permute.xlu0 %1268
      %1272 = vset.pattern.permute.xlu0 0
      %1273 = vperm.xlu0 %1272, %v1087
      %v1274 = vpop.permute.xlu0 %1273
      %1277 = vset.pattern.permute.xlu0 0
      %1278 = vperm.xlu0 %1277, %v1088
      %v1279 = vpop.permute.xlu0 %1278
      %1282 = vset.pattern.permute.xlu0 0
      %1283 = vperm.xlu0 %1282, %v1089
      %v1284 = vpop.permute.xlu0 %1283
      %1287 = vset.pattern.permute.xlu0 0
      %1288 = vperm.xlu0 %1287, %v1090
      %v1289 = vpop.permute.xlu0 %1288
      %1292 = vset.pattern.permute.xlu0 0
      %1293 = vperm.xlu0 %1292, %v1091
      %v1294 = vpop.permute.xlu0 %1293
      %1297 = vset.pattern.permute.xlu0 0
      %1298 = vperm.xlu0 %1297, %v1092
      %v1299 = vpop.permute.xlu0 %1298
      %1302 = vset.pattern.permute.xlu0 0
      %1303 = vperm.xlu0 %1302, %v1093
      %v1304 = vpop.permute.xlu0 %1303
      %1307 = vset.pattern.permute.xlu0 0
      %1308 = vperm.xlu0 %1307, %v1094
      %v1309 = vpop.permute.xlu0 %1308
      %1312 = vset.pattern.permute.xlu0 0
      %1313 = vperm.xlu0 %1312, %v1095
      %v1314 = vpop.permute.xlu0 %1313
      %1317 = vset.pattern.permute.xlu0 0
      %1318 = vperm.xlu0 %1317, %v1096
      %v1319 = vpop.permute.xlu0 %1318
      %1322 = vset.pattern.permute.xlu0 0
      %1323 = vperm.xlu0 %1322, %v1097
      %v1324 = vpop.permute.xlu0 %1323
      %1327 = vset.pattern.permute.xlu0 0
      %1328 = vperm.xlu0 %1327, %v1098
      %v1329 = vpop.permute.xlu0 %1328
      %1332 = vset.pattern.permute.xlu0 0
      %1333 = vperm.xlu0 %1332, %v1099
      %v1334 = vpop.permute.xlu0 %1333
      %1337 = vset.pattern.permute.xlu0 0
      %1338 = vperm.xlu0 %1337, %v1100
      %v1339 = vpop.permute.xlu0 %1338
      %1342 = vset.pattern.permute.xlu0 0
      %1343 = vperm.xlu0 %1342, %v1101
      %v1344 = vpop.permute.xlu0 %1343
      %1347 = vset.pattern.permute.xlu0 0
      %1348 = vperm.xlu0 %1347, %v1102
      %v1349 = vpop.permute.xlu0 %1348
      %1352 = vset.pattern.permute.xlu0 0
      %1353 = vperm.xlu0 %1352, %v1103
      %v1354 = vpop.permute.xlu0 %1353
      %1357 = vset.pattern.permute.xlu0 0
      %1358 = vperm.xlu0 %1357, %v1104
      %v1359 = vpop.permute.xlu0 %1358
      %1362 = vset.pattern.permute.xlu0 0
      %1363 = vperm.xlu0 %1362, %v1105
      %v1364 = vpop.permute.xlu0 %1363
      %1367 = vset.pattern.permute.xlu0 0
      %1368 = vperm.xlu0 %1367, %v1106
      %v1369 = vpop.permute.xlu0 %1368
      %1372 = vset.pattern.permute.xlu0 0
      %1373 = vperm.xlu0 %1372, %v1107
      %v1374 = vpop.permute.xlu0 %1373
      %1377 = vset.pattern.permute.xlu0 0
      %1378 = vperm.xlu0 %1377, %v1108
      %v1379 = vpop.permute.xlu0 %1378
      %1382 = vset.pattern.permute.xlu0 0
      %1383 = vperm.xlu0 %1382, %v1109
      %v1384 = vpop.permute.xlu0 %1383
      %1387 = vset.pattern.permute.xlu0 0
      %1388 = vperm.xlu0 %1387, %v1110
      %v1389 = vpop.permute.xlu0 %1388
      %1392 = vset.pattern.permute.xlu0 0
      %1393 = vperm.xlu0 %1392, %v1111
      %v1394 = vpop.permute.xlu0 %1393
      %1397 = vset.pattern.permute.xlu0 0
      %1398 = vperm.xlu0 %1397, %v1112
      %v1399 = vpop.permute.xlu0 %1398
      %1402 = vset.pattern.permute.xlu0 0
      %1403 = vperm.xlu0 %1402, %v1113
      %v1404 = vpop.permute.xlu0 %1403
      %1407 = vset.pattern.permute.xlu0 0
      %1408 = vperm.xlu0 %1407, %v1114
      %v1409 = vpop.permute.xlu0 %1408
      %1412 = vset.pattern.permute.xlu0 0
      %1413 = vperm.xlu0 %1412, %v1115
      %v1414 = vpop.permute.xlu0 %1413
      %1417 = vset.pattern.permute.xlu0 0
      %1418 = vperm.xlu0 %1417, %v1116
      %v1419 = vpop.permute.xlu0 %1418
      %1422 = vset.pattern.permute.xlu0 0
      %1423 = vperm.xlu0 %1422, %v1117
      %v1424 = vpop.permute.xlu0 %1423
      %1427 = vset.pattern.permute.xlu0 0
      %1428 = vperm.xlu0 %1427, %v1118
      %v1429 = vpop.permute.xlu0 %1428
      %1432 = vset.pattern.permute.xlu0 0
      %1433 = vperm.xlu0 %1432, %v1119
      %v1434 = vpop.permute.xlu0 %1433
      %1437 = vset.pattern.permute.xlu0 0
      %1438 = vperm.xlu0 %1437, %v1120
      %v1439 = vpop.permute.xlu0 %1438
      %1442 = vset.pattern.permute.xlu0 0
      %1443 = vperm.xlu0 %1442, %v1121
      %v1444 = vpop.permute.xlu0 %1443
      %1447 = vset.pattern.permute.xlu0 0
      %1448 = vperm.xlu0 %1447, %v1122
      %v1449 = vpop.permute.xlu0 %1448
      %1452 = vset.pattern.permute.xlu0 0
      %1453 = vperm.xlu0 %1452, %v1123
      %v1454 = vpop.permute.xlu0 %1453
      %1457 = vset.pattern.permute.xlu0 0
      %1458 = vperm.xlu0 %1457, %v1124
      %v1459 = vpop.permute.xlu0 %1458
      %1462 = vset.pattern.permute.xlu0 0
      %1463 = vperm.xlu0 %1462, %v1125
      %v1464 = vpop.permute.xlu0 %1463
      %1467 = vset.pattern.permute.xlu0 0
      %1468 = vperm.xlu0 %1467, %v1126
      %v1469 = vpop.permute.xlu0 %1468
      %1472 = vset.pattern.permute.xlu0 0
      %1473 = vperm.xlu0 %1472, %v1127
      %v1474 = vpop.permute.xlu0 %1473
      %1477 = vset.pattern.permute.xlu0 0
      %1478 = vperm.xlu0 %1477, %v1128
      %v1479 = vpop.permute.xlu0 %1478
      %1482 = vset.pattern.permute.xlu0 0
      %1483 = vperm.xlu0 %1482, %v1129
      %v1484 = vpop.permute.xlu0 %1483
      %1487 = vset.pattern.permute.xlu0 0
      %1488 = vperm.xlu0 %1487, %v1130
      %v1489 = vpop.permute.xlu0 %1488
      %1492 = vset.pattern.permute.xlu0 0
      %1493 = vperm.xlu0 %1492, %v1131
      %v1494 = vpop.permute.xlu0 %1493
      %1497 = vset.pattern.permute.xlu0 0
      %1498 = vperm.xlu0 %1497, %v1132
      %v1499 = vpop.permute.xlu0 %1498
      %1502 = vset.pattern.permute.xlu0 0
      %1503 = vperm.xlu0 %1502, %v1133
      %v1504 = vpop.permute.xlu0 %1503
      %1507 = vset.pattern.permute.xlu0 0
      %1508 = vperm.xlu0 %1507, %v1134
      %v1509 = vpop.permute.xlu0 %1508
      %1512 = vset.pattern.permute.xlu0 0
      %1513 = vperm.xlu0 %1512, %v1135
      %v1514 = vpop.permute.xlu0 %1513
      %1517 = vset.pattern.permute.xlu0 0
      %1518 = vperm.xlu0 %1517, %v1136
      %v1519 = vpop.permute.xlu0 %1518
      %1522 = vset.pattern.permute.xlu0 0
      %1523 = vperm.xlu0 %1522, %v1137
      %v1524 = vpop.permute.xlu0 %1523
      %1527 = vset.pattern.permute.xlu0 0
      %1528 = vperm.xlu0 %1527, %v1138
      %v1529 = vpop.permute.xlu0 %1528
      %1532 = vset.pattern.permute.xlu0 0
      %1533 = vperm.xlu0 %1532, %v1139
      %v1534 = vpop.permute.xlu0 %1533
      %1537 = vset.pattern.permute.xlu0 0
      %1538 = vperm.xlu0 %1537, %v1140
      %v1539 = vpop.permute.xlu0 %1538
      %1542 = vset.pattern.permute.xlu0 0
      %1543 = vperm.xlu0 %1542, %v1141
      %v1544 = vpop.permute.xlu0 %1543
      %1547 = vset.pattern.permute.xlu0 0
      %1548 = vperm.xlu0 %1547, %v1142
      %v1549 = vpop.permute.xlu0 %1548
      %1552 = vset.pattern.permute.xlu0 0
      %1553 = vperm.xlu0 %1552, %v1143
      %v1554 = vpop.permute.xlu0 %1553
      %1557 = vset.pattern.permute.xlu0 0
      %1558 = vperm.xlu0 %1557, %v1144
      %v1559 = vpop.permute.xlu0 %1558
      %1562 = vset.pattern.permute.xlu0 0
      %1563 = vperm.xlu0 %1562, %v1145
      %v1564 = vpop.permute.xlu0 %1563
      %v1566 = vsub.f32 %v152, %v1149
      %v1567 = vsub.f32 %v153, %v1149
      %v1568 = vsub.f32 %v154, %v1154
      %v1569 = vsub.f32 %v155, %v1154
      %v1570 = vsub.f32 %v156, %v1159
      %v1571 = vsub.f32 %v157, %v1159
      %v1572 = vsub.f32 %v158, %v1164
      %v1573 = vsub.f32 %v159, %v1164
      %v1574 = vsub.f32 %v160, %v1169
      %v1575 = vsub.f32 %v161, %v1169
      %v1576 = vsub.f32 %v162, %v1174
      %v1577 = vsub.f32 %v163, %v1174
      %v1578 = vsub.f32 %v164, %v1179
      %v1579 = vsub.f32 %v165, %v1179
      %v1580 = vsub.f32 %v166, %v1184
      %v1581 = vsub.f32 %v167, %v1184
      %v1582 = vsub.f32 %v168, %v1189
      %v1583 = vsub.f32 %v169, %v1189
      %v1584 = vsub.f32 %v170, %v1194
      %v1585 = vsub.f32 %v171, %v1194
      %v1586 = vsub.f32 %v172, %v1199
      %v1587 = vsub.f32 %v173, %v1199
      %v1588 = vsub.f32 %v174, %v1204
      %v1589 = vsub.f32 %v175, %v1204
      %v1590 = vsub.f32 %v176, %v1209
      %v1591 = vsub.f32 %v177, %v1209
      %v1592 = vsub.f32 %v178, %v1214
      %v1593 = vsub.f32 %v179, %v1214
      %v1594 = vsub.f32 %v180, %v1219
      %v1595 = vsub.f32 %v181, %v1219
      %v1596 = vsub.f32 %v182, %v1224
      %v1597 = vsub.f32 %v183, %v1224
      %v1598 = vsub.f32 %v184, %v1229
      %v1599 = vsub.f32 %v185, %v1229
      %v1600 = vsub.f32 %v186, %v1234
      %v1601 = vsub.f32 %v187, %v1234
      %v1602 = vsub.f32 %v188, %v1239
      %v1603 = vsub.f32 %v189, %v1239
      %v1604 = vsub.f32 %v190, %v1244
      %v1605 = vsub.f32 %v191, %v1244
      %v1606 = vsub.f32 %v192, %v1249
      %v1607 = vsub.f32 %v193, %v1249
      %v1608 = vsub.f32 %v194, %v1254
      %v1609 = vsub.f32 %v195, %v1254
      %v1610 = vsub.f32 %v196, %v1259
      %v1611 = vsub.f32 %v197, %v1259
      %v1612 = vsub.f32 %v198, %v1264
      %v1613 = vsub.f32 %v199, %v1264
      %v1614 = vsub.f32 %v200, %v1269
      %v1615 = vsub.f32 %v201, %v1269
      %v1616 = vsub.f32 %v202, %v1274
      %v1617 = vsub.f32 %v203, %v1274
      %v1618 = vsub.f32 %v204, %v1279
      %v1619 = vsub.f32 %v205, %v1279
      %v1620 = vsub.f32 %v206, %v1284
      %v1621 = vsub.f32 %v207, %v1284
      %v1622 = vsub.f32 %v208, %v1289
      %v1623 = vsub.f32 %v209, %v1289
      %v1624 = vsub.f32 %v210, %v1294
      %v1625 = vsub.f32 %v211, %v1294
      %v1626 = vsub.f32 %v212, %v1299
      %v1627 = vsub.f32 %v213, %v1299
      %v1628 = vsub.f32 %v214, %v1304
      %v1629 = vsub.f32 %v215, %v1304
      %v1630 = vsub.f32 %v216, %v1309
      %v1631 = vsub.f32 %v217, %v1309
      %v1632 = vsub.f32 %v218, %v1314
      %v1633 = vsub.f32 %v219, %v1314
      %v1634 = vsub.f32 %v220, %v1319
      %v1635 = vsub.f32 %v221, %v1319
      %v1636 = vsub.f32 %v222, %v1324
      %v1637 = vsub.f32 %v223, %v1324
      %v1638 = vsub.f32 %v224, %v1329
      %v1639 = vsub.f32 %v225, %v1329
      %v1640 = vsub.f32 %v226, %v1334
      %v1641 = vsub.f32 %v227, %v1334
      %v1642 = vsub.f32 %v228, %v1339
      %v1643 = vsub.f32 %v229, %v1339
      %v1644 = vsub.f32 %v230, %v1344
      %v1645 = vsub.f32 %v231, %v1344
      %v1646 = vsub.f32 %v232, %v1349
      %v1647 = vsub.f32 %v233, %v1349
      %v1648 = vsub.f32 %v234, %v1354
      %v1649 = vsub.f32 %v235, %v1354
      %v1650 = vsub.f32 %v236, %v1359
      %v1651 = vsub.f32 %v237, %v1359
      %v1652 = vsub.f32 %v238, %v1364
      %v1653 = vsub.f32 %v239, %v1364
      %v1654 = vsub.f32 %v240, %v1369
      %v1655 = vsub.f32 %v241, %v1369
      %v1656 = vsub.f32 %v242, %v1374
      %v1657 = vsub.f32 %v243, %v1374
      %v1658 = vsub.f32 %v244, %v1379
      %v1659 = vsub.f32 %v245, %v1379
      %v1660 = vsub.f32 %v246, %v1384
      %v1661 = vsub.f32 %v247, %v1384
      %v1662 = vsub.f32 %v248, %v1389
      %v1663 = vsub.f32 %v249, %v1389
      %v1664 = vsub.f32 %v250, %v1394
      %v1665 = vsub.f32 %v251, %v1394
      %v1666 = vsub.f32 %v252, %v1399
      %v1667 = vsub.f32 %v253, %v1399
      %v1668 = vsub.f32 %v254, %v1404
      %v1669 = vsub.f32 %v255, %v1404
      %v1670 = vsub.f32 %v256, %v1409
      %v1671 = vsub.f32 %v257, %v1409
      %v1672 = vsub.f32 %v258, %v1414
      %v1673 = vsub.f32 %v259, %v1414
      %v1674 = vsub.f32 %v260, %v1419
      %v1675 = vsub.f32 %v261, %v1419
      %v1676 = vsub.f32 %v262, %v1424
      %v1677 = vsub.f32 %v263, %v1424
      %v1678 = vsub.f32 %v264, %v1429
      %v1679 = vsub.f32 %v265, %v1429
      %v1680 = vsub.f32 %v266, %v1434
      %v1681 = vsub.f32 %v267, %v1434
      %v1682 = vsub.f32 %v268, %v1439
      %v1683 = vsub.f32 %v269, %v1439
      %v1684 = vsub.f32 %v270, %v1444
      %v1685 = vsub.f32 %v271, %v1444
      %v1686 = vsub.f32 %v272, %v1449
      %v1687 = vsub.f32 %v273, %v1449
      %v1688 = vsub.f32 %v274, %v1454
      %v1689 = vsub.f32 %v275, %v1454
      %v1690 = vsub.f32 %v276, %v1459
      %v1691 = vsub.f32 %v277, %v1459
      %v1692 = vsub.f32 %v278, %v1464
      %v1693 = vsub.f32 %v279, %v1464
      %v1694 = vsub.f32 %v280, %v1469
      %v1695 = vsub.f32 %v281, %v1469
      %v1696 = vsub.f32 %v282, %v1474
      %v1697 = vsub.f32 %v283, %v1474
      %v1698 = vsub.f32 %v284, %v1479
      %v1699 = vsub.f32 %v285, %v1479
      %v1700 = vsub.f32 %v286, %v1484
      %v1701 = vsub.f32 %v287, %v1484
      %v1702 = vsub.f32 %v288, %v1489
      %v1703 = vsub.f32 %v289, %v1489
      %v1704 = vsub.f32 %v290, %v1494
      %v1705 = vsub.f32 %v291, %v1494
      %v1706 = vsub.f32 %v292, %v1499
      %v1707 = vsub.f32 %v293, %v1499
      %v1708 = vsub.f32 %v294, %v1504
      %v1709 = vsub.f32 %v295, %v1504
      %v1710 = vsub.f32 %v296, %v1509
      %v1711 = vsub.f32 %v297, %v1509
      %v1712 = vsub.f32 %v298, %v1514
      %v1713 = vsub.f32 %v299, %v1514
      %v1714 = vsub.f32 %v300, %v1519
      %v1715 = vsub.f32 %v301, %v1519
      %v1716 = vsub.f32 %v302, %v1524
      %v1717 = vsub.f32 %v303, %v1524
      %v1718 = vsub.f32 %v304, %v1529
      %v1719 = vsub.f32 %v305, %v1529
      %v1720 = vsub.f32 %v306, %v1534
      %v1721 = vsub.f32 %v307, %v1534
      %v1722 = vsub.f32 %v308, %v1539
      %v1723 = vsub.f32 %v309, %v1539
      %v1724 = vsub.f32 %v310, %v1544
      %v1725 = vsub.f32 %v311, %v1544
      %v1726 = vsub.f32 %v312, %v1549
      %v1727 = vsub.f32 %v313, %v1549
      %v1728 = vsub.f32 %v314, %v1554
      %v1729 = vsub.f32 %v315, %v1554
      %v1730 = vsub.f32 %v316, %v1559
      %v1731 = vsub.f32 %v317, %v1559
      %v1732 = vsub.f32 %v318, %v1564
      %v1733 = vsub.f32 %v319, %v1564
      %v1734 = vmul.f32 %v1566, %v1566
      %v1735 = vmul.f32 %v1567, %v1567
      %v1736 = vmul.f32 %v1568, %v1568
      %v1737 = vmul.f32 %v1569, %v1569
      %v1738 = vmul.f32 %v1570, %v1570
      %v1739 = vmul.f32 %v1571, %v1571
      %v1740 = vmul.f32 %v1572, %v1572
      %v1741 = vmul.f32 %v1573, %v1573
      %v1742 = vmul.f32 %v1574, %v1574
      %v1743 = vmul.f32 %v1575, %v1575
      %v1744 = vmul.f32 %v1576, %v1576
      %v1745 = vmul.f32 %v1577, %v1577
      %v1746 = vmul.f32 %v1578, %v1578
      %v1747 = vmul.f32 %v1579, %v1579
      %v1748 = vmul.f32 %v1580, %v1580
      %v1749 = vmul.f32 %v1581, %v1581
      %v1750 = vmul.f32 %v1582, %v1582
      %v1751 = vmul.f32 %v1583, %v1583
      %v1752 = vmul.f32 %v1584, %v1584
      %v1753 = vmul.f32 %v1585, %v1585
      %v1754 = vmul.f32 %v1586, %v1586
      %v1755 = vmul.f32 %v1587, %v1587
      %v1756 = vmul.f32 %v1588, %v1588
      %v1757 = vmul.f32 %v1589, %v1589
      %v1758 = vmul.f32 %v1590, %v1590
      %v1759 = vmul.f32 %v1591, %v1591
      %v1760 = vmul.f32 %v1592, %v1592
      %v1761 = vmul.f32 %v1593, %v1593
      %v1762 = vmul.f32 %v1594, %v1594
      %v1763 = vmul.f32 %v1595, %v1595
      %v1764 = vmul.f32 %v1596, %v1596
      %v1765 = vmul.f32 %v1597, %v1597
      %v1766 = vmul.f32 %v1598, %v1598
      %v1767 = vmul.f32 %v1599, %v1599
      %v1768 = vmul.f32 %v1600, %v1600
      %v1769 = vmul.f32 %v1601, %v1601
      %v1770 = vmul.f32 %v1602, %v1602
      %v1771 = vmul.f32 %v1603, %v1603
      %v1772 = vmul.f32 %v1604, %v1604
      %v1773 = vmul.f32 %v1605, %v1605
      %v1774 = vmul.f32 %v1606, %v1606
      %v1775 = vmul.f32 %v1607, %v1607
      %v1776 = vmul.f32 %v1608, %v1608
      %v1777 = vmul.f32 %v1609, %v1609
      %v1778 = vmul.f32 %v1610, %v1610
      %v1779 = vmul.f32 %v1611, %v1611
      %v1780 = vmul.f32 %v1612, %v1612
      %v1781 = vmul.f32 %v1613, %v1613
      %v1782 = vmul.f32 %v1614, %v1614
      %v1783 = vmul.f32 %v1615, %v1615
      %v1784 = vmul.f32 %v1616, %v1616
      %v1785 = vmul.f32 %v1617, %v1617
      %v1786 = vmul.f32 %v1618, %v1618
      %v1787 = vmul.f32 %v1619, %v1619
      %v1788 = vmul.f32 %v1620, %v1620
      %v1789 = vmul.f32 %v1621, %v1621
      %v1790 = vmul.f32 %v1622, %v1622
      %v1791 = vmul.f32 %v1623, %v1623
      %v1792 = vmul.f32 %v1624, %v1624
      %v1793 = vmul.f32 %v1625, %v1625
      %v1794 = vmul.f32 %v1626, %v1626
      %v1795 = vmul.f32 %v1627, %v1627
      %v1796 = vmul.f32 %v1628, %v1628
      %v1797 = vmul.f32 %v1629, %v1629
      %v1798 = vmul.f32 %v1630, %v1630
      %v1799 = vmul.f32 %v1631, %v1631
      %v1800 = vmul.f32 %v1632, %v1632
      %v1801 = vmul.f32 %v1633, %v1633
      %v1802 = vmul.f32 %v1634, %v1634
      %v1803 = vmul.f32 %v1635, %v1635
      %v1804 = vmul.f32 %v1636, %v1636
      %v1805 = vmul.f32 %v1637, %v1637
      %v1806 = vmul.f32 %v1638, %v1638
      %v1807 = vmul.f32 %v1639, %v1639
      %v1808 = vmul.f32 %v1640, %v1640
      %v1809 = vmul.f32 %v1641, %v1641
      %v1810 = vmul.f32 %v1642, %v1642
      %v1811 = vmul.f32 %v1643, %v1643
      %v1812 = vmul.f32 %v1644, %v1644
      %v1813 = vmul.f32 %v1645, %v1645
      %v1814 = vmul.f32 %v1646, %v1646
      %v1815 = vmul.f32 %v1647, %v1647
      %v1816 = vmul.f32 %v1648, %v1648
      %v1817 = vmul.f32 %v1649, %v1649
      %v1818 = vmul.f32 %v1650, %v1650
      %v1819 = vmul.f32 %v1651, %v1651
      %v1820 = vmul.f32 %v1652, %v1652
      %v1821 = vmul.f32 %v1653, %v1653
      %v1822 = vmul.f32 %v1654, %v1654
      %v1823 = vmul.f32 %v1655, %v1655
      %v1824 = vmul.f32 %v1656, %v1656
      %v1825 = vmul.f32 %v1657, %v1657
      %v1826 = vmul.f32 %v1658, %v1658
      %v1827 = vmul.f32 %v1659, %v1659
      %v1828 = vmul.f32 %v1660, %v1660
      %v1829 = vmul.f32 %v1661, %v1661
      %v1830 = vmul.f32 %v1662, %v1662
      %v1831 = vmul.f32 %v1663, %v1663
      %v1832 = vmul.f32 %v1664, %v1664
      %v1833 = vmul.f32 %v1665, %v1665
      %v1834 = vmul.f32 %v1666, %v1666
      %v1835 = vmul.f32 %v1667, %v1667
      %v1836 = vmul.f32 %v1668, %v1668
      %v1837 = vmul.f32 %v1669, %v1669
      %v1838 = vmul.f32 %v1670, %v1670
      %v1839 = vmul.f32 %v1671, %v1671
      %v1840 = vmul.f32 %v1672, %v1672
      %v1841 = vmul.f32 %v1673, %v1673
      %v1842 = vmul.f32 %v1674, %v1674
      %v1843 = vmul.f32 %v1675, %v1675
      %v1844 = vmul.f32 %v1676, %v1676
      %v1845 = vmul.f32 %v1677, %v1677
      %v1846 = vmul.f32 %v1678, %v1678
      %v1847 = vmul.f32 %v1679, %v1679
      %v1848 = vmul.f32 %v1680, %v1680
      %v1849 = vmul.f32 %v1681, %v1681
      %v1850 = vmul.f32 %v1682, %v1682
      %v1851 = vmul.f32 %v1683, %v1683
      %v1852 = vmul.f32 %v1684, %v1684
      %v1853 = vmul.f32 %v1685, %v1685
      %v1854 = vmul.f32 %v1686, %v1686
      %v1855 = vmul.f32 %v1687, %v1687
      %v1856 = vmul.f32 %v1688, %v1688
      %v1857 = vmul.f32 %v1689, %v1689
      %v1858 = vmul.f32 %v1690, %v1690
      %v1859 = vmul.f32 %v1691, %v1691
      %v1860 = vmul.f32 %v1692, %v1692
      %v1861 = vmul.f32 %v1693, %v1693
      %v1862 = vmul.f32 %v1694, %v1694
      %v1863 = vmul.f32 %v1695, %v1695
      %v1864 = vmul.f32 %v1696, %v1696
      %v1865 = vmul.f32 %v1697, %v1697
      %v1866 = vmul.f32 %v1698, %v1698
      %v1867 = vmul.f32 %v1699, %v1699
      %v1868 = vmul.f32 %v1700, %v1700
      %v1869 = vmul.f32 %v1701, %v1701
      %v1870 = vmul.f32 %v1702, %v1702
      %v1871 = vmul.f32 %v1703, %v1703
      %v1872 = vmul.f32 %v1704, %v1704
      %v1873 = vmul.f32 %v1705, %v1705
      %v1874 = vmul.f32 %v1706, %v1706
      %v1875 = vmul.f32 %v1707, %v1707
      %v1876 = vmul.f32 %v1708, %v1708
      %v1877 = vmul.f32 %v1709, %v1709
      %v1878 = vmul.f32 %v1710, %v1710
      %v1879 = vmul.f32 %v1711, %v1711
      %v1880 = vmul.f32 %v1712, %v1712
      %v1881 = vmul.f32 %v1713, %v1713
      %v1882 = vmul.f32 %v1714, %v1714
      %v1883 = vmul.f32 %v1715, %v1715
      %v1884 = vmul.f32 %v1716, %v1716
      %v1885 = vmul.f32 %v1717, %v1717
      %v1886 = vmul.f32 %v1718, %v1718
      %v1887 = vmul.f32 %v1719, %v1719
      %v1888 = vmul.f32 %v1720, %v1720
      %v1889 = vmul.f32 %v1721, %v1721
      %v1890 = vmul.f32 %v1722, %v1722
      %v1891 = vmul.f32 %v1723, %v1723
      %v1892 = vmul.f32 %v1724, %v1724
      %v1893 = vmul.f32 %v1725, %v1725
      %v1894 = vmul.f32 %v1726, %v1726
      %v1895 = vmul.f32 %v1727, %v1727
      %v1896 = vmul.f32 %v1728, %v1728
      %v1897 = vmul.f32 %v1729, %v1729
      %v1898 = vmul.f32 %v1730, %v1730
      %v1899 = vmul.f32 %v1731, %v1731
      %v1900 = vmul.f32 %v1732, %v1732
      %v1901 = vmul.f32 %v1733, %v1733
      %v1903 = vsel %vm320, %v1735, 0
      %v1906 = vsel %vm320, %v1737, 0
      %v1909 = vsel %vm320, %v1739, 0
      %v1912 = vsel %vm320, %v1741, 0
      %v1915 = vsel %vm320, %v1743, 0
      %v1918 = vsel %vm320, %v1745, 0
      %v1921 = vsel %vm320, %v1747, 0
      %v1924 = vsel %vm320, %v1749, 0
      %v1927 = vsel %vm320, %v1751, 0
      %v1930 = vsel %vm320, %v1753, 0
      %v1933 = vsel %vm320, %v1755, 0
      %v1936 = vsel %vm320, %v1757, 0
      %v1939 = vsel %vm320, %v1759, 0
      %v1942 = vsel %vm320, %v1761, 0
      %v1945 = vsel %vm320, %v1763, 0
      %v1948 = vsel %vm320, %v1765, 0
      %v1951 = vsel %vm320, %v1767, 0
      %v1954 = vsel %vm320, %v1769, 0
      %v1957 = vsel %vm320, %v1771, 0
      %v1960 = vsel %vm320, %v1773, 0
      %v1963 = vsel %vm320, %v1775, 0
      %v1966 = vsel %vm320, %v1777, 0
      %v1969 = vsel %vm320, %v1779, 0
      %v1972 = vsel %vm320, %v1781, 0
      %v1975 = vsel %vm320, %v1783, 0
      %v1978 = vsel %vm320, %v1785, 0
      %v1981 = vsel %vm320, %v1787, 0
      %v1984 = vsel %vm320, %v1789, 0
      %v1987 = vsel %vm320, %v1791, 0
      %v1990 = vsel %vm320, %v1793, 0
      %v1993 = vsel %vm320, %v1795, 0
      %v1996 = vsel %vm320, %v1797, 0
      %v1999 = vsel %vm320, %v1799, 0
      %v2002 = vsel %vm320, %v1801, 0
      %v2005 = vsel %vm320, %v1803, 0
      %v2008 = vsel %vm320, %v1805, 0
      %v2011 = vsel %vm320, %v1807, 0
      %v2014 = vsel %vm320, %v1809, 0
      %v2017 = vsel %vm320, %v1811, 0
      %v2020 = vsel %vm320, %v1813, 0
      %v2023 = vsel %vm320, %v1815, 0
      %v2026 = vsel %vm320, %v1817, 0
      %v2029 = vsel %vm320, %v1819, 0
      %v2032 = vsel %vm320, %v1821, 0
      %v2035 = vsel %vm320, %v1823, 0
      %v2038 = vsel %vm320, %v1825, 0
      %v2041 = vsel %vm320, %v1827, 0
      %v2044 = vsel %vm320, %v1829, 0
      %v2047 = vsel %vm320, %v1831, 0
      %v2050 = vsel %vm320, %v1833, 0
      %v2053 = vsel %vm320, %v1835, 0
      %v2056 = vsel %vm320, %v1837, 0
      %v2059 = vsel %vm320, %v1839, 0
      %v2062 = vsel %vm320, %v1841, 0
      %v2065 = vsel %vm320, %v1843, 0
      %v2068 = vsel %vm320, %v1845, 0
      %v2071 = vsel %vm320, %v1847, 0
      %v2074 = vsel %vm320, %v1849, 0
      %v2077 = vsel %vm320, %v1851, 0
      %v2080 = vsel %vm320, %v1853, 0
      %v2083 = vsel %vm320, %v1855, 0
      %v2086 = vsel %vm320, %v1857, 0
      %v2089 = vsel %vm320, %v1859, 0
      %v2092 = vsel %vm320, %v1861, 0
      %v2095 = vsel %vm320, %v1863, 0
      %v2098 = vsel %vm320, %v1865, 0
      %v2101 = vsel %vm320, %v1867, 0
      %v2104 = vsel %vm320, %v1869, 0
      %v2107 = vsel %vm320, %v1871, 0
      %v2110 = vsel %vm320, %v1873, 0
      %v2113 = vsel %vm320, %v1875, 0
      %v2116 = vsel %vm320, %v1877, 0
      %v2119 = vsel %vm320, %v1879, 0
      %v2122 = vsel %vm320, %v1881, 0
      %v2125 = vsel %vm320, %v1883, 0
      %v2128 = vsel %vm320, %v1885, 0
      %v2131 = vsel %vm320, %v1887, 0
      %v2134 = vsel %vm320, %v1889, 0
      %v2137 = vsel %vm320, %v1891, 0
      %v2140 = vsel %vm320, %v1893, 0
      %v2143 = vsel %vm320, %v1895, 0
      %v2146 = vsel %vm320, %v1897, 0
      %v2149 = vsel %vm320, %v1899, 0
      %v2152 = vsel %vm320, %v1901, 0
      %2154 = vmatprep.subr.mxu0 0.0
      %2155 = vmatpush1.msra.mxu0 1.0
      %2156 = vmatprep.subr.mxu0 0.0
      %2157 = vmatpush1.msra.mxu0 1.0
      %2158 = vmatprep.subr.mxu0 0.0
      %2159 = vmatpush1.msra.mxu0 1.0
      %2160 = vmatprep.subr.mxu0 0.0
      %2161 = vmatpush1.msra.mxu0 1.0
      %2162 = vmatprep.subr.mxu0 0.0
      %2163 = vmatpush1.msra.mxu0 1.0
      %2164 = vmatprep.subr.mxu0 0.0
      %2165 = vmatpush1.msra.mxu0 1.0
      %2166 = vmatprep.subr.mxu0 0.0
      %2167 = vmatpush1.msra.mxu0 1.0
      %2168 = vmatprep.subr.mxu0 0.0
      %2169 = vmatpush1.msra.mxu0 1.0
      %2170 = vmatprep.subr.mxu0 0.0
      %2171 = vmatpush1.msra.mxu0 1.0
      %2172 = vmatprep.subr.mxu0 0.0
      %2173 = vmatpush1.msra.mxu0 1.0
      %2174 = vmatprep.subr.mxu0 0.0
      %2175 = vmatpush1.msra.mxu0 1.0
      %2176 = vmatprep.subr.mxu0 0.0
      %2177 = vmatpush1.msra.mxu0 1.0
      %2178 = vmatprep.subr.mxu0 0.0
      %2179 = vmatpush1.msra.mxu0 1.0
      %2180 = vmatprep.subr.mxu0 0.0
      %2181 = vmatpush1.msra.mxu0 1.0
      %2182 = vmatprep.subr.mxu0 0.0
      %2183 = vmatpush1.msra.mxu0 1.0
      %2184 = vmatprep.subr.mxu0 0.0
      %2185 = vmatpush1.msra.mxu0 1.0
      %2186 = vmatprep.subr.mxu0 0.0
      %2187 = vmatpush1.msra.mxu0 1.0
      %2188 = vmatprep.subr.mxu0 0.0
      %2189 = vmatpush1.msra.mxu0 1.0
      %2190 = vmatprep.subr.mxu0 0.0
      %2191 = vmatpush1.msra.mxu0 1.0
      %2192 = vmatprep.subr.mxu0 0.0
      %2193 = vmatpush1.msra.mxu0 1.0
      %2194 = vmatprep.subr.mxu0 0.0
      %2195 = vmatpush1.msra.mxu0 1.0
      %2196 = vmatprep.subr.mxu0 0.0
      %2197 = vmatpush1.msra.mxu0 1.0
      %2198 = vmatprep.subr.mxu0 0.0
      %2199 = vmatpush1.msra.mxu0 1.0
      %2200 = vmatprep.subr.mxu0 0.0
      %2201 = vmatpush1.msra.mxu0 1.0
      %2202 = vmatprep.subr.mxu0 0.0
      %2203 = vmatpush1.msra.mxu0 %v575
      %2204 = vmatprep.subr.mxu0 0.0
      %2205 = vmatpush1.msra.mxu0 0.0
      %2206 = vmatprep.subr.mxu0 0.0
      %2207 = vmatpush1.msra.mxu0 0.0
      %2208 = vmatprep.subr.mxu0 0.0
      %2209 = vmatpush1.msra.mxu0 0.0
      %2210 = vmatprep.subr.mxu0 0.0
      %2211 = vmatpush1.msra.mxu0 0.0
      %2212 = vmatprep.subr.mxu0 0.0
      %2213 = vmatpush1.msra.mxu0 0.0
      %2214 = vmatprep.subr.mxu0 0.0
      %2215 = vmatpush1.msra.mxu0 0.0
      %2216 = vmatprep.subr.mxu0 0.0
      %2217 = vmatpush1.msra.mxu0 0.0
      %2218 = vmatprep.mubr.f32.mxu0 %v1903
      %2219 = vmatmul.mubr.f32.gmra.mrb[0].mxu0 %v1734
      %v2220 = vpop.f32.mrb[0].mxu0
      %v2221 = vadd.f32 0.0, %v2220
      %v2222 = vpop.f32.mrb[0].mxu0
      %2223 = vmatprep.mubr.f32.mxu0 %v1906
      %2224 = vmatmul.mubr.f32.gmra.mrb[0].mxu0 %v1736
      %v2225 = vpop.f32.mrb[0].mxu0
      %v2226 = vadd.f32 0.0, %v2225
      %v2227 = vpop.f32.mrb[0].mxu0
      %2228 = vmatprep.mubr.f32.mxu0 %v1909
      %2229 = vmatmul.mubr.f32.gmra.mrb[0].mxu0 %v1738
      %v2230 = vpop.f32.mrb[0].mxu0
      %v2231 = vadd.f32 0.0, %v2230
      %v2232 = vpop.f32.mrb[0].mxu0
      %2233 = vmatprep.mubr.f32.mxu0 %v1912
      %2234 = vmatmul.mubr.f32.gmra.mrb[0].mxu0 %v1740
      %v2235 = vpop.f32.mrb[0].mxu0
      %v2236 = vadd.f32 0.0, %v2235
      %v2237 = vpop.f32.mrb[0].mxu0
      %2238 = vmatprep.mubr.f32.mxu0 %v1915
      %2239 = vmatmul.mubr.f32.gmra.mrb[0].mxu0 %v1742
      %v2240 = vpop.f32.mrb[0].mxu0
      %v2241 = vadd.f32 0.0, %v2240
      %v2242 = vpop.f32.mrb[0].mxu0
      %2243 = vmatprep.mubr.f32.mxu0 %v1918
      %2244 = vmatmul.mubr.f32.gmra.mrb[0].mxu0 %v1744
      %v2245 = vpop.f32.mrb[0].mxu0
      %v2246 = vadd.f32 0.0, %v2245
      %v2247 = vpop.f32.mrb[0].mxu0
      %2248 = vmatprep.mubr.f32.mxu0 %v1921
      %2249 = vmatmul.mubr.f32.gmra.mrb[0].mxu0 %v1746
      %v2250 = vpop.f32.mrb[0].mxu0
      %v2251 = vadd.f32 0.0, %v2250
      %v2252 = vpop.f32.mrb[0].mxu0
      %2253 = vmatprep.mubr.f32.mxu0 %v1924
      %2254 = vmatmul.mubr.f32.gmra.mrb[0].mxu0 %v1748
      %v2255 = vpop.f32.mrb[0].mxu0
      %v2256 = vadd.f32 0.0, %v2255
      %v2257 = vpop.f32.mrb[0].mxu0
      %2258 = vmatprep.mubr.f32.mxu0 %v1927
      %2259 = vmatmul.mubr.f32.gmra.mrb[0].mxu0 %v1750
      %v2260 = vpop.f32.mrb[0].mxu0
      %v2261 = vadd.f32 0.0, %v2260
      %v2262 = vpop.f32.mrb[0].mxu0
      %2263 = vmatprep.mubr.f32.mxu0 %v1930
      %2264 = vmatmul.mubr.f32.gmra.mrb[0].mxu0 %v1752
      %v2265 = vpop.f32.mrb[0].mxu0
      %v2266 = vadd.f32 0.0, %v2265
      %v2267 = vpop.f32.mrb[0].mxu0
      %2268 = vmatprep.mubr.f32.mxu0 %v1933
      %2269 = vmatmul.mubr.f32.gmra.mrb[0].mxu0 %v1754
      %v2270 = vpop.f32.mrb[0].mxu0
      %v2271 = vadd.f32 0.0, %v2270
      %v2272 = vpop.f32.mrb[0].mxu0
      %2273 = vmatprep.mubr.f32.mxu0 %v1936
      %2274 = vmatmul.mubr.f32.gmra.mrb[0].mxu0 %v1756
      %v2275 = vpop.f32.mrb[0].mxu0
      %v2276 = vadd.f32 0.0, %v2275
      %v2277 = vpop.f32.mrb[0].mxu0
      %2278 = vmatprep.mubr.f32.mxu0 %v1939
      %2279 = vmatmul.mubr.f32.gmra.mrb[0].mxu0 %v1758
      %v2280 = vpop.f32.mrb[0].mxu0
      %v2281 = vadd.f32 0.0, %v2280
      %v2282 = vpop.f32.mrb[0].mxu0
      %2283 = vmatprep.mubr.f32.mxu0 %v1942
      %2284 = vmatmul.mubr.f32.gmra.mrb[0].mxu0 %v1760
      %v2285 = vpop.f32.mrb[0].mxu0
      %v2286 = vadd.f32 0.0, %v2285
      %v2287 = vpop.f32.mrb[0].mxu0
      %2288 = vmatprep.mubr.f32.mxu0 %v1945
      %2289 = vmatmul.mubr.f32.gmra.mrb[0].mxu0 %v1762
      %v2290 = vpop.f32.mrb[0].mxu0
      %v2291 = vadd.f32 0.0, %v2290
      %v2292 = vpop.f32.mrb[0].mxu0
      %2293 = vmatprep.mubr.f32.mxu0 %v1948
      %2294 = vmatmul.mubr.f32.gmra.mrb[0].mxu0 %v1764
      %v2295 = vpop.f32.mrb[0].mxu0
      %v2296 = vadd.f32 0.0, %v2295
      %v2297 = vpop.f32.mrb[0].mxu0
      %2298 = vmatprep.mubr.f32.mxu0 %v1951
      %2299 = vmatmul.mubr.f32.gmra.mrb[0].mxu0 %v1766
      %v2300 = vpop.f32.mrb[0].mxu0
      %v2301 = vadd.f32 0.0, %v2300
      %v2302 = vpop.f32.mrb[0].mxu0
      %2303 = vmatprep.mubr.f32.mxu0 %v1954
      %2304 = vmatmul.mubr.f32.gmra.mrb[0].mxu0 %v1768
      %v2305 = vpop.f32.mrb[0].mxu0
      %v2306 = vadd.f32 0.0, %v2305
      %v2307 = vpop.f32.mrb[0].mxu0
      %2308 = vmatprep.mubr.f32.mxu0 %v1957
      %2309 = vmatmul.mubr.f32.gmra.mrb[0].mxu0 %v1770
      %v2310 = vpop.f32.mrb[0].mxu0
      %v2311 = vadd.f32 0.0, %v2310
      %v2312 = vpop.f32.mrb[0].mxu0
      %2313 = vmatprep.mubr.f32.mxu0 %v1960
      %2314 = vmatmul.mubr.f32.gmra.mrb[0].mxu0 %v1772
      %v2315 = vpop.f32.mrb[0].mxu0
      %v2316 = vadd.f32 0.0, %v2315
      %v2317 = vpop.f32.mrb[0].mxu0
      %2318 = vmatprep.mubr.f32.mxu0 %v1963
      %2319 = vmatmul.mubr.f32.gmra.mrb[0].mxu0 %v1774
      %v2320 = vpop.f32.mrb[0].mxu0
      %v2321 = vadd.f32 0.0, %v2320
      %v2322 = vpop.f32.mrb[0].mxu0
      %2323 = vmatprep.mubr.f32.mxu0 %v1966
      %2324 = vmatmul.mubr.f32.gmra.mrb[0].mxu0 %v1776
      %v2325 = vpop.f32.mrb[0].mxu0
      %v2326 = vadd.f32 0.0, %v2325
      %v2327 = vpop.f32.mrb[0].mxu0
      %2328 = vmatprep.mubr.f32.mxu0 %v1969
      %2329 = vmatmul.mubr.f32.gmra.mrb[0].mxu0 %v1778
      %v2330 = vpop.f32.mrb[0].mxu0
      %v2331 = vadd.f32 0.0, %v2330
      %v2332 = vpop.f32.mrb[0].mxu0
      %2333 = vmatprep.mubr.f32.mxu0 %v1972
      %2334 = vmatmul.mubr.f32.gmra.mrb[0].mxu0 %v1780
      %v2335 = vpop.f32.mrb[0].mxu0
      %v2336 = vadd.f32 0.0, %v2335
      %v2337 = vpop.f32.mrb[0].mxu0
      %2338 = vmatprep.mubr.f32.mxu0 %v1975
      %2339 = vmatmul.mubr.f32.gmra.mrb[0].mxu0 %v1782
      %v2340 = vpop.f32.mrb[0].mxu0
      %v2341 = vadd.f32 0.0, %v2340
      %v2342 = vpop.f32.mrb[0].mxu0
      %2343 = vmatprep.mubr.f32.mxu0 %v1978
      %2344 = vmatmul.mubr.f32.gmra.mrb[0].mxu0 %v1784
      %v2345 = vpop.f32.mrb[0].mxu0
      %v2346 = vadd.f32 0.0, %v2345
      %v2347 = vpop.f32.mrb[0].mxu0
      %2348 = vmatprep.mubr.f32.mxu0 %v1981
      %2349 = vmatmul.mubr.f32.gmra.mrb[0].mxu0 %v1786
      %v2350 = vpop.f32.mrb[0].mxu0
      %v2351 = vadd.f32 0.0, %v2350
      %v2352 = vpop.f32.mrb[0].mxu0
      %2353 = vmatprep.mubr.f32.mxu0 %v1984
      %2354 = vmatmul.mubr.f32.gmra.mrb[0].mxu0 %v1788
      %v2355 = vpop.f32.mrb[0].mxu0
      %v2356 = vadd.f32 0.0, %v2355
      %v2357 = vpop.f32.mrb[0].mxu0
      %2358 = vmatprep.mubr.f32.mxu0 %v1987
      %2359 = vmatmul.mubr.f32.gmra.mrb[0].mxu0 %v1790
      %v2360 = vpop.f32.mrb[0].mxu0
      %v2361 = vadd.f32 0.0, %v2360
      %v2362 = vpop.f32.mrb[0].mxu0
      %2363 = vmatprep.mubr.f32.mxu0 %v1990
      %2364 = vmatmul.mubr.f32.gmra.mrb[0].mxu0 %v1792
      %v2365 = vpop.f32.mrb[0].mxu0
      %v2366 = vadd.f32 0.0, %v2365
      %v2367 = vpop.f32.mrb[0].mxu0
      %2368 = vmatprep.mubr.f32.mxu0 %v1993
      %2369 = vmatmul.mubr.f32.gmra.mrb[0].mxu0 %v1794
      %v2370 = vpop.f32.mrb[0].mxu0
      %v2371 = vadd.f32 0.0, %v2370
      %v2372 = vpop.f32.mrb[0].mxu0
      %2373 = vmatprep.mubr.f32.mxu0 %v1996
      %2374 = vmatmul.mubr.f32.gmra.mrb[0].mxu0 %v1796
      %v2375 = vpop.f32.mrb[0].mxu0
      %v2376 = vadd.f32 0.0, %v2375
      %v2377 = vpop.f32.mrb[0].mxu0
      %2378 = vmatprep.mubr.f32.mxu0 %v1999
      %2379 = vmatmul.mubr.f32.gmra.mrb[0].mxu0 %v1798
      %v2380 = vpop.f32.mrb[0].mxu0
      %v2381 = vadd.f32 0.0, %v2380
      %v2382 = vpop.f32.mrb[0].mxu0
      %2383 = vmatprep.mubr.f32.mxu0 %v2002
      %2384 = vmatmul.mubr.f32.gmra.mrb[0].mxu0 %v1800
      %v2385 = vpop.f32.mrb[0].mxu0
      %v2386 = vadd.f32 0.0, %v2385
      %v2387 = vpop.f32.mrb[0].mxu0
      %2388 = vmatprep.mubr.f32.mxu0 %v2005
      %2389 = vmatmul.mubr.f32.gmra.mrb[0].mxu0 %v1802
      %v2390 = vpop.f32.mrb[0].mxu0
      %v2391 = vadd.f32 0.0, %v2390
      %v2392 = vpop.f32.mrb[0].mxu0
      %2393 = vmatprep.mubr.f32.mxu0 %v2008
      %2394 = vmatmul.mubr.f32.gmra.mrb[0].mxu0 %v1804
      %v2395 = vpop.f32.mrb[0].mxu0
      %v2396 = vadd.f32 0.0, %v2395
      %v2397 = vpop.f32.mrb[0].mxu0
      %2398 = vmatprep.mubr.f32.mxu0 %v2011
      %2399 = vmatmul.mubr.f32.gmra.mrb[0].mxu0 %v1806
      %v2400 = vpop.f32.mrb[0].mxu0
      %v2401 = vadd.f32 0.0, %v2400
      %v2402 = vpop.f32.mrb[0].mxu0
      %2403 = vmatprep.mubr.f32.mxu0 %v2014
      %2404 = vmatmul.mubr.f32.gmra.mrb[0].mxu0 %v1808
      %v2405 = vpop.f32.mrb[0].mxu0
      %v2406 = vadd.f32 0.0, %v2405
      %v2407 = vpop.f32.mrb[0].mxu0
      %2408 = vmatprep.mubr.f32.mxu0 %v2017
      %2409 = vmatmul.mubr.f32.gmra.mrb[0].mxu0 %v1810
      %v2410 = vpop.f32.mrb[0].mxu0
      %v2411 = vadd.f32 0.0, %v2410
      %v2412 = vpop.f32.mrb[0].mxu0
      %2413 = vmatprep.mubr.f32.mxu0 %v2020
      %2414 = vmatmul.mubr.f32.gmra.mrb[0].mxu0 %v1812
      %v2415 = vpop.f32.mrb[0].mxu0
      %v2416 = vadd.f32 0.0, %v2415
      %v2417 = vpop.f32.mrb[0].mxu0
      %2418 = vmatprep.mubr.f32.mxu0 %v2023
      %2419 = vmatmul.mubr.f32.gmra.mrb[0].mxu0 %v1814
      %v2420 = vpop.f32.mrb[0].mxu0
      %v2421 = vadd.f32 0.0, %v2420
      %v2422 = vpop.f32.mrb[0].mxu0
      %2423 = vmatprep.mubr.f32.mxu0 %v2026
      %2424 = vmatmul.mubr.f32.gmra.mrb[0].mxu0 %v1816
      %v2425 = vpop.f32.mrb[0].mxu0
      %v2426 = vadd.f32 0.0, %v2425
      %v2427 = vpop.f32.mrb[0].mxu0
      %2428 = vmatprep.mubr.f32.mxu0 %v2029
      %2429 = vmatmul.mubr.f32.gmra.mrb[0].mxu0 %v1818
      %v2430 = vpop.f32.mrb[0].mxu0
      %v2431 = vadd.f32 0.0, %v2430
      %v2432 = vpop.f32.mrb[0].mxu0
      %2433 = vmatprep.mubr.f32.mxu0 %v2032
      %2434 = vmatmul.mubr.f32.gmra.mrb[0].mxu0 %v1820
      %v2435 = vpop.f32.mrb[0].mxu0
      %v2436 = vadd.f32 0.0, %v2435
      %v2437 = vpop.f32.mrb[0].mxu0
      %2438 = vmatprep.mubr.f32.mxu0 %v2035
      %2439 = vmatmul.mubr.f32.gmra.mrb[0].mxu0 %v1822
      %v2440 = vpop.f32.mrb[0].mxu0
      %v2441 = vadd.f32 0.0, %v2440
      %v2442 = vpop.f32.mrb[0].mxu0
      %2443 = vmatprep.mubr.f32.mxu0 %v2038
      %2444 = vmatmul.mubr.f32.gmra.mrb[0].mxu0 %v1824
      %v2445 = vpop.f32.mrb[0].mxu0
      %v2446 = vadd.f32 0.0, %v2445
      %v2447 = vpop.f32.mrb[0].mxu0
      %2448 = vmatprep.mubr.f32.mxu0 %v2041
      %2449 = vmatmul.mubr.f32.gmra.mrb[0].mxu0 %v1826
      %v2450 = vpop.f32.mrb[0].mxu0
      %v2451 = vadd.f32 0.0, %v2450
      %v2452 = vpop.f32.mrb[0].mxu0
      %2453 = vmatprep.mubr.f32.mxu0 %v2044
      %2454 = vmatmul.mubr.f32.gmra.mrb[0].mxu0 %v1828
      %v2455 = vpop.f32.mrb[0].mxu0
      %v2456 = vadd.f32 0.0, %v2455
      %v2457 = vpop.f32.mrb[0].mxu0
      %2458 = vmatprep.mubr.f32.mxu0 %v2047
      %2459 = vmatmul.mubr.f32.gmra.mrb[0].mxu0 %v1830
      %v2460 = vpop.f32.mrb[0].mxu0
      %v2461 = vadd.f32 0.0, %v2460
      %v2462 = vpop.f32.mrb[0].mxu0
      %2463 = vmatprep.mubr.f32.mxu0 %v2050
      %2464 = vmatmul.mubr.f32.gmra.mrb[0].mxu0 %v1832
      %v2465 = vpop.f32.mrb[0].mxu0
      %v2466 = vadd.f32 0.0, %v2465
      %v2467 = vpop.f32.mrb[0].mxu0
      %2468 = vmatprep.mubr.f32.mxu0 %v2053
      %2469 = vmatmul.mubr.f32.gmra.mrb[0].mxu0 %v1834
      %v2470 = vpop.f32.mrb[0].mxu0
      %v2471 = vadd.f32 0.0, %v2470
      %v2472 = vpop.f32.mrb[0].mxu0
      %2473 = vmatprep.mubr.f32.mxu0 %v2056
      %2474 = vmatmul.mubr.f32.gmra.mrb[0].mxu0 %v1836
      %v2475 = vpop.f32.mrb[0].mxu0
      %v2476 = vadd.f32 0.0, %v2475
      %v2477 = vpop.f32.mrb[0].mxu0
      %2478 = vmatprep.mubr.f32.mxu0 %v2059
      %2479 = vmatmul.mubr.f32.gmra.mrb[0].mxu0 %v1838
      %v2480 = vpop.f32.mrb[0].mxu0
      %v2481 = vadd.f32 0.0, %v2480
      %v2482 = vpop.f32.mrb[0].mxu0
      %2483 = vmatprep.mubr.f32.mxu0 %v2062
      %2484 = vmatmul.mubr.f32.gmra.mrb[0].mxu0 %v1840
      %v2485 = vpop.f32.mrb[0].mxu0
      %v2486 = vadd.f32 0.0, %v2485
      %v2487 = vpop.f32.mrb[0].mxu0
      %2488 = vmatprep.mubr.f32.mxu0 %v2065
      %2489 = vmatmul.mubr.f32.gmra.mrb[0].mxu0 %v1842
      %v2490 = vpop.f32.mrb[0].mxu0
      %v2491 = vadd.f32 0.0, %v2490
      %v2492 = vpop.f32.mrb[0].mxu0
      %2493 = vmatprep.mubr.f32.mxu0 %v2068
      %2494 = vmatmul.mubr.f32.gmra.mrb[0].mxu0 %v1844
      %v2495 = vpop.f32.mrb[0].mxu0
      %v2496 = vadd.f32 0.0, %v2495
      %v2497 = vpop.f32.mrb[0].mxu0
      %2498 = vmatprep.mubr.f32.mxu0 %v2071
      %2499 = vmatmul.mubr.f32.gmra.mrb[0].mxu0 %v1846
      %v2500 = vpop.f32.mrb[0].mxu0
      %v2501 = vadd.f32 0.0, %v2500
      %v2502 = vpop.f32.mrb[0].mxu0
      %2503 = vmatprep.mubr.f32.mxu0 %v2074
      %2504 = vmatmul.mubr.f32.gmra.mrb[0].mxu0 %v1848
      %v2505 = vpop.f32.mrb[0].mxu0
      %v2506 = vadd.f32 0.0, %v2505
      %v2507 = vpop.f32.mrb[0].mxu0
      %2508 = vmatprep.mubr.f32.mxu0 %v2077
      %2509 = vmatmul.mubr.f32.gmra.mrb[0].mxu0 %v1850
      %v2510 = vpop.f32.mrb[0].mxu0
      %v2511 = vadd.f32 0.0, %v2510
      %v2512 = vpop.f32.mrb[0].mxu0
      %2513 = vmatprep.mubr.f32.mxu0 %v2080
      %2514 = vmatmul.mubr.f32.gmra.mrb[0].mxu0 %v1852
      %v2515 = vpop.f32.mrb[0].mxu0
      %v2516 = vadd.f32 0.0, %v2515
      %v2517 = vpop.f32.mrb[0].mxu0
      %2518 = vmatprep.mubr.f32.mxu0 %v2083
      %2519 = vmatmul.mubr.f32.gmra.mrb[0].mxu0 %v1854
      %v2520 = vpop.f32.mrb[0].mxu0
      %v2521 = vadd.f32 0.0, %v2520
      %v2522 = vpop.f32.mrb[0].mxu0
      %2523 = vmatprep.mubr.f32.mxu0 %v2086
      %2524 = vmatmul.mubr.f32.gmra.mrb[0].mxu0 %v1856
      %v2525 = vpop.f32.mrb[0].mxu0
      %v2526 = vadd.f32 0.0, %v2525
      %v2527 = vpop.f32.mrb[0].mxu0
      %2528 = vmatprep.mubr.f32.mxu0 %v2089
      %2529 = vmatmul.mubr.f32.gmra.mrb[0].mxu0 %v1858
      %v2530 = vpop.f32.mrb[0].mxu0
      %v2531 = vadd.f32 0.0, %v2530
      %v2532 = vpop.f32.mrb[0].mxu0
      %2533 = vmatprep.mubr.f32.mxu0 %v2092
      %2534 = vmatmul.mubr.f32.gmra.mrb[0].mxu0 %v1860
      %v2535 = vpop.f32.mrb[0].mxu0
      %v2536 = vadd.f32 0.0, %v2535
      %v2537 = vpop.f32.mrb[0].mxu0
      %2538 = vmatprep.mubr.f32.mxu0 %v2095
      %2539 = vmatmul.mubr.f32.gmra.mrb[0].mxu0 %v1862
      %v2540 = vpop.f32.mrb[0].mxu0
      %v2541 = vadd.f32 0.0, %v2540
      %v2542 = vpop.f32.mrb[0].mxu0
      %2543 = vmatprep.mubr.f32.mxu0 %v2098
      %2544 = vmatmul.mubr.f32.gmra.mrb[0].mxu0 %v1864
      %v2545 = vpop.f32.mrb[0].mxu0
      %v2546 = vadd.f32 0.0, %v2545
      %v2547 = vpop.f32.mrb[0].mxu0
      %2548 = vmatprep.mubr.f32.mxu0 %v2101
      %2549 = vmatmul.mubr.f32.gmra.mrb[0].mxu0 %v1866
      %v2550 = vpop.f32.mrb[0].mxu0
      %v2551 = vadd.f32 0.0, %v2550
      %v2552 = vpop.f32.mrb[0].mxu0
      %2553 = vmatprep.mubr.f32.mxu0 %v2104
      %2554 = vmatmul.mubr.f32.gmra.mrb[0].mxu0 %v1868
      %v2555 = vpop.f32.mrb[0].mxu0
      %v2556 = vadd.f32 0.0, %v2555
      %v2557 = vpop.f32.mrb[0].mxu0
      %2558 = vmatprep.mubr.f32.mxu0 %v2107
      %2559 = vmatmul.mubr.f32.gmra.mrb[0].mxu0 %v1870
      %v2560 = vpop.f32.mrb[0].mxu0
      %v2561 = vadd.f32 0.0, %v2560
      %v2562 = vpop.f32.mrb[0].mxu0
      %2563 = vmatprep.mubr.f32.mxu0 %v2110
      %2564 = vmatmul.mubr.f32.gmra.mrb[0].mxu0 %v1872
      %v2565 = vpop.f32.mrb[0].mxu0
      %v2566 = vadd.f32 0.0, %v2565
      %v2567 = vpop.f32.mrb[0].mxu0
      %2568 = vmatprep.mubr.f32.mxu0 %v2113
      %2569 = vmatmul.mubr.f32.gmra.mrb[0].mxu0 %v1874
      %v2570 = vpop.f32.mrb[0].mxu0
      %v2571 = vadd.f32 0.0, %v2570
      %v2572 = vpop.f32.mrb[0].mxu0
      %2573 = vmatprep.mubr.f32.mxu0 %v2116
      %2574 = vmatmul.mubr.f32.gmra.mrb[0].mxu0 %v1876
      %v2575 = vpop.f32.mrb[0].mxu0
      %v2576 = vadd.f32 0.0, %v2575
      %v2577 = vpop.f32.mrb[0].mxu0
      %2578 = vmatprep.mubr.f32.mxu0 %v2119
      %2579 = vmatmul.mubr.f32.gmra.mrb[0].mxu0 %v1878
      %v2580 = vpop.f32.mrb[0].mxu0
      %v2581 = vadd.f32 0.0, %v2580
      %v2582 = vpop.f32.mrb[0].mxu0
      %2583 = vmatprep.mubr.f32.mxu0 %v2122
      %2584 = vmatmul.mubr.f32.gmra.mrb[0].mxu0 %v1880
      %v2585 = vpop.f32.mrb[0].mxu0
      %v2586 = vadd.f32 0.0, %v2585
      %v2587 = vpop.f32.mrb[0].mxu0
      %2588 = vmatprep.mubr.f32.mxu0 %v2125
      %2589 = vmatmul.mubr.f32.gmra.mrb[0].mxu0 %v1882
      %v2590 = vpop.f32.mrb[0].mxu0
      %v2591 = vadd.f32 0.0, %v2590
      %v2592 = vpop.f32.mrb[0].mxu0
      %2593 = vmatprep.mubr.f32.mxu0 %v2128
      %2594 = vmatmul.mubr.f32.gmra.mrb[0].mxu0 %v1884
      %v2595 = vpop.f32.mrb[0].mxu0
      %v2596 = vadd.f32 0.0, %v2595
      %v2597 = vpop.f32.mrb[0].mxu0
      %2598 = vmatprep.mubr.f32.mxu0 %v2131
      %2599 = vmatmul.mubr.f32.gmra.mrb[0].mxu0 %v1886
      %v2600 = vpop.f32.mrb[0].mxu0
      %v2601 = vadd.f32 0.0, %v2600
      %v2602 = vpop.f32.mrb[0].mxu0
      %2603 = vmatprep.mubr.f32.mxu0 %v2134
      %2604 = vmatmul.mubr.f32.gmra.mrb[0].mxu0 %v1888
      %v2605 = vpop.f32.mrb[0].mxu0
      %v2606 = vadd.f32 0.0, %v2605
      %v2607 = vpop.f32.mrb[0].mxu0
      %2608 = vmatprep.mubr.f32.mxu0 %v2137
      %2609 = vmatmul.mubr.f32.gmra.mrb[0].mxu0 %v1890
      %v2610 = vpop.f32.mrb[0].mxu0
      %v2611 = vadd.f32 0.0, %v2610
      %v2612 = vpop.f32.mrb[0].mxu0
      %2613 = vmatprep.mubr.f32.mxu0 %v2140
      %2614 = vmatmul.mubr.f32.gmra.mrb[0].mxu0 %v1892
      %v2615 = vpop.f32.mrb[0].mxu0
      %v2616 = vadd.f32 0.0, %v2615
      %v2617 = vpop.f32.mrb[0].mxu0
      %2618 = vmatprep.mubr.f32.mxu0 %v2143
      %2619 = vmatmul.mubr.f32.gmra.mrb[0].mxu0 %v1894
      %v2620 = vpop.f32.mrb[0].mxu0
      %v2621 = vadd.f32 0.0, %v2620
      %v2622 = vpop.f32.mrb[0].mxu0
      %2623 = vmatprep.mubr.f32.mxu0 %v2146
      %2624 = vmatmul.mubr.f32.gmra.mrb[0].mxu0 %v1896
      %v2625 = vpop.f32.mrb[0].mxu0
      %v2626 = vadd.f32 0.0, %v2625
      %v2627 = vpop.f32.mrb[0].mxu0
      %2628 = vmatprep.mubr.f32.mxu0 %v2149
      %2629 = vmatmul.mubr.f32.gmra.mrb[0].mxu0 %v1898
      %v2630 = vpop.f32.mrb[0].mxu0
      %v2631 = vadd.f32 0.0, %v2630
      %v2632 = vpop.f32.mrb[0].mxu0
      %2633 = vmatprep.mubr.f32.mxu0 %v2152
      %2634 = vmatmul.mubr.f32.gmra.mrb[0].mxu0 %v1900
      %v2635 = vpop.f32.mrb[0].mxu0
      %v2636 = vadd.f32 0.0, %v2635
      %v2637 = vpop.f32.mrb[0].mxu0
      %2638 = vdwg.mxu0
      %v2639 = vmul.f32 %v2221, 0.0051020407
      %v2640 = vmul.f32 %v2226, 0.0051020407
      %v2641 = vmul.f32 %v2231, 0.0051020407
      %v2642 = vmul.f32 %v2236, 0.0051020407
      %v2643 = vmul.f32 %v2241, 0.0051020407
      %v2644 = vmul.f32 %v2246, 0.0051020407
      %v2645 = vmul.f32 %v2251, 0.0051020407
      %v2646 = vmul.f32 %v2256, 0.0051020407
      %v2647 = vmul.f32 %v2261, 0.0051020407
      %v2648 = vmul.f32 %v2266, 0.0051020407
      %v2649 = vmul.f32 %v2271, 0.0051020407
      %v2650 = vmul.f32 %v2276, 0.0051020407
      %v2651 = vmul.f32 %v2281, 0.0051020407
      %v2652 = vmul.f32 %v2286, 0.0051020407
      %v2653 = vmul.f32 %v2291, 0.0051020407
      %v2654 = vmul.f32 %v2296, 0.0051020407
      %v2655 = vmul.f32 %v2301, 0.0051020407
      %v2656 = vmul.f32 %v2306, 0.0051020407
      %v2657 = vmul.f32 %v2311, 0.0051020407
      %v2658 = vmul.f32 %v2316, 0.0051020407
      %v2659 = vmul.f32 %v2321, 0.0051020407
      %v2660 = vmul.f32 %v2326, 0.0051020407
      %v2661 = vmul.f32 %v2331, 0.0051020407
      %v2662 = vmul.f32 %v2336, 0.0051020407
      %v2663 = vmul.f32 %v2341, 0.0051020407
      %v2664 = vmul.f32 %v2346, 0.0051020407
      %v2665 = vmul.f32 %v2351, 0.0051020407
      %v2666 = vmul.f32 %v2356, 0.0051020407
      %v2667 = vmul.f32 %v2361, 0.0051020407
      %v2668 = vmul.f32 %v2366, 0.0051020407
      %v2669 = vmul.f32 %v2371, 0.0051020407
      %v2670 = vmul.f32 %v2376, 0.0051020407
      %v2671 = vmul.f32 %v2381, 0.0051020407
      %v2672 = vmul.f32 %v2386, 0.0051020407
      %v2673 = vmul.f32 %v2391, 0.0051020407
      %v2674 = vmul.f32 %v2396, 0.0051020407
      %v2675 = vmul.f32 %v2401, 0.0051020407
      %v2676 = vmul.f32 %v2406, 0.0051020407
      %v2677 = vmul.f32 %v2411, 0.0051020407
      %v2678 = vmul.f32 %v2416, 0.0051020407
      %v2679 = vmul.f32 %v2421, 0.0051020407
      %v2680 = vmul.f32 %v2426, 0.0051020407
      %v2681 = vmul.f32 %v2431, 0.0051020407
      %v2682 = vmul.f32 %v2436, 0.0051020407
      %v2683 = vmul.f32 %v2441, 0.0051020407
      %v2684 = vmul.f32 %v2446, 0.0051020407
      %v2685 = vmul.f32 %v2451, 0.0051020407
      %v2686 = vmul.f32 %v2456, 0.0051020407
      %v2687 = vmul.f32 %v2461, 0.0051020407
      %v2688 = vmul.f32 %v2466, 0.0051020407
      %v2689 = vmul.f32 %v2471, 0.0051020407
      %v2690 = vmul.f32 %v2476, 0.0051020407
      %v2691 = vmul.f32 %v2481, 0.0051020407
      %v2692 = vmul.f32 %v2486, 0.0051020407
      %v2693 = vmul.f32 %v2491, 0.0051020407
      %v2694 = vmul.f32 %v2496, 0.0051020407
      %v2695 = vmul.f32 %v2501, 0.0051020407
      %v2696 = vmul.f32 %v2506, 0.0051020407
      %v2697 = vmul.f32 %v2511, 0.0051020407
      %v2698 = vmul.f32 %v2516, 0.0051020407
      %v2699 = vmul.f32 %v2521, 0.0051020407
      %v2700 = vmul.f32 %v2526, 0.0051020407
      %v2701 = vmul.f32 %v2531, 0.0051020407
      %v2702 = vmul.f32 %v2536, 0.0051020407
      %v2703 = vmul.f32 %v2541, 0.0051020407
      %v2704 = vmul.f32 %v2546, 0.0051020407
      %v2705 = vmul.f32 %v2551, 0.0051020407
      %v2706 = vmul.f32 %v2556, 0.0051020407
      %v2707 = vmul.f32 %v2561, 0.0051020407
      %v2708 = vmul.f32 %v2566, 0.0051020407
      %v2709 = vmul.f32 %v2571, 0.0051020407
      %v2710 = vmul.f32 %v2576, 0.0051020407
      %v2711 = vmul.f32 %v2581, 0.0051020407
      %v2712 = vmul.f32 %v2586, 0.0051020407
      %v2713 = vmul.f32 %v2591, 0.0051020407
      %v2714 = vmul.f32 %v2596, 0.0051020407
      %v2715 = vmul.f32 %v2601, 0.0051020407
      %v2716 = vmul.f32 %v2606, 0.0051020407
      %v2717 = vmul.f32 %v2611, 0.0051020407
      %v2718 = vmul.f32 %v2616, 0.0051020407
      %v2719 = vmul.f32 %v2621, 0.0051020407
      %v2720 = vmul.f32 %v2626, 0.0051020407
      %v2721 = vmul.f32 %v2631, 0.0051020407
      %v2722 = vmul.f32 %v2636, 0.0051020407
      %s2723 = smul.u32 %s13, 672
      %s2724 = scalar_lea.vmem %s1, %s2723
      %v2725 = vld [vmem:[%s2724] sm:$0xff]
      %v2726 = vld [vmem:[%s2724 + $0x8] sm:$0xff]
      %v2727 = vld [vmem:[%s2724 + $0x10] sm:$0xff]
      %v2728 = vld [vmem:[%s2724 + $0x18] sm:$0xff]
      %v2729 = vld [vmem:[%s2724 + $0x20] sm:$0xff]
      %v2730 = vld [vmem:[%s2724 + $0x28] sm:$0xff]
      %v2731 = vld [vmem:[%s2724 + $0x30] sm:$0xff]
      %v2732 = vld [vmem:[%s2724 + $0x38] sm:$0xff]
      %v2733 = vld [vmem:[%s2724 + $0x40] sm:$0xff]
      %v2734 = vld [vmem:[%s2724 + $0x48] sm:$0xff]
      %v2735 = vld [vmem:[%s2724 + $0x50] sm:$0xff]
      %v2736 = vld [vmem:[%s2724 + $0x58] sm:$0xff]
      %v2737 = vld [vmem:[%s2724 + $0x60] sm:$0xff]
      %v2738 = vld [vmem:[%s2724 + $0x68] sm:$0xff]
      %v2739 = vld [vmem:[%s2724 + $0x70] sm:$0xff]
      %v2740 = vld [vmem:[%s2724 + $0x78] sm:$0xff]
      %v2741 = vld [vmem:[%s2724 + $0x80] sm:$0xff]
      %v2742 = vld [vmem:[%s2724 + $0x88] sm:$0xff]
      %v2743 = vld [vmem:[%s2724 + $0x90] sm:$0xff]
      %v2744 = vld [vmem:[%s2724 + $0x98] sm:$0xff]
      %v2745 = vld [vmem:[%s2724 + $0xa0] sm:$0xff]
      %v2746 = vld [vmem:[%s2724 + $0xa8] sm:$0xff]
      %v2747 = vld [vmem:[%s2724 + $0xb0] sm:$0xff]
      %v2748 = vld [vmem:[%s2724 + $0xb8] sm:$0xff]
      %v2749 = vld [vmem:[%s2724 + $0xc0] sm:$0xff]
      %v2750 = vld [vmem:[%s2724 + $0xc8] sm:$0xff]
      %v2751 = vld [vmem:[%s2724 + $0xd0] sm:$0xff]
      %v2752 = vld [vmem:[%s2724 + $0xd8] sm:$0xff]
      %v2753 = vld [vmem:[%s2724 + $0xe0] sm:$0xff]
      %v2754 = vld [vmem:[%s2724 + $0xe8] sm:$0xff]
      %v2755 = vld [vmem:[%s2724 + $0xf0] sm:$0xff]
      %v2756 = vld [vmem:[%s2724 + $0xf8] sm:$0xff]
      %v2757 = vld [vmem:[%s2724 + $0x100] sm:$0xff]
      %v2758 = vld [vmem:[%s2724 + $0x108] sm:$0xff]
      %v2759 = vld [vmem:[%s2724 + $0x110] sm:$0xff]
      %v2760 = vld [vmem:[%s2724 + $0x118] sm:$0xff]
      %v2761 = vld [vmem:[%s2724 + $0x120] sm:$0xff]
      %v2762 = vld [vmem:[%s2724 + $0x128] sm:$0xff]
      %v2763 = vld [vmem:[%s2724 + $0x130] sm:$0xff]
      %v2764 = vld [vmem:[%s2724 + $0x138] sm:$0xff]
      %v2765 = vld [vmem:[%s2724 + $0x140] sm:$0xff]
      %v2766 = vld [vmem:[%s2724 + $0x148] sm:$0xff]
      %v2767 = vld [vmem:[%s2724 + $0x150] sm:$0xff]
      %v2768 = vld [vmem:[%s2724 + $0x158] sm:$0xff]
      %v2769 = vld [vmem:[%s2724 + $0x160] sm:$0xff]
      %v2770 = vld [vmem:[%s2724 + $0x168] sm:$0xff]
      %v2771 = vld [vmem:[%s2724 + $0x170] sm:$0xff]
      %v2772 = vld [vmem:[%s2724 + $0x178] sm:$0xff]
      %v2773 = vld [vmem:[%s2724 + $0x180] sm:$0xff]
      %v2774 = vld [vmem:[%s2724 + $0x188] sm:$0xff]
      %v2775 = vld [vmem:[%s2724 + $0x190] sm:$0xff]
      %v2776 = vld [vmem:[%s2724 + $0x198] sm:$0xff]
      %v2777 = vld [vmem:[%s2724 + $0x1a0] sm:$0xff]
      %v2778 = vld [vmem:[%s2724 + $0x1a8] sm:$0xff]
      %v2779 = vld [vmem:[%s2724 + $0x1b0] sm:$0xff]
      %v2780 = vld [vmem:[%s2724 + $0x1b8] sm:$0xff]
      %v2781 = vld [vmem:[%s2724 + $0x1c0] sm:$0xff]
      %v2782 = vld [vmem:[%s2724 + $0x1c8] sm:$0xff]
      %v2783 = vld [vmem:[%s2724 + $0x1d0] sm:$0xff]
      %v2784 = vld [vmem:[%s2724 + $0x1d8] sm:$0xff]
      %v2785 = vld [vmem:[%s2724 + $0x1e0] sm:$0xff]
      %v2786 = vld [vmem:[%s2724 + $0x1e8] sm:$0xff]
      %v2787 = vld [vmem:[%s2724 + $0x1f0] sm:$0xff]
      %v2788 = vld [vmem:[%s2724 + $0x1f8] sm:$0xff]
      %v2789 = vld [vmem:[%s2724 + $0x200] sm:$0xff]
      %v2790 = vld [vmem:[%s2724 + $0x208] sm:$0xff]
      %v2791 = vld [vmem:[%s2724 + $0x210] sm:$0xff]
      %v2792 = vld [vmem:[%s2724 + $0x218] sm:$0xff]
      %v2793 = vld [vmem:[%s2724 + $0x220] sm:$0xff]
      %v2794 = vld [vmem:[%s2724 + $0x228] sm:$0xff]
      %v2795 = vld [vmem:[%s2724 + $0x230] sm:$0xff]
      %v2796 = vld [vmem:[%s2724 + $0x238] sm:$0xff]
      %v2797 = vld [vmem:[%s2724 + $0x240] sm:$0xff]
      %v2798 = vld [vmem:[%s2724 + $0x248] sm:$0xff]
      %v2799 = vld [vmem:[%s2724 + $0x250] sm:$0xff]
      %v2800 = vld [vmem:[%s2724 + $0x258] sm:$0xff]
      %v2801 = vld [vmem:[%s2724 + $0x260] sm:$0xff]
      %v2802 = vld [vmem:[%s2724 + $0x268] sm:$0xff]
      %v2803 = vld [vmem:[%s2724 + $0x270] sm:$0xff]
      %v2804 = vld [vmem:[%s2724 + $0x278] sm:$0xff]
      %v2805 = vld [vmem:[%s2724 + $0x280] sm:$0xff]
      %v2806 = vld [vmem:[%s2724 + $0x288] sm:$0xff]
      %v2807 = vld [vmem:[%s2724 + $0x290] sm:$0xff]
      %v2808 = vld [vmem:[%s2724 + $0x298] sm:$0xff]
      %v2809 = vadd.f32 %v2639, 0.001
      %v2810 = vadd.f32 %v2640, 0.001
      %v2811 = vadd.f32 %v2641, 0.001
      %v2812 = vadd.f32 %v2642, 0.001
      %v2813 = vadd.f32 %v2643, 0.001
      %v2814 = vadd.f32 %v2644, 0.001
      %v2815 = vadd.f32 %v2645, 0.001
      %v2816 = vadd.f32 %v2646, 0.001
      %v2817 = vadd.f32 %v2647, 0.001
      %v2818 = vadd.f32 %v2648, 0.001
      %v2819 = vadd.f32 %v2649, 0.001
      %v2820 = vadd.f32 %v2650, 0.001
      %v2821 = vadd.f32 %v2651, 0.001
      %v2822 = vadd.f32 %v2652, 0.001
      %v2823 = vadd.f32 %v2653, 0.001
      %v2824 = vadd.f32 %v2654, 0.001
      %v2825 = vadd.f32 %v2655, 0.001
      %v2826 = vadd.f32 %v2656, 0.001
      %v2827 = vadd.f32 %v2657, 0.001
      %v2828 = vadd.f32 %v2658, 0.001
      %v2829 = vadd.f32 %v2659, 0.001
      %v2830 = vadd.f32 %v2660, 0.001
      %v2831 = vadd.f32 %v2661, 0.001
      %v2832 = vadd.f32 %v2662, 0.001
      %v2833 = vadd.f32 %v2663, 0.001
      %v2834 = vadd.f32 %v2664, 0.001
      %v2835 = vadd.f32 %v2665, 0.001
      %v2836 = vadd.f32 %v2666, 0.001
      %v2837 = vadd.f32 %v2667, 0.001
      %v2838 = vadd.f32 %v2668, 0.001
      %v2839 = vadd.f32 %v2669, 0.001
      %v2840 = vadd.f32 %v2670, 0.001
      %v2841 = vadd.f32 %v2671, 0.001
      %v2842 = vadd.f32 %v2672, 0.001
      %v2843 = vadd.f32 %v2673, 0.001
      %v2844 = vadd.f32 %v2674, 0.001
      %v2845 = vadd.f32 %v2675, 0.001
      %v2846 = vadd.f32 %v2676, 0.001
      %v2847 = vadd.f32 %v2677, 0.001
      %v2848 = vadd.f32 %v2678, 0.001
      %v2849 = vadd.f32 %v2679, 0.001
      %v2850 = vadd.f32 %v2680, 0.001
      %v2851 = vadd.f32 %v2681, 0.001
      %v2852 = vadd.f32 %v2682, 0.001
      %v2853 = vadd.f32 %v2683, 0.001
      %v2854 = vadd.f32 %v2684, 0.001
      %v2855 = vadd.f32 %v2685, 0.001
      %v2856 = vadd.f32 %v2686, 0.001
      %v2857 = vadd.f32 %v2687, 0.001
      %v2858 = vadd.f32 %v2688, 0.001
      %v2859 = vadd.f32 %v2689, 0.001
      %v2860 = vadd.f32 %v2690, 0.001
      %v2861 = vadd.f32 %v2691, 0.001
      %v2862 = vadd.f32 %v2692, 0.001
      %v2863 = vadd.f32 %v2693, 0.001
      %v2864 = vadd.f32 %v2694, 0.001
      %v2865 = vadd.f32 %v2695, 0.001
      %v2866 = vadd.f32 %v2696, 0.001
      %v2867 = vadd.f32 %v2697, 0.001
      %v2868 = vadd.f32 %v2698, 0.001
      %v2869 = vadd.f32 %v2699, 0.001
      %v2870 = vadd.f32 %v2700, 0.001
      %v2871 = vadd.f32 %v2701, 0.001
      %v2872 = vadd.f32 %v2702, 0.001
      %v2873 = vadd.f32 %v2703, 0.001
      %v2874 = vadd.f32 %v2704, 0.001
      %v2875 = vadd.f32 %v2705, 0.001
      %v2876 = vadd.f32 %v2706, 0.001
      %v2877 = vadd.f32 %v2707, 0.001
      %v2878 = vadd.f32 %v2708, 0.001
      %v2879 = vadd.f32 %v2709, 0.001
      %v2880 = vadd.f32 %v2710, 0.001
      %v2881 = vadd.f32 %v2711, 0.001
      %v2882 = vadd.f32 %v2712, 0.001
      %v2883 = vadd.f32 %v2713, 0.001
      %v2884 = vadd.f32 %v2714, 0.001
      %v2885 = vadd.f32 %v2715, 0.001
      %v2886 = vadd.f32 %v2716, 0.001
      %v2887 = vadd.f32 %v2717, 0.001
      %v2888 = vadd.f32 %v2718, 0.001
      %v2889 = vadd.f32 %v2719, 0.001
      %v2890 = vadd.f32 %v2720, 0.001
      %v2891 = vadd.f32 %v2721, 0.001
      %v2892 = vadd.f32 %v2722, 0.001
      %v2893 = vrsqrt.pop %v2809
      %v2894 = vrsqrt.pop %v2810
      %v2895 = vrsqrt.pop %v2811
      %v2896 = vrsqrt.pop %v2812
      %v2897 = vrsqrt.pop %v2813
      %v2898 = vrsqrt.pop %v2814
      %v2899 = vrsqrt.pop %v2815
      %v2900 = vrsqrt.pop %v2816
      %v2901 = vrsqrt.pop %v2817
      %v2902 = vrsqrt.pop %v2818
      %v2903 = vrsqrt.pop %v2819
      %v2904 = vrsqrt.pop %v2820
      %v2905 = vrsqrt.pop %v2821
      %v2906 = vrsqrt.pop %v2822
      %v2907 = vrsqrt.pop %v2823
      %v2908 = vrsqrt.pop %v2824
      %v2909 = vrsqrt.pop %v2825
      %v2910 = vrsqrt.pop %v2826
      %v2911 = vrsqrt.pop %v2827
      %v2912 = vrsqrt.pop %v2828
      %v2913 = vrsqrt.pop %v2829
      %v2914 = vrsqrt.pop %v2830
      %v2915 = vrsqrt.pop %v2831
      %v2916 = vrsqrt.pop %v2832
      %v2917 = vrsqrt.pop %v2833
      %v2918 = vrsqrt.pop %v2834
      %v2919 = vrsqrt.pop %v2835
      %v2920 = vrsqrt.pop %v2836
      %v2921 = vrsqrt.pop %v2837
      %v2922 = vrsqrt.pop %v2838
      %v2923 = vrsqrt.pop %v2839
      %v2924 = vrsqrt.pop %v2840
      %v2925 = vrsqrt.pop %v2841
      %v2926 = vrsqrt.pop %v2842
      %v2927 = vrsqrt.pop %v2843
      %v2928 = vrsqrt.pop %v2844
      %v2929 = vrsqrt.pop %v2845
      %v2930 = vrsqrt.pop %v2846
      %v2931 = vrsqrt.pop %v2847
      %v2932 = vrsqrt.pop %v2848
      %v2933 = vrsqrt.pop %v2849
      %v2934 = vrsqrt.pop %v2850
      %v2935 = vrsqrt.pop %v2851
      %v2936 = vrsqrt.pop %v2852
      %v2937 = vrsqrt.pop %v2853
      %v2938 = vrsqrt.pop %v2854
      %v2939 = vrsqrt.pop %v2855
      %v2940 = vrsqrt.pop %v2856
      %v2941 = vrsqrt.pop %v2857
      %v2942 = vrsqrt.pop %v2858
      %v2943 = vrsqrt.pop %v2859
      %v2944 = vrsqrt.pop %v2860
      %v2945 = vrsqrt.pop %v2861
      %v2946 = vrsqrt.pop %v2862
      %v2947 = vrsqrt.pop %v2863
      %v2948 = vrsqrt.pop %v2864
      %v2949 = vrsqrt.pop %v2865
      %v2950 = vrsqrt.pop %v2866
      %v2951 = vrsqrt.pop %v2867
      %v2952 = vrsqrt.pop %v2868
      %v2953 = vrsqrt.pop %v2869
      %v2954 = vrsqrt.pop %v2870
      %v2955 = vrsqrt.pop %v2871
      %v2956 = vrsqrt.pop %v2872
      %v2957 = vrsqrt.pop %v2873
      %v2958 = vrsqrt.pop %v2874
      %v2959 = vrsqrt.pop %v2875
      %v2960 = vrsqrt.pop %v2876
      %v2961 = vrsqrt.pop %v2877
      %v2962 = vrsqrt.pop %v2878
      %v2963 = vrsqrt.pop %v2879
      %v2964 = vrsqrt.pop %v2880
      %v2965 = vrsqrt.pop %v2881
      %v2966 = vrsqrt.pop %v2882
      %v2967 = vrsqrt.pop %v2883
      %v2968 = vrsqrt.pop %v2884
      %v2969 = vrsqrt.pop %v2885
      %v2970 = vrsqrt.pop %v2886
      %v2971 = vrsqrt.pop %v2887
      %v2972 = vrsqrt.pop %v2888
      %v2973 = vrsqrt.pop %v2889
      %v2974 = vrsqrt.pop %v2890
      %v2975 = vrsqrt.pop %v2891
      %v2976 = vrsqrt.pop %v2892
      %v2977 = vmul.f32 %v2725, %v2893
      %v2978 = vmul.f32 %v2726, %v2894
      %v2979 = vmul.f32 %v2727, %v2895
      %v2980 = vmul.f32 %v2728, %v2896
      %v2981 = vmul.f32 %v2729, %v2897
      %v2982 = vmul.f32 %v2730, %v2898
      %v2983 = vmul.f32 %v2731, %v2899
      %v2984 = vmul.f32 %v2732, %v2900
      %v2985 = vmul.f32 %v2733, %v2901
      %v2986 = vmul.f32 %v2734, %v2902
      %v2987 = vmul.f32 %v2735, %v2903
      %v2988 = vmul.f32 %v2736, %v2904
      %v2989 = vmul.f32 %v2737, %v2905
      %v2990 = vmul.f32 %v2738, %v2906
      %v2991 = vmul.f32 %v2739, %v2907
      %v2992 = vmul.f32 %v2740, %v2908
      %v2993 = vmul.f32 %v2741, %v2909
      %v2994 = vmul.f32 %v2742, %v2910
      %v2995 = vmul.f32 %v2743, %v2911
      %v2996 = vmul.f32 %v2744, %v2912
      %v2997 = vmul.f32 %v2745, %v2913
      %v2998 = vmul.f32 %v2746, %v2914
      %v2999 = vmul.f32 %v2747, %v2915
      %v3000 = vmul.f32 %v2748, %v2916
      %v3001 = vmul.f32 %v2749, %v2917
      %v3002 = vmul.f32 %v2750, %v2918
      %v3003 = vmul.f32 %v2751, %v2919
      %v3004 = vmul.f32 %v2752, %v2920
      %v3005 = vmul.f32 %v2753, %v2921
      %v3006 = vmul.f32 %v2754, %v2922
      %v3007 = vmul.f32 %v2755, %v2923
      %v3008 = vmul.f32 %v2756, %v2924
      %v3009 = vmul.f32 %v2757, %v2925
      %v3010 = vmul.f32 %v2758, %v2926
      %v3011 = vmul.f32 %v2759, %v2927
      %v3012 = vmul.f32 %v2760, %v2928
      %v3013 = vmul.f32 %v2761, %v2929
      %v3014 = vmul.f32 %v2762, %v2930
      %v3015 = vmul.f32 %v2763, %v2931
      %v3016 = vmul.f32 %v2764, %v2932
      %v3017 = vmul.f32 %v2765, %v2933
      %v3018 = vmul.f32 %v2766, %v2934
      %v3019 = vmul.f32 %v2767, %v2935
      %v3020 = vmul.f32 %v2768, %v2936
      %v3021 = vmul.f32 %v2769, %v2937
      %v3022 = vmul.f32 %v2770, %v2938
      %v3023 = vmul.f32 %v2771, %v2939
      %v3024 = vmul.f32 %v2772, %v2940
      %v3025 = vmul.f32 %v2773, %v2941
      %v3026 = vmul.f32 %v2774, %v2942
      %v3027 = vmul.f32 %v2775, %v2943
      %v3028 = vmul.f32 %v2776, %v2944
      %v3029 = vmul.f32 %v2777, %v2945
      %v3030 = vmul.f32 %v2778, %v2946
      %v3031 = vmul.f32 %v2779, %v2947
      %v3032 = vmul.f32 %v2780, %v2948
      %v3033 = vmul.f32 %v2781, %v2949
      %v3034 = vmul.f32 %v2782, %v2950
      %v3035 = vmul.f32 %v2783, %v2951
      %v3036 = vmul.f32 %v2784, %v2952
      %v3037 = vmul.f32 %v2785, %v2953
      %v3038 = vmul.f32 %v2786, %v2954
      %v3039 = vmul.f32 %v2787, %v2955
      %v3040 = vmul.f32 %v2788, %v2956
      %v3041 = vmul.f32 %v2789, %v2957
      %v3042 = vmul.f32 %v2790, %v2958
      %v3043 = vmul.f32 %v2791, %v2959
      %v3044 = vmul.f32 %v2792, %v2960
      %v3045 = vmul.f32 %v2793, %v2961
      %v3046 = vmul.f32 %v2794, %v2962
      %v3047 = vmul.f32 %v2795, %v2963
      %v3048 = vmul.f32 %v2796, %v2964
      %v3049 = vmul.f32 %v2797, %v2965
      %v3050 = vmul.f32 %v2798, %v2966
      %v3051 = vmul.f32 %v2799, %v2967
      %v3052 = vmul.f32 %v2800, %v2968
      %v3053 = vmul.f32 %v2801, %v2969
      %v3054 = vmul.f32 %v2802, %v2970
      %v3055 = vmul.f32 %v2803, %v2971
      %v3056 = vmul.f32 %v2804, %v2972
      %v3057 = vmul.f32 %v2805, %v2973
      %v3058 = vmul.f32 %v2806, %v2974
      %v3059 = vmul.f32 %v2807, %v2975
      %v3060 = vmul.f32 %v2808, %v2976
      %3062 = vset.pattern.permute.xlu0 0
      %3063 = vperm.xlu0 %3062, %v2977
      %v3064 = vpop.permute.xlu0 %3063
      %3067 = vset.pattern.permute.xlu0 0
      %3068 = vperm.xlu0 %3067, %v2978
      %v3069 = vpop.permute.xlu0 %3068
      %3072 = vset.pattern.permute.xlu0 0
      %3073 = vperm.xlu0 %3072, %v2979
      %v3074 = vpop.permute.xlu0 %3073
      %3077 = vset.pattern.permute.xlu0 0
      %3078 = vperm.xlu0 %3077, %v2980
      %v3079 = vpop.permute.xlu0 %3078
      %3082 = vset.pattern.permute.xlu0 0
      %3083 = vperm.xlu0 %3082, %v2981
      %v3084 = vpop.permute.xlu0 %3083
      %3087 = vset.pattern.permute.xlu0 0
      %3088 = vperm.xlu0 %3087, %v2982
      %v3089 = vpop.permute.xlu0 %3088
      %3092 = vset.pattern.permute.xlu0 0
      %3093 = vperm.xlu0 %3092, %v2983
      %v3094 = vpop.permute.xlu0 %3093
      %3097 = vset.pattern.permute.xlu0 0
      %3098 = vperm.xlu0 %3097, %v2984
      %v3099 = vpop.permute.xlu0 %3098
      %3102 = vset.pattern.permute.xlu0 0
      %3103 = vperm.xlu0 %3102, %v2985
      %v3104 = vpop.permute.xlu0 %3103
      %3107 = vset.pattern.permute.xlu0 0
      %3108 = vperm.xlu0 %3107, %v2986
      %v3109 = vpop.permute.xlu0 %3108
      %3112 = vset.pattern.permute.xlu0 0
      %3113 = vperm.xlu0 %3112, %v2987
      %v3114 = vpop.permute.xlu0 %3113
      %3117 = vset.pattern.permute.xlu0 0
      %3118 = vperm.xlu0 %3117, %v2988
      %v3119 = vpop.permute.xlu0 %3118
      %3122 = vset.pattern.permute.xlu0 0
      %3123 = vperm.xlu0 %3122, %v2989
      %v3124 = vpop.permute.xlu0 %3123
      %3127 = vset.pattern.permute.xlu0 0
      %3128 = vperm.xlu0 %3127, %v2990
      %v3129 = vpop.permute.xlu0 %3128
      %3132 = vset.pattern.permute.xlu0 0
      %3133 = vperm.xlu0 %3132, %v2991
      %v3134 = vpop.permute.xlu0 %3133
      %3137 = vset.pattern.permute.xlu0 0
      %3138 = vperm.xlu0 %3137, %v2992
      %v3139 = vpop.permute.xlu0 %3138
      %3142 = vset.pattern.permute.xlu0 0
      %3143 = vperm.xlu0 %3142, %v2993
      %v3144 = vpop.permute.xlu0 %3143
      %3147 = vset.pattern.permute.xlu0 0
      %3148 = vperm.xlu0 %3147, %v2994
      %v3149 = vpop.permute.xlu0 %3148
      %3152 = vset.pattern.permute.xlu0 0
      %3153 = vperm.xlu0 %3152, %v2995
      %v3154 = vpop.permute.xlu0 %3153
      %3157 = vset.pattern.permute.xlu0 0
      %3158 = vperm.xlu0 %3157, %v2996
      %v3159 = vpop.permute.xlu0 %3158
      %3162 = vset.pattern.permute.xlu0 0
      %3163 = vperm.xlu0 %3162, %v2997
      %v3164 = vpop.permute.xlu0 %3163
      %3167 = vset.pattern.permute.xlu0 0
      %3168 = vperm.xlu0 %3167, %v2998
      %v3169 = vpop.permute.xlu0 %3168
      %3172 = vset.pattern.permute.xlu0 0
      %3173 = vperm.xlu0 %3172, %v2999
      %v3174 = vpop.permute.xlu0 %3173
      %3177 = vset.pattern.permute.xlu0 0
      %3178 = vperm.xlu0 %3177, %v3000
      %v3179 = vpop.permute.xlu0 %3178
      %3182 = vset.pattern.permute.xlu0 0
      %3183 = vperm.xlu0 %3182, %v3001
      %v3184 = vpop.permute.xlu0 %3183
      %3187 = vset.pattern.permute.xlu0 0
      %3188 = vperm.xlu0 %3187, %v3002
      %v3189 = vpop.permute.xlu0 %3188
      %3192 = vset.pattern.permute.xlu0 0
      %3193 = vperm.xlu0 %3192, %v3003
      %v3194 = vpop.permute.xlu0 %3193
      %3197 = vset.pattern.permute.xlu0 0
      %3198 = vperm.xlu0 %3197, %v3004
      %v3199 = vpop.permute.xlu0 %3198
      %3202 = vset.pattern.permute.xlu0 0
      %3203 = vperm.xlu0 %3202, %v3005
      %v3204 = vpop.permute.xlu0 %3203
      %3207 = vset.pattern.permute.xlu0 0
      %3208 = vperm.xlu0 %3207, %v3006
      %v3209 = vpop.permute.xlu0 %3208
      %3212 = vset.pattern.permute.xlu0 0
      %3213 = vperm.xlu0 %3212, %v3007
      %v3214 = vpop.permute.xlu0 %3213
      %3217 = vset.pattern.permute.xlu0 0
      %3218 = vperm.xlu0 %3217, %v3008
      %v3219 = vpop.permute.xlu0 %3218
      %3222 = vset.pattern.permute.xlu0 0
      %3223 = vperm.xlu0 %3222, %v3009
      %v3224 = vpop.permute.xlu0 %3223
      %3227 = vset.pattern.permute.xlu0 0
      %3228 = vperm.xlu0 %3227, %v3010
      %v3229 = vpop.permute.xlu0 %3228
      %3232 = vset.pattern.permute.xlu0 0
      %3233 = vperm.xlu0 %3232, %v3011
      %v3234 = vpop.permute.xlu0 %3233
      %3237 = vset.pattern.permute.xlu0 0
      %3238 = vperm.xlu0 %3237, %v3012
      %v3239 = vpop.permute.xlu0 %3238
      %3242 = vset.pattern.permute.xlu0 0
      %3243 = vperm.xlu0 %3242, %v3013
      %v3244 = vpop.permute.xlu0 %3243
      %3247 = vset.pattern.permute.xlu0 0
      %3248 = vperm.xlu0 %3247, %v3014
      %v3249 = vpop.permute.xlu0 %3248
      %3252 = vset.pattern.permute.xlu0 0
      %3253 = vperm.xlu0 %3252, %v3015
      %v3254 = vpop.permute.xlu0 %3253
      %3257 = vset.pattern.permute.xlu0 0
      %3258 = vperm.xlu0 %3257, %v3016
      %v3259 = vpop.permute.xlu0 %3258
      %3262 = vset.pattern.permute.xlu0 0
      %3263 = vperm.xlu0 %3262, %v3017
      %v3264 = vpop.permute.xlu0 %3263
      %3267 = vset.pattern.permute.xlu0 0
      %3268 = vperm.xlu0 %3267, %v3018
      %v3269 = vpop.permute.xlu0 %3268
      %3272 = vset.pattern.permute.xlu0 0
      %3273 = vperm.xlu0 %3272, %v3019
      %v3274 = vpop.permute.xlu0 %3273
      %3277 = vset.pattern.permute.xlu0 0
      %3278 = vperm.xlu0 %3277, %v3020
      %v3279 = vpop.permute.xlu0 %3278
      %3282 = vset.pattern.permute.xlu0 0
      %3283 = vperm.xlu0 %3282, %v3021
      %v3284 = vpop.permute.xlu0 %3283
      %3287 = vset.pattern.permute.xlu0 0
      %3288 = vperm.xlu0 %3287, %v3022
      %v3289 = vpop.permute.xlu0 %3288
      %3292 = vset.pattern.permute.xlu0 0
      %3293 = vperm.xlu0 %3292, %v3023
      %v3294 = vpop.permute.xlu0 %3293
      %3297 = vset.pattern.permute.xlu0 0
      %3298 = vperm.xlu0 %3297, %v3024
      %v3299 = vpop.permute.xlu0 %3298
      %3302 = vset.pattern.permute.xlu0 0
      %3303 = vperm.xlu0 %3302, %v3025
      %v3304 = vpop.permute.xlu0 %3303
      %3307 = vset.pattern.permute.xlu0 0
      %3308 = vperm.xlu0 %3307, %v3026
      %v3309 = vpop.permute.xlu0 %3308
      %3312 = vset.pattern.permute.xlu0 0
      %3313 = vperm.xlu0 %3312, %v3027
      %v3314 = vpop.permute.xlu0 %3313
      %3317 = vset.pattern.permute.xlu0 0
      %3318 = vperm.xlu0 %3317, %v3028
      %v3319 = vpop.permute.xlu0 %3318
      %3322 = vset.pattern.permute.xlu0 0
      %3323 = vperm.xlu0 %3322, %v3029
      %v3324 = vpop.permute.xlu0 %3323
      %3327 = vset.pattern.permute.xlu0 0
      %3328 = vperm.xlu0 %3327, %v3030
      %v3329 = vpop.permute.xlu0 %3328
      %3332 = vset.pattern.permute.xlu0 0
      %3333 = vperm.xlu0 %3332, %v3031
      %v3334 = vpop.permute.xlu0 %3333
      %3337 = vset.pattern.permute.xlu0 0
      %3338 = vperm.xlu0 %3337, %v3032
      %v3339 = vpop.permute.xlu0 %3338
      %3342 = vset.pattern.permute.xlu0 0
      %3343 = vperm.xlu0 %3342, %v3033
      %v3344 = vpop.permute.xlu0 %3343
      %3347 = vset.pattern.permute.xlu0 0
      %3348 = vperm.xlu0 %3347, %v3034
      %v3349 = vpop.permute.xlu0 %3348
      %3352 = vset.pattern.permute.xlu0 0
      %3353 = vperm.xlu0 %3352, %v3035
      %v3354 = vpop.permute.xlu0 %3353
      %3357 = vset.pattern.permute.xlu0 0
      %3358 = vperm.xlu0 %3357, %v3036
      %v3359 = vpop.permute.xlu0 %3358
      %3362 = vset.pattern.permute.xlu0 0
      %3363 = vperm.xlu0 %3362, %v3037
      %v3364 = vpop.permute.xlu0 %3363
      %3367 = vset.pattern.permute.xlu0 0
      %3368 = vperm.xlu0 %3367, %v3038
      %v3369 = vpop.permute.xlu0 %3368
      %3372 = vset.pattern.permute.xlu0 0
      %3373 = vperm.xlu0 %3372, %v3039
      %v3374 = vpop.permute.xlu0 %3373
      %3377 = vset.pattern.permute.xlu0 0
      %3378 = vperm.xlu0 %3377, %v3040
      %v3379 = vpop.permute.xlu0 %3378
      %3382 = vset.pattern.permute.xlu0 0
      %3383 = vperm.xlu0 %3382, %v3041
      %v3384 = vpop.permute.xlu0 %3383
      %3387 = vset.pattern.permute.xlu0 0
      %3388 = vperm.xlu0 %3387, %v3042
      %v3389 = vpop.permute.xlu0 %3388
      %3392 = vset.pattern.permute.xlu0 0
      %3393 = vperm.xlu0 %3392, %v3043
      %v3394 = vpop.permute.xlu0 %3393
      %3397 = vset.pattern.permute.xlu0 0
      %3398 = vperm.xlu0 %3397, %v3044
      %v3399 = vpop.permute.xlu0 %3398
      %3402 = vset.pattern.permute.xlu0 0
      %3403 = vperm.xlu0 %3402, %v3045
      %v3404 = vpop.permute.xlu0 %3403
      %3407 = vset.pattern.permute.xlu0 0
      %3408 = vperm.xlu0 %3407, %v3046
      %v3409 = vpop.permute.xlu0 %3408
      %3412 = vset.pattern.permute.xlu0 0
      %3413 = vperm.xlu0 %3412, %v3047
      %v3414 = vpop.permute.xlu0 %3413
      %3417 = vset.pattern.permute.xlu0 0
      %3418 = vperm.xlu0 %3417, %v3048
      %v3419 = vpop.permute.xlu0 %3418
      %3422 = vset.pattern.permute.xlu0 0
      %3423 = vperm.xlu0 %3422, %v3049
      %v3424 = vpop.permute.xlu0 %3423
      %3427 = vset.pattern.permute.xlu0 0
      %3428 = vperm.xlu0 %3427, %v3050
      %v3429 = vpop.permute.xlu0 %3428
      %3432 = vset.pattern.permute.xlu0 0
      %3433 = vperm.xlu0 %3432, %v3051
      %v3434 = vpop.permute.xlu0 %3433
      %3437 = vset.pattern.permute.xlu0 0
      %3438 = vperm.xlu0 %3437, %v3052
      %v3439 = vpop.permute.xlu0 %3438
      %3442 = vset.pattern.permute.xlu0 0
      %3443 = vperm.xlu0 %3442, %v3053
      %v3444 = vpop.permute.xlu0 %3443
      %3447 = vset.pattern.permute.xlu0 0
      %3448 = vperm.xlu0 %3447, %v3054
      %v3449 = vpop.permute.xlu0 %3448
      %3452 = vset.pattern.permute.xlu0 0
      %3453 = vperm.xlu0 %3452, %v3055
      %v3454 = vpop.permute.xlu0 %3453
      %3457 = vset.pattern.permute.xlu0 0
      %3458 = vperm.xlu0 %3457, %v3056
      %v3459 = vpop.permute.xlu0 %3458
      %3462 = vset.pattern.permute.xlu0 0
      %3463 = vperm.xlu0 %3462, %v3057
      %v3464 = vpop.permute.xlu0 %3463
      %3467 = vset.pattern.permute.xlu0 0
      %3468 = vperm.xlu0 %3467, %v3058
      %v3469 = vpop.permute.xlu0 %3468
      %3472 = vset.pattern.permute.xlu0 0
      %3473 = vperm.xlu0 %3472, %v3059
      %v3474 = vpop.permute.xlu0 %3473
      %3477 = vset.pattern.permute.xlu0 0
      %3478 = vperm.xlu0 %3477, %v3060
      %v3479 = vpop.permute.xlu0 %3478
      %v3481 = vmul.f32 %v1566, %v3064
      %v3482 = vmul.f32 %v1567, %v3064
      %v3483 = vmul.f32 %v1568, %v3069
      %v3484 = vmul.f32 %v1569, %v3069
      %v3485 = vmul.f32 %v1570, %v3074
      %v3486 = vmul.f32 %v1571, %v3074
      %v3487 = vmul.f32 %v1572, %v3079
      %v3488 = vmul.f32 %v1573, %v3079
      %v3489 = vmul.f32 %v1574, %v3084
      %v3490 = vmul.f32 %v1575, %v3084
      %v3491 = vmul.f32 %v1576, %v3089
      %v3492 = vmul.f32 %v1577, %v3089
      %v3493 = vmul.f32 %v1578, %v3094
      %v3494 = vmul.f32 %v1579, %v3094
      %v3495 = vmul.f32 %v1580, %v3099
      %v3496 = vmul.f32 %v1581, %v3099
      %v3497 = vmul.f32 %v1582, %v3104
      %v3498 = vmul.f32 %v1583, %v3104
      %v3499 = vmul.f32 %v1584, %v3109
      %v3500 = vmul.f32 %v1585, %v3109
      %v3501 = vmul.f32 %v1586, %v3114
      %v3502 = vmul.f32 %v1587, %v3114
      %v3503 = vmul.f32 %v1588, %v3119
      %v3504 = vmul.f32 %v1589, %v3119
      %v3505 = vmul.f32 %v1590, %v3124
      %v3506 = vmul.f32 %v1591, %v3124
      %v3507 = vmul.f32 %v1592, %v3129
      %v3508 = vmul.f32 %v1593, %v3129
      %v3509 = vmul.f32 %v1594, %v3134
      %v3510 = vmul.f32 %v1595, %v3134
      %v3511 = vmul.f32 %v1596, %v3139
      %v3512 = vmul.f32 %v1597, %v3139
      %v3513 = vmul.f32 %v1598, %v3144
      %v3514 = vmul.f32 %v1599, %v3144
      %v3515 = vmul.f32 %v1600, %v3149
      %v3516 = vmul.f32 %v1601, %v3149
      %v3517 = vmul.f32 %v1602, %v3154
      %v3518 = vmul.f32 %v1603, %v3154
      %v3519 = vmul.f32 %v1604, %v3159
      %v3520 = vmul.f32 %v1605, %v3159
      %v3521 = vmul.f32 %v1606, %v3164
      %v3522 = vmul.f32 %v1607, %v3164
      %v3523 = vmul.f32 %v1608, %v3169
      %v3524 = vmul.f32 %v1609, %v3169
      %v3525 = vmul.f32 %v1610, %v3174
      %v3526 = vmul.f32 %v1611, %v3174
      %v3527 = vmul.f32 %v1612, %v3179
      %v3528 = vmul.f32 %v1613, %v3179
      %v3529 = vmul.f32 %v1614, %v3184
      %v3530 = vmul.f32 %v1615, %v3184
      %v3531 = vmul.f32 %v1616, %v3189
      %v3532 = vmul.f32 %v1617, %v3189
      %v3533 = vmul.f32 %v1618, %v3194
      %v3534 = vmul.f32 %v1619, %v3194
      %v3535 = vmul.f32 %v1620, %v3199
      %v3536 = vmul.f32 %v1621, %v3199
      %v3537 = vmul.f32 %v1622, %v3204
      %v3538 = vmul.f32 %v1623, %v3204
      %v3539 = vmul.f32 %v1624, %v3209
      %v3540 = vmul.f32 %v1625, %v3209
      %v3541 = vmul.f32 %v1626, %v3214
      %v3542 = vmul.f32 %v1627, %v3214
      %v3543 = vmul.f32 %v1628, %v3219
      %v3544 = vmul.f32 %v1629, %v3219
      %v3545 = vmul.f32 %v1630, %v3224
      %v3546 = vmul.f32 %v1631, %v3224
      %v3547 = vmul.f32 %v1632, %v3229
      %v3548 = vmul.f32 %v1633, %v3229
      %v3549 = vmul.f32 %v1634, %v3234
      %v3550 = vmul.f32 %v1635, %v3234
      %v3551 = vmul.f32 %v1636, %v3239
      %v3552 = vmul.f32 %v1637, %v3239
      %v3553 = vmul.f32 %v1638, %v3244
      %v3554 = vmul.f32 %v1639, %v3244
      %v3555 = vmul.f32 %v1640, %v3249
      %v3556 = vmul.f32 %v1641, %v3249
      %v3557 = vmul.f32 %v1642, %v3254
      %v3558 = vmul.f32 %v1643, %v3254
      %v3559 = vmul.f32 %v1644, %v3259
      %v3560 = vmul.f32 %v1645, %v3259
      %v3561 = vmul.f32 %v1646, %v3264
      %v3562 = vmul.f32 %v1647, %v3264
      %v3563 = vmul.f32 %v1648, %v3269
      %v3564 = vmul.f32 %v1649, %v3269
      %v3565 = vmul.f32 %v1650, %v3274
      %v3566 = vmul.f32 %v1651, %v3274
      %v3567 = vmul.f32 %v1652, %v3279
      %v3568 = vmul.f32 %v1653, %v3279
      %v3569 = vmul.f32 %v1654, %v3284
      %v3570 = vmul.f32 %v1655, %v3284
      %v3571 = vmul.f32 %v1656, %v3289
      %v3572 = vmul.f32 %v1657, %v3289
      %v3573 = vmul.f32 %v1658, %v3294
      %v3574 = vmul.f32 %v1659, %v3294
      %v3575 = vmul.f32 %v1660, %v3299
      %v3576 = vmul.f32 %v1661, %v3299
      %v3577 = vmul.f32 %v1662, %v3304
      %v3578 = vmul.f32 %v1663, %v3304
      %v3579 = vmul.f32 %v1664, %v3309
      %v3580 = vmul.f32 %v1665, %v3309
      %v3581 = vmul.f32 %v1666, %v3314
      %v3582 = vmul.f32 %v1667, %v3314
      %v3583 = vmul.f32 %v1668, %v3319
      %v3584 = vmul.f32 %v1669, %v3319
      %v3585 = vmul.f32 %v1670, %v3324
      %v3586 = vmul.f32 %v1671, %v3324
      %v3587 = vmul.f32 %v1672, %v3329
      %v3588 = vmul.f32 %v1673, %v3329
      %v3589 = vmul.f32 %v1674, %v3334
      %v3590 = vmul.f32 %v1675, %v3334
      %v3591 = vmul.f32 %v1676, %v3339
      %v3592 = vmul.f32 %v1677, %v3339
      %v3593 = vmul.f32 %v1678, %v3344
      %v3594 = vmul.f32 %v1679, %v3344
      %v3595 = vmul.f32 %v1680, %v3349
      %v3596 = vmul.f32 %v1681, %v3349
      %v3597 = vmul.f32 %v1682, %v3354
      %v3598 = vmul.f32 %v1683, %v3354
      %v3599 = vmul.f32 %v1684, %v3359
      %v3600 = vmul.f32 %v1685, %v3359
      %v3601 = vmul.f32 %v1686, %v3364
      %v3602 = vmul.f32 %v1687, %v3364
      %v3603 = vmul.f32 %v1688, %v3369
      %v3604 = vmul.f32 %v1689, %v3369
      %v3605 = vmul.f32 %v1690, %v3374
      %v3606 = vmul.f32 %v1691, %v3374
      %v3607 = vmul.f32 %v1692, %v3379
      %v3608 = vmul.f32 %v1693, %v3379
      %v3609 = vmul.f32 %v1694, %v3384
      %v3610 = vmul.f32 %v1695, %v3384
      %v3611 = vmul.f32 %v1696, %v3389
      %v3612 = vmul.f32 %v1697, %v3389
      %v3613 = vmul.f32 %v1698, %v3394
      %v3614 = vmul.f32 %v1699, %v3394
      %v3615 = vmul.f32 %v1700, %v3399
      %v3616 = vmul.f32 %v1701, %v3399
      %v3617 = vmul.f32 %v1702, %v3404
      %v3618 = vmul.f32 %v1703, %v3404
      %v3619 = vmul.f32 %v1704, %v3409
      %v3620 = vmul.f32 %v1705, %v3409
      %v3621 = vmul.f32 %v1706, %v3414
      %v3622 = vmul.f32 %v1707, %v3414
      %v3623 = vmul.f32 %v1708, %v3419
      %v3624 = vmul.f32 %v1709, %v3419
      %v3625 = vmul.f32 %v1710, %v3424
      %v3626 = vmul.f32 %v1711, %v3424
      %v3627 = vmul.f32 %v1712, %v3429
      %v3628 = vmul.f32 %v1713, %v3429
      %v3629 = vmul.f32 %v1714, %v3434
      %v3630 = vmul.f32 %v1715, %v3434
      %v3631 = vmul.f32 %v1716, %v3439
      %v3632 = vmul.f32 %v1717, %v3439
      %v3633 = vmul.f32 %v1718, %v3444
      %v3634 = vmul.f32 %v1719, %v3444
      %v3635 = vmul.f32 %v1720, %v3449
      %v3636 = vmul.f32 %v1721, %v3449
      %v3637 = vmul.f32 %v1722, %v3454
      %v3638 = vmul.f32 %v1723, %v3454
      %v3639 = vmul.f32 %v1724, %v3459
      %v3640 = vmul.f32 %v1725, %v3459
      %v3641 = vmul.f32 %v1726, %v3464
      %v3642 = vmul.f32 %v1727, %v3464
      %v3643 = vmul.f32 %v1728, %v3469
      %v3644 = vmul.f32 %v1729, %v3469
      %v3645 = vmul.f32 %v1730, %v3474
      %v3646 = vmul.f32 %v1731, %v3474
      %v3647 = vmul.f32 %v1732, %v3479
      %v3648 = vmul.f32 %v1733, %v3479
      %3650 = vset.pattern.permute.xlu0 1
      %3651 = vperm.xlu0 %3650, %v2725
      %v3652 = vpop.permute.xlu0 %3651
      %3655 = vset.pattern.permute.xlu0 1
      %3656 = vperm.xlu0 %3655, %v2726
      %v3657 = vpop.permute.xlu0 %3656
      %3660 = vset.pattern.permute.xlu0 1
      %3661 = vperm.xlu0 %3660, %v2727
      %v3662 = vpop.permute.xlu0 %3661
      %3665 = vset.pattern.permute.xlu0 1
      %3666 = vperm.xlu0 %3665, %v2728
      %v3667 = vpop.permute.xlu0 %3666
      %3670 = vset.pattern.permute.xlu0 1
      %3671 = vperm.xlu0 %3670, %v2729
      %v3672 = vpop.permute.xlu0 %3671
      %3675 = vset.pattern.permute.xlu0 1
      %3676 = vperm.xlu0 %3675, %v2730
      %v3677 = vpop.permute.xlu0 %3676
      %3680 = vset.pattern.permute.xlu0 1
      %3681 = vperm.xlu0 %3680, %v2731
      %v3682 = vpop.permute.xlu0 %3681
      %3685 = vset.pattern.permute.xlu0 1
      %3686 = vperm.xlu0 %3685, %v2732
      %v3687 = vpop.permute.xlu0 %3686
      %3690 = vset.pattern.permute.xlu0 1
      %3691 = vperm.xlu0 %3690, %v2733
      %v3692 = vpop.permute.xlu0 %3691
      %3695 = vset.pattern.permute.xlu0 1
      %3696 = vperm.xlu0 %3695, %v2734
      %v3697 = vpop.permute.xlu0 %3696
      %3700 = vset.pattern.permute.xlu0 1
      %3701 = vperm.xlu0 %3700, %v2735
      %v3702 = vpop.permute.xlu0 %3701
      %3705 = vset.pattern.permute.xlu0 1
      %3706 = vperm.xlu0 %3705, %v2736
      %v3707 = vpop.permute.xlu0 %3706
      %3710 = vset.pattern.permute.xlu0 1
      %3711 = vperm.xlu0 %3710, %v2737
      %v3712 = vpop.permute.xlu0 %3711
      %3715 = vset.pattern.permute.xlu0 1
      %3716 = vperm.xlu0 %3715, %v2738
      %v3717 = vpop.permute.xlu0 %3716
      %3720 = vset.pattern.permute.xlu0 1
      %3721 = vperm.xlu0 %3720, %v2739
      %v3722 = vpop.permute.xlu0 %3721
      %3725 = vset.pattern.permute.xlu0 1
      %3726 = vperm.xlu0 %3725, %v2740
      %v3727 = vpop.permute.xlu0 %3726
      %3730 = vset.pattern.permute.xlu0 1
      %3731 = vperm.xlu0 %3730, %v2741
      %v3732 = vpop.permute.xlu0 %3731
      %3735 = vset.pattern.permute.xlu0 1
      %3736 = vperm.xlu0 %3735, %v2742
      %v3737 = vpop.permute.xlu0 %3736
      %3740 = vset.pattern.permute.xlu0 1
      %3741 = vperm.xlu0 %3740, %v2743
      %v3742 = vpop.permute.xlu0 %3741
      %3745 = vset.pattern.permute.xlu0 1
      %3746 = vperm.xlu0 %3745, %v2744
      %v3747 = vpop.permute.xlu0 %3746
      %3750 = vset.pattern.permute.xlu0 1
      %3751 = vperm.xlu0 %3750, %v2745
      %v3752 = vpop.permute.xlu0 %3751
      %3755 = vset.pattern.permute.xlu0 1
      %3756 = vperm.xlu0 %3755, %v2746
      %v3757 = vpop.permute.xlu0 %3756
      %3760 = vset.pattern.permute.xlu0 1
      %3761 = vperm.xlu0 %3760, %v2747
      %v3762 = vpop.permute.xlu0 %3761
      %3765 = vset.pattern.permute.xlu0 1
      %3766 = vperm.xlu0 %3765, %v2748
      %v3767 = vpop.permute.xlu0 %3766
      %3770 = vset.pattern.permute.xlu0 1
      %3771 = vperm.xlu0 %3770, %v2749
      %v3772 = vpop.permute.xlu0 %3771
      %3775 = vset.pattern.permute.xlu0 1
      %3776 = vperm.xlu0 %3775, %v2750
      %v3777 = vpop.permute.xlu0 %3776
      %3780 = vset.pattern.permute.xlu0 1
      %3781 = vperm.xlu0 %3780, %v2751
      %v3782 = vpop.permute.xlu0 %3781
      %3785 = vset.pattern.permute.xlu0 1
      %3786 = vperm.xlu0 %3785, %v2752
      %v3787 = vpop.permute.xlu0 %3786
      %3790 = vset.pattern.permute.xlu0 1
      %3791 = vperm.xlu0 %3790, %v2753
      %v3792 = vpop.permute.xlu0 %3791
      %3795 = vset.pattern.permute.xlu0 1
      %3796 = vperm.xlu0 %3795, %v2754
      %v3797 = vpop.permute.xlu0 %3796
      %3800 = vset.pattern.permute.xlu0 1
      %3801 = vperm.xlu0 %3800, %v2755
      %v3802 = vpop.permute.xlu0 %3801
      %3805 = vset.pattern.permute.xlu0 1
      %3806 = vperm.xlu0 %3805, %v2756
      %v3807 = vpop.permute.xlu0 %3806
      %3810 = vset.pattern.permute.xlu0 1
      %3811 = vperm.xlu0 %3810, %v2757
      %v3812 = vpop.permute.xlu0 %3811
      %3815 = vset.pattern.permute.xlu0 1
      %3816 = vperm.xlu0 %3815, %v2758
      %v3817 = vpop.permute.xlu0 %3816
      %3820 = vset.pattern.permute.xlu0 1
      %3821 = vperm.xlu0 %3820, %v2759
      %v3822 = vpop.permute.xlu0 %3821
      %3825 = vset.pattern.permute.xlu0 1
      %3826 = vperm.xlu0 %3825, %v2760
      %v3827 = vpop.permute.xlu0 %3826
      %3830 = vset.pattern.permute.xlu0 1
      %3831 = vperm.xlu0 %3830, %v2761
      %v3832 = vpop.permute.xlu0 %3831
      %3835 = vset.pattern.permute.xlu0 1
      %3836 = vperm.xlu0 %3835, %v2762
      %v3837 = vpop.permute.xlu0 %3836
      %3840 = vset.pattern.permute.xlu0 1
      %3841 = vperm.xlu0 %3840, %v2763
      %v3842 = vpop.permute.xlu0 %3841
      %3845 = vset.pattern.permute.xlu0 1
      %3846 = vperm.xlu0 %3845, %v2764
      %v3847 = vpop.permute.xlu0 %3846
      %3850 = vset.pattern.permute.xlu0 1
      %3851 = vperm.xlu0 %3850, %v2765
      %v3852 = vpop.permute.xlu0 %3851
      %3855 = vset.pattern.permute.xlu0 1
      %3856 = vperm.xlu0 %3855, %v2766
      %v3857 = vpop.permute.xlu0 %3856
      %3860 = vset.pattern.permute.xlu0 1
      %3861 = vperm.xlu0 %3860, %v2767
      %v3862 = vpop.permute.xlu0 %3861
      %3865 = vset.pattern.permute.xlu0 1
      %3866 = vperm.xlu0 %3865, %v2768
      %v3867 = vpop.permute.xlu0 %3866
      %3870 = vset.pattern.permute.xlu0 1
      %3871 = vperm.xlu0 %3870, %v2769
      %v3872 = vpop.permute.xlu0 %3871
      %3875 = vset.pattern.permute.xlu0 1
      %3876 = vperm.xlu0 %3875, %v2770
      %v3877 = vpop.permute.xlu0 %3876
      %3880 = vset.pattern.permute.xlu0 1
      %3881 = vperm.xlu0 %3880, %v2771
      %v3882 = vpop.permute.xlu0 %3881
      %3885 = vset.pattern.permute.xlu0 1
      %3886 = vperm.xlu0 %3885, %v2772
      %v3887 = vpop.permute.xlu0 %3886
      %3890 = vset.pattern.permute.xlu0 1
      %3891 = vperm.xlu0 %3890, %v2773
      %v3892 = vpop.permute.xlu0 %3891
      %3895 = vset.pattern.permute.xlu0 1
      %3896 = vperm.xlu0 %3895, %v2774
      %v3897 = vpop.permute.xlu0 %3896
      %3900 = vset.pattern.permute.xlu0 1
      %3901 = vperm.xlu0 %3900, %v2775
      %v3902 = vpop.permute.xlu0 %3901
      %3905 = vset.pattern.permute.xlu0 1
      %3906 = vperm.xlu0 %3905, %v2776
      %v3907 = vpop.permute.xlu0 %3906
      %3910 = vset.pattern.permute.xlu0 1
      %3911 = vperm.xlu0 %3910, %v2777
      %v3912 = vpop.permute.xlu0 %3911
      %3915 = vset.pattern.permute.xlu0 1
      %3916 = vperm.xlu0 %3915, %v2778
      %v3917 = vpop.permute.xlu0 %3916
      %3920 = vset.pattern.permute.xlu0 1
      %3921 = vperm.xlu0 %3920, %v2779
      %v3922 = vpop.permute.xlu0 %3921
      %3925 = vset.pattern.permute.xlu0 1
      %3926 = vperm.xlu0 %3925, %v2780
      %v3927 = vpop.permute.xlu0 %3926
      %3930 = vset.pattern.permute.xlu0 1
      %3931 = vperm.xlu0 %3930, %v2781
      %v3932 = vpop.permute.xlu0 %3931
      %3935 = vset.pattern.permute.xlu0 1
      %3936 = vperm.xlu0 %3935, %v2782
      %v3937 = vpop.permute.xlu0 %3936
      %3940 = vset.pattern.permute.xlu0 1
      %3941 = vperm.xlu0 %3940, %v2783
      %v3942 = vpop.permute.xlu0 %3941
      %3945 = vset.pattern.permute.xlu0 1
      %3946 = vperm.xlu0 %3945, %v2784
      %v3947 = vpop.permute.xlu0 %3946
      %3950 = vset.pattern.permute.xlu0 1
      %3951 = vperm.xlu0 %3950, %v2785
      %v3952 = vpop.permute.xlu0 %3951
      %3955 = vset.pattern.permute.xlu0 1
      %3956 = vperm.xlu0 %3955, %v2786
      %v3957 = vpop.permute.xlu0 %3956
      %3960 = vset.pattern.permute.xlu0 1
      %3961 = vperm.xlu0 %3960, %v2787
      %v3962 = vpop.permute.xlu0 %3961
      %3965 = vset.pattern.permute.xlu0 1
      %3966 = vperm.xlu0 %3965, %v2788
      %v3967 = vpop.permute.xlu0 %3966
      %3970 = vset.pattern.permute.xlu0 1
      %3971 = vperm.xlu0 %3970, %v2789
      %v3972 = vpop.permute.xlu0 %3971
      %3975 = vset.pattern.permute.xlu0 1
      %3976 = vperm.xlu0 %3975, %v2790
      %v3977 = vpop.permute.xlu0 %3976
      %3980 = vset.pattern.permute.xlu0 1
      %3981 = vperm.xlu0 %3980, %v2791
      %v3982 = vpop.permute.xlu0 %3981
      %3985 = vset.pattern.permute.xlu0 1
      %3986 = vperm.xlu0 %3985, %v2792
      %v3987 = vpop.permute.xlu0 %3986
      %3990 = vset.pattern.permute.xlu0 1
      %3991 = vperm.xlu0 %3990, %v2793
      %v3992 = vpop.permute.xlu0 %3991
      %3995 = vset.pattern.permute.xlu0 1
      %3996 = vperm.xlu0 %3995, %v2794
      %v3997 = vpop.permute.xlu0 %3996
      %4000 = vset.pattern.permute.xlu0 1
      %4001 = vperm.xlu0 %4000, %v2795
      %v4002 = vpop.permute.xlu0 %4001
      %4005 = vset.pattern.permute.xlu0 1
      %4006 = vperm.xlu0 %4005, %v2796
      %v4007 = vpop.permute.xlu0 %4006
      %4010 = vset.pattern.permute.xlu0 1
      %4011 = vperm.xlu0 %4010, %v2797
      %v4012 = vpop.permute.xlu0 %4011
      %4015 = vset.pattern.permute.xlu0 1
      %4016 = vperm.xlu0 %4015, %v2798
      %v4017 = vpop.permute.xlu0 %4016
      %4020 = vset.pattern.permute.xlu0 1
      %4021 = vperm.xlu0 %4020, %v2799
      %v4022 = vpop.permute.xlu0 %4021
      %4025 = vset.pattern.permute.xlu0 1
      %4026 = vperm.xlu0 %4025, %v2800
      %v4027 = vpop.permute.xlu0 %4026
      %4030 = vset.pattern.permute.xlu0 1
      %4031 = vperm.xlu0 %4030, %v2801
      %v4032 = vpop.permute.xlu0 %4031
      %4035 = vset.pattern.permute.xlu0 1
      %4036 = vperm.xlu0 %4035, %v2802
      %v4037 = vpop.permute.xlu0 %4036
      %4040 = vset.pattern.permute.xlu0 1
      %4041 = vperm.xlu0 %4040, %v2803
      %v4042 = vpop.permute.xlu0 %4041
      %4045 = vset.pattern.permute.xlu0 1
      %4046 = vperm.xlu0 %4045, %v2804
      %v4047 = vpop.permute.xlu0 %4046
      %4050 = vset.pattern.permute.xlu0 1
      %4051 = vperm.xlu0 %4050, %v2805
      %v4052 = vpop.permute.xlu0 %4051
      %4055 = vset.pattern.permute.xlu0 1
      %4056 = vperm.xlu0 %4055, %v2806
      %v4057 = vpop.permute.xlu0 %4056
      %4060 = vset.pattern.permute.xlu0 1
      %4061 = vperm.xlu0 %4060, %v2807
      %v4062 = vpop.permute.xlu0 %4061
      %4065 = vset.pattern.permute.xlu0 1
      %4066 = vperm.xlu0 %4065, %v2808
      %v4067 = vpop.permute.xlu0 %4066
      %v4069 = vadd.f32 %v3481, %v3652
      %v4070 = vadd.f32 %v3482, %v3652
      %v4071 = vadd.f32 %v3483, %v3657
      %v4072 = vadd.f32 %v3484, %v3657
      %v4073 = vadd.f32 %v3485, %v3662
      %v4074 = vadd.f32 %v3486, %v3662
      %v4075 = vadd.f32 %v3487, %v3667
      %v4076 = vadd.f32 %v3488, %v3667
      %v4077 = vadd.f32 %v3489, %v3672
      %v4078 = vadd.f32 %v3490, %v3672
      %v4079 = vadd.f32 %v3491, %v3677
      %v4080 = vadd.f32 %v3492, %v3677
      %v4081 = vadd.f32 %v3493, %v3682
      %v4082 = vadd.f32 %v3494, %v3682
      %v4083 = vadd.f32 %v3495, %v3687
      %v4084 = vadd.f32 %v3496, %v3687
      %v4085 = vadd.f32 %v3497, %v3692
      %v4086 = vadd.f32 %v3498, %v3692
      %v4087 = vadd.f32 %v3499, %v3697
      %v4088 = vadd.f32 %v3500, %v3697
      %v4089 = vadd.f32 %v3501, %v3702
      %v4090 = vadd.f32 %v3502, %v3702
      %v4091 = vadd.f32 %v3503, %v3707
      %v4092 = vadd.f32 %v3504, %v3707
      %v4093 = vadd.f32 %v3505, %v3712
      %v4094 = vadd.f32 %v3506, %v3712
      %v4095 = vadd.f32 %v3507, %v3717
      %v4096 = vadd.f32 %v3508, %v3717
      %v4097 = vadd.f32 %v3509, %v3722
      %v4098 = vadd.f32 %v3510, %v3722
      %v4099 = vadd.f32 %v3511, %v3727
      %v4100 = vadd.f32 %v3512, %v3727
      %v4101 = vadd.f32 %v3513, %v3732
      %v4102 = vadd.f32 %v3514, %v3732
      %v4103 = vadd.f32 %v3515, %v3737
      %v4104 = vadd.f32 %v3516, %v3737
      %v4105 = vadd.f32 %v3517, %v3742
      %v4106 = vadd.f32 %v3518, %v3742
      %v4107 = vadd.f32 %v3519, %v3747
      %v4108 = vadd.f32 %v3520, %v3747
      %v4109 = vadd.f32 %v3521, %v3752
      %v4110 = vadd.f32 %v3522, %v3752
      %v4111 = vadd.f32 %v3523, %v3757
      %v4112 = vadd.f32 %v3524, %v3757
      %v4113 = vadd.f32 %v3525, %v3762
      %v4114 = vadd.f32 %v3526, %v3762
      %v4115 = vadd.f32 %v3527, %v3767
      %v4116 = vadd.f32 %v3528, %v3767
      %v4117 = vadd.f32 %v3529, %v3772
      %v4118 = vadd.f32 %v3530, %v3772
      %v4119 = vadd.f32 %v3531, %v3777
      %v4120 = vadd.f32 %v3532, %v3777
      %v4121 = vadd.f32 %v3533, %v3782
      %v4122 = vadd.f32 %v3534, %v3782
      %v4123 = vadd.f32 %v3535, %v3787
      %v4124 = vadd.f32 %v3536, %v3787
      %v4125 = vadd.f32 %v3537, %v3792
      %v4126 = vadd.f32 %v3538, %v3792
      %v4127 = vadd.f32 %v3539, %v3797
      %v4128 = vadd.f32 %v3540, %v3797
      %v4129 = vadd.f32 %v3541, %v3802
      %v4130 = vadd.f32 %v3542, %v3802
      %v4131 = vadd.f32 %v3543, %v3807
      %v4132 = vadd.f32 %v3544, %v3807
      %v4133 = vadd.f32 %v3545, %v3812
      %v4134 = vadd.f32 %v3546, %v3812
      %v4135 = vadd.f32 %v3547, %v3817
      %v4136 = vadd.f32 %v3548, %v3817
      %v4137 = vadd.f32 %v3549, %v3822
      %v4138 = vadd.f32 %v3550, %v3822
      %v4139 = vadd.f32 %v3551, %v3827
      %v4140 = vadd.f32 %v3552, %v3827
      %v4141 = vadd.f32 %v3553, %v3832
      %v4142 = vadd.f32 %v3554, %v3832
      %v4143 = vadd.f32 %v3555, %v3837
      %v4144 = vadd.f32 %v3556, %v3837
      %v4145 = vadd.f32 %v3557, %v3842
      %v4146 = vadd.f32 %v3558, %v3842
      %v4147 = vadd.f32 %v3559, %v3847
      %v4148 = vadd.f32 %v3560, %v3847
      %v4149 = vadd.f32 %v3561, %v3852
      %v4150 = vadd.f32 %v3562, %v3852
      %v4151 = vadd.f32 %v3563, %v3857
      %v4152 = vadd.f32 %v3564, %v3857
      %v4153 = vadd.f32 %v3565, %v3862
      %v4154 = vadd.f32 %v3566, %v3862
      %v4155 = vadd.f32 %v3567, %v3867
      %v4156 = vadd.f32 %v3568, %v3867
      %v4157 = vadd.f32 %v3569, %v3872
      %v4158 = vadd.f32 %v3570, %v3872
      %v4159 = vadd.f32 %v3571, %v3877
      %v4160 = vadd.f32 %v3572, %v3877
      %v4161 = vadd.f32 %v3573, %v3882
      %v4162 = vadd.f32 %v3574, %v3882
      %v4163 = vadd.f32 %v3575, %v3887
      %v4164 = vadd.f32 %v3576, %v3887
      %v4165 = vadd.f32 %v3577, %v3892
      %v4166 = vadd.f32 %v3578, %v3892
      %v4167 = vadd.f32 %v3579, %v3897
      %v4168 = vadd.f32 %v3580, %v3897
      %v4169 = vadd.f32 %v3581, %v3902
      %v4170 = vadd.f32 %v3582, %v3902
      %v4171 = vadd.f32 %v3583, %v3907
      %v4172 = vadd.f32 %v3584, %v3907
      %v4173 = vadd.f32 %v3585, %v3912
      %v4174 = vadd.f32 %v3586, %v3912
      %v4175 = vadd.f32 %v3587, %v3917
      %v4176 = vadd.f32 %v3588, %v3917
      %v4177 = vadd.f32 %v3589, %v3922
      %v4178 = vadd.f32 %v3590, %v3922
      %v4179 = vadd.f32 %v3591, %v3927
      %v4180 = vadd.f32 %v3592, %v3927
      %v4181 = vadd.f32 %v3593, %v3932
      %v4182 = vadd.f32 %v3594, %v3932
      %v4183 = vadd.f32 %v3595, %v3937
      %v4184 = vadd.f32 %v3596, %v3937
      %v4185 = vadd.f32 %v3597, %v3942
      %v4186 = vadd.f32 %v3598, %v3942
      %v4187 = vadd.f32 %v3599, %v3947
      %v4188 = vadd.f32 %v3600, %v3947
      %v4189 = vadd.f32 %v3601, %v3952
      %v4190 = vadd.f32 %v3602, %v3952
      %v4191 = vadd.f32 %v3603, %v3957
      %v4192 = vadd.f32 %v3604, %v3957
      %v4193 = vadd.f32 %v3605, %v3962
      %v4194 = vadd.f32 %v3606, %v3962
      %v4195 = vadd.f32 %v3607, %v3967
      %v4196 = vadd.f32 %v3608, %v3967
      %v4197 = vadd.f32 %v3609, %v3972
      %v4198 = vadd.f32 %v3610, %v3972
      %v4199 = vadd.f32 %v3611, %v3977
      %v4200 = vadd.f32 %v3612, %v3977
      %v4201 = vadd.f32 %v3613, %v3982
      %v4202 = vadd.f32 %v3614, %v3982
      %v4203 = vadd.f32 %v3615, %v3987
      %v4204 = vadd.f32 %v3616, %v3987
      %v4205 = vadd.f32 %v3617, %v3992
      %v4206 = vadd.f32 %v3618, %v3992
      %v4207 = vadd.f32 %v3619, %v3997
      %v4208 = vadd.f32 %v3620, %v3997
      %v4209 = vadd.f32 %v3621, %v4002
      %v4210 = vadd.f32 %v3622, %v4002
      %v4211 = vadd.f32 %v3623, %v4007
      %v4212 = vadd.f32 %v3624, %v4007
      %v4213 = vadd.f32 %v3625, %v4012
      %v4214 = vadd.f32 %v3626, %v4012
      %v4215 = vadd.f32 %v3627, %v4017
      %v4216 = vadd.f32 %v3628, %v4017
      %v4217 = vadd.f32 %v3629, %v4022
      %v4218 = vadd.f32 %v3630, %v4022
      %v4219 = vadd.f32 %v3631, %v4027
      %v4220 = vadd.f32 %v3632, %v4027
      %v4221 = vadd.f32 %v3633, %v4032
      %v4222 = vadd.f32 %v3634, %v4032
      %v4223 = vadd.f32 %v3635, %v4037
      %v4224 = vadd.f32 %v3636, %v4037
      %v4225 = vadd.f32 %v3637, %v4042
      %v4226 = vadd.f32 %v3638, %v4042
      %v4227 = vadd.f32 %v3639, %v4047
      %v4228 = vadd.f32 %v3640, %v4047
      %v4229 = vadd.f32 %v3641, %v4052
      %v4230 = vadd.f32 %v3642, %v4052
      %v4231 = vadd.f32 %v3643, %v4057
      %v4232 = vadd.f32 %v3644, %v4057
      %v4233 = vadd.f32 %v3645, %v4062
      %v4234 = vadd.f32 %v3646, %v4062
      %v4235 = vadd.f32 %v3647, %v4067
      %v4236 = vadd.f32 %v3648, %v4067
      %4237 = vst [vmem:[%s150] sm:$0xff] %v4069
      %4238 = vst.msk [vmem:[%s150 + $0x8] sm:$0xff] %vm320, %v4070
      %4239 = vst [vmem:[%s150 + $0x10] sm:$0xff] %v4071
      %4240 = vst.msk [vmem:[%s150 + $0x18] sm:$0xff] %vm320, %v4072
      %4241 = vst [vmem:[%s150 + $0x20] sm:$0xff] %v4073
      %4242 = vst.msk [vmem:[%s150 + $0x28] sm:$0xff] %vm320, %v4074
      %4243 = vst [vmem:[%s150 + $0x30] sm:$0xff] %v4075
      %4244 = vst.msk [vmem:[%s150 + $0x38] sm:$0xff] %vm320, %v4076
      %4245 = vst [vmem:[%s150 + $0x40] sm:$0xff] %v4077
      %4246 = vst.msk [vmem:[%s150 + $0x48] sm:$0xff] %vm320, %v4078
      %4247 = vst [vmem:[%s150 + $0x50] sm:$0xff] %v4079
      %4248 = vst.msk [vmem:[%s150 + $0x58] sm:$0xff] %vm320, %v4080
      %4249 = vst [vmem:[%s150 + $0x60] sm:$0xff] %v4081
      %4250 = vst.msk [vmem:[%s150 + $0x68] sm:$0xff] %vm320, %v4082
      %4251 = vst [vmem:[%s150 + $0x70] sm:$0xff] %v4083
      %4252 = vst.msk [vmem:[%s150 + $0x78] sm:$0xff] %vm320, %v4084
      %4253 = vst [vmem:[%s150 + $0x80] sm:$0xff] %v4085
      %4254 = vst.msk [vmem:[%s150 + $0x88] sm:$0xff] %vm320, %v4086
      %4255 = vst [vmem:[%s150 + $0x90] sm:$0xff] %v4087
      %4256 = vst.msk [vmem:[%s150 + $0x98] sm:$0xff] %vm320, %v4088
      %4257 = vst [vmem:[%s150 + $0xa0] sm:$0xff] %v4089
      %4258 = vst.msk [vmem:[%s150 + $0xa8] sm:$0xff] %vm320, %v4090
      %4259 = vst [vmem:[%s150 + $0xb0] sm:$0xff] %v4091
      %4260 = vst.msk [vmem:[%s150 + $0xb8] sm:$0xff] %vm320, %v4092
      %4261 = vst [vmem:[%s150 + $0xc0] sm:$0xff] %v4093
      %4262 = vst.msk [vmem:[%s150 + $0xc8] sm:$0xff] %vm320, %v4094
      %4263 = vst [vmem:[%s150 + $0xd0] sm:$0xff] %v4095
      %4264 = vst.msk [vmem:[%s150 + $0xd8] sm:$0xff] %vm320, %v4096
      %4265 = vst [vmem:[%s150 + $0xe0] sm:$0xff] %v4097
      %4266 = vst.msk [vmem:[%s150 + $0xe8] sm:$0xff] %vm320, %v4098
      %4267 = vst [vmem:[%s150 + $0xf0] sm:$0xff] %v4099
      %4268 = vst.msk [vmem:[%s150 + $0xf8] sm:$0xff] %vm320, %v4100
      %4269 = vst [vmem:[%s150 + $0x100] sm:$0xff] %v4101
      %4270 = vst.msk [vmem:[%s150 + $0x108] sm:$0xff] %vm320, %v4102
      %4271 = vst [vmem:[%s150 + $0x110] sm:$0xff] %v4103
      %4272 = vst.msk [vmem:[%s150 + $0x118] sm:$0xff] %vm320, %v4104
      %4273 = vst [vmem:[%s150 + $0x120] sm:$0xff] %v4105
      %4274 = vst.msk [vmem:[%s150 + $0x128] sm:$0xff] %vm320, %v4106
      %4275 = vst [vmem:[%s150 + $0x130] sm:$0xff] %v4107
      %4276 = vst.msk [vmem:[%s150 + $0x138] sm:$0xff] %vm320, %v4108
      %4277 = vst [vmem:[%s150 + $0x140] sm:$0xff] %v4109
      %4278 = vst.msk [vmem:[%s150 + $0x148] sm:$0xff] %vm320, %v4110
      %4279 = vst [vmem:[%s150 + $0x150] sm:$0xff] %v4111
      %4280 = vst.msk [vmem:[%s150 + $0x158] sm:$0xff] %vm320, %v4112
      %4281 = vst [vmem:[%s150 + $0x160] sm:$0xff] %v4113
      %4282 = vst.msk [vmem:[%s150 + $0x168] sm:$0xff] %vm320, %v4114
      %4283 = vst [vmem:[%s150 + $0x170] sm:$0xff] %v4115
      %4284 = vst.msk [vmem:[%s150 + $0x178] sm:$0xff] %vm320, %v4116
      %4285 = vst [vmem:[%s150 + $0x180] sm:$0xff] %v4117
      %4286 = vst.msk [vmem:[%s150 + $0x188] sm:$0xff] %vm320, %v4118
      %4287 = vst [vmem:[%s150 + $0x190] sm:$0xff] %v4119
      %4288 = vst.msk [vmem:[%s150 + $0x198] sm:$0xff] %vm320, %v4120
      %4289 = vst [vmem:[%s150 + $0x1a0] sm:$0xff] %v4121
      %4290 = vst.msk [vmem:[%s150 + $0x1a8] sm:$0xff] %vm320, %v4122
      %4291 = vst [vmem:[%s150 + $0x1b0] sm:$0xff] %v4123
      %4292 = vst.msk [vmem:[%s150 + $0x1b8] sm:$0xff] %vm320, %v4124
      %4293 = vst [vmem:[%s150 + $0x1c0] sm:$0xff] %v4125
      %4294 = vst.msk [vmem:[%s150 + $0x1c8] sm:$0xff] %vm320, %v4126
      %4295 = vst [vmem:[%s150 + $0x1d0] sm:$0xff] %v4127
      %4296 = vst.msk [vmem:[%s150 + $0x1d8] sm:$0xff] %vm320, %v4128
      %4297 = vst [vmem:[%s150 + $0x1e0] sm:$0xff] %v4129
      %4298 = vst.msk [vmem:[%s150 + $0x1e8] sm:$0xff] %vm320, %v4130
      %4299 = vst [vmem:[%s150 + $0x1f0] sm:$0xff] %v4131
      %4300 = vst.msk [vmem:[%s150 + $0x1f8] sm:$0xff] %vm320, %v4132
      %4301 = vst [vmem:[%s150 + $0x200] sm:$0xff] %v4133
      %4302 = vst.msk [vmem:[%s150 + $0x208] sm:$0xff] %vm320, %v4134
      %4303 = vst [vmem:[%s150 + $0x210] sm:$0xff] %v4135
      %4304 = vst.msk [vmem:[%s150 + $0x218] sm:$0xff] %vm320, %v4136
      %4305 = vst [vmem:[%s150 + $0x220] sm:$0xff] %v4137
      %4306 = vst.msk [vmem:[%s150 + $0x228] sm:$0xff] %vm320, %v4138
      %4307 = vst [vmem:[%s150 + $0x230] sm:$0xff] %v4139
      %4308 = vst.msk [vmem:[%s150 + $0x238] sm:$0xff] %vm320, %v4140
      %4309 = vst [vmem:[%s150 + $0x240] sm:$0xff] %v4141
      %4310 = vst.msk [vmem:[%s150 + $0x248] sm:$0xff] %vm320, %v4142
      %4311 = vst [vmem:[%s150 + $0x250] sm:$0xff] %v4143
      %4312 = vst.msk [vmem:[%s150 + $0x258] sm:$0xff] %vm320, %v4144
      %4313 = vst [vmem:[%s150 + $0x260] sm:$0xff] %v4145
      %4314 = vst.msk [vmem:[%s150 + $0x268] sm:$0xff] %vm320, %v4146
      %4315 = vst [vmem:[%s150 + $0x270] sm:$0xff] %v4147
      %4316 = vst.msk [vmem:[%s150 + $0x278] sm:$0xff] %vm320, %v4148
      %4317 = vst [vmem:[%s150 + $0x280] sm:$0xff] %v4149
      %4318 = vst.msk [vmem:[%s150 + $0x288] sm:$0xff] %vm320, %v4150
      %4319 = vst [vmem:[%s150 + $0x290] sm:$0xff] %v4151
      %4320 = vst.msk [vmem:[%s150 + $0x298] sm:$0xff] %vm320, %v4152
      %4321 = vst [vmem:[%s150 + $0x2a0] sm:$0xff] %v4153
      %4322 = vst.msk [vmem:[%s150 + $0x2a8] sm:$0xff] %vm320, %v4154
      %4323 = vst [vmem:[%s150 + $0x2b0] sm:$0xff] %v4155
      %4324 = vst.msk [vmem:[%s150 + $0x2b8] sm:$0xff] %vm320, %v4156
      %4325 = vst [vmem:[%s150 + $0x2c0] sm:$0xff] %v4157
      %4326 = vst.msk [vmem:[%s150 + $0x2c8] sm:$0xff] %vm320, %v4158
      %4327 = vst [vmem:[%s150 + $0x2d0] sm:$0xff] %v4159
      %4328 = vst.msk [vmem:[%s150 + $0x2d8] sm:$0xff] %vm320, %v4160
      %4329 = vst [vmem:[%s150 + $0x2e0] sm:$0xff] %v4161
      %4330 = vst.msk [vmem:[%s150 + $0x2e8] sm:$0xff] %vm320, %v4162
      %4331 = vst [vmem:[%s150 + $0x2f0] sm:$0xff] %v4163
      %4332 = vst.msk [vmem:[%s150 + $0x2f8] sm:$0xff] %vm320, %v4164
      %4333 = vst [vmem:[%s150 + $0x300] sm:$0xff] %v4165
      %4334 = vst.msk [vmem:[%s150 + $0x308] sm:$0xff] %vm320, %v4166
      %4335 = vst [vmem:[%s150 + $0x310] sm:$0xff] %v4167
      %4336 = vst.msk [vmem:[%s150 + $0x318] sm:$0xff] %vm320, %v4168
      %4337 = vst [vmem:[%s150 + $0x320] sm:$0xff] %v4169
      %4338 = vst.msk [vmem:[%s150 + $0x328] sm:$0xff] %vm320, %v4170
      %4339 = vst [vmem:[%s150 + $0x330] sm:$0xff] %v4171
      %4340 = vst.msk [vmem:[%s150 + $0x338] sm:$0xff] %vm320, %v4172
      %4341 = vst [vmem:[%s150 + $0x340] sm:$0xff] %v4173
      %4342 = vst.msk [vmem:[%s150 + $0x348] sm:$0xff] %vm320, %v4174
      %4343 = vst [vmem:[%s150 + $0x350] sm:$0xff] %v4175
      %4344 = vst.msk [vmem:[%s150 + $0x358] sm:$0xff] %vm320, %v4176
      %4345 = vst [vmem:[%s150 + $0x360] sm:$0xff] %v4177
      %4346 = vst.msk [vmem:[%s150 + $0x368] sm:$0xff] %vm320, %v4178
      %4347 = vst [vmem:[%s150 + $0x370] sm:$0xff] %v4179
      %4348 = vst.msk [vmem:[%s150 + $0x378] sm:$0xff] %vm320, %v4180
      %4349 = vst [vmem:[%s150 + $0x380] sm:$0xff] %v4181
      %4350 = vst.msk [vmem:[%s150 + $0x388] sm:$0xff] %vm320, %v4182
      %4351 = vst [vmem:[%s150 + $0x390] sm:$0xff] %v4183
      %4352 = vst.msk [vmem:[%s150 + $0x398] sm:$0xff] %vm320, %v4184
      %4353 = vst [vmem:[%s150 + $0x3a0] sm:$0xff] %v4185
      %4354 = vst.msk [vmem:[%s150 + $0x3a8] sm:$0xff] %vm320, %v4186
      %4355 = vst [vmem:[%s150 + $0x3b0] sm:$0xff] %v4187
      %4356 = vst.msk [vmem:[%s150 + $0x3b8] sm:$0xff] %vm320, %v4188
      %4357 = vst [vmem:[%s150 + $0x3c0] sm:$0xff] %v4189
      %4358 = vst.msk [vmem:[%s150 + $0x3c8] sm:$0xff] %vm320, %v4190
      %4359 = vst [vmem:[%s150 + $0x3d0] sm:$0xff] %v4191
      %4360 = vst.msk [vmem:[%s150 + $0x3d8] sm:$0xff] %vm320, %v4192
      %4361 = vst [vmem:[%s150 + $0x3e0] sm:$0xff] %v4193
      %4362 = vst.msk [vmem:[%s150 + $0x3e8] sm:$0xff] %vm320, %v4194
      %4363 = vst [vmem:[%s150 + $0x3f0] sm:$0xff] %v4195
      %4364 = vst.msk [vmem:[%s150 + $0x3f8] sm:$0xff] %vm320, %v4196
      %4365 = vst [vmem:[%s150 + $0x400] sm:$0xff] %v4197
      %4366 = vst.msk [vmem:[%s150 + $0x408] sm:$0xff] %vm320, %v4198
      %4367 = vst [vmem:[%s150 + $0x410] sm:$0xff] %v4199
      %4368 = vst.msk [vmem:[%s150 + $0x418] sm:$0xff] %vm320, %v4200
      %4369 = vst [vmem:[%s150 + $0x420] sm:$0xff] %v4201
      %4370 = vst.msk [vmem:[%s150 + $0x428] sm:$0xff] %vm320, %v4202
      %4371 = vst [vmem:[%s150 + $0x430] sm:$0xff] %v4203
      %4372 = vst.msk [vmem:[%s150 + $0x438] sm:$0xff] %vm320, %v4204
      %4373 = vst [vmem:[%s150 + $0x440] sm:$0xff] %v4205
      %4374 = vst.msk [vmem:[%s150 + $0x448] sm:$0xff] %vm320, %v4206
      %4375 = vst [vmem:[%s150 + $0x450] sm:$0xff] %v4207
      %4376 = vst.msk [vmem:[%s150 + $0x458] sm:$0xff] %vm320, %v4208
      %4377 = vst [vmem:[%s150 + $0x460] sm:$0xff] %v4209
      %4378 = vst.msk [vmem:[%s150 + $0x468] sm:$0xff] %vm320, %v4210
      %4379 = vst [vmem:[%s150 + $0x470] sm:$0xff] %v4211
      %4380 = vst.msk [vmem:[%s150 + $0x478] sm:$0xff] %vm320, %v4212
      %4381 = vst [vmem:[%s150 + $0x480] sm:$0xff] %v4213
      %4382 = vst.msk [vmem:[%s150 + $0x488] sm:$0xff] %vm320, %v4214
      %4383 = vst [vmem:[%s150 + $0x490] sm:$0xff] %v4215
      %4384 = vst.msk [vmem:[%s150 + $0x498] sm:$0xff] %vm320, %v4216
      %4385 = vst [vmem:[%s150 + $0x4a0] sm:$0xff] %v4217
      %4386 = vst.msk [vmem:[%s150 + $0x4a8] sm:$0xff] %vm320, %v4218
      %4387 = vst [vmem:[%s150 + $0x4b0] sm:$0xff] %v4219
      %4388 = vst.msk [vmem:[%s150 + $0x4b8] sm:$0xff] %vm320, %v4220
      %4389 = vst [vmem:[%s150 + $0x4c0] sm:$0xff] %v4221
      %4390 = vst.msk [vmem:[%s150 + $0x4c8] sm:$0xff] %vm320, %v4222
      %4391 = vst [vmem:[%s150 + $0x4d0] sm:$0xff] %v4223
      %4392 = vst.msk [vmem:[%s150 + $0x4d8] sm:$0xff] %vm320, %v4224
      %4393 = vst [vmem:[%s150 + $0x4e0] sm:$0xff] %v4225
      %4394 = vst.msk [vmem:[%s150 + $0x4e8] sm:$0xff] %vm320, %v4226
      %4395 = vst [vmem:[%s150 + $0x4f0] sm:$0xff] %v4227
      %4396 = vst.msk [vmem:[%s150 + $0x4f8] sm:$0xff] %vm320, %v4228
      %4397 = vst [vmem:[%s150 + $0x500] sm:$0xff] %v4229
      %4398 = vst.msk [vmem:[%s150 + $0x508] sm:$0xff] %vm320, %v4230
      %4399 = vst [vmem:[%s150 + $0x510] sm:$0xff] %v4231
      %4400 = vst.msk [vmem:[%s150 + $0x518] sm:$0xff] %vm320, %v4232
      %4401 = vst [vmem:[%s150 + $0x520] sm:$0xff] %v4233
      %4402 = vst.msk [vmem:[%s150 + $0x528] sm:$0xff] %vm320, %v4234
      %4403 = vst [vmem:[%s150 + $0x530] sm:$0xff] %v4235
      %4404 = vst.msk [vmem:[%s150 + $0x538] sm:$0xff] %vm320, %v4236
      %s4405 = smul.u32 84, %s13
      %p4406 = scmp.lt.s32.totalorder %s4405, 167
      %s4407 = scalar_select %p4406, %s4405, 167
      %s4408 = smul.addr %s4407, 2
      %s4409 = smul.addr %s4408, 8
      %s4410 = scalar_lea.vmem %s2, %s4409
      // Predicated region
      $region29: #{tpu_custom_call.1} parent=27 // pred_check
        %p4411 = pneg %p78
      $region30: #{tpu_custom_call.1} parent=27 // pred_check_branch
        %4413 = sbr.rel (%p4411) target = $region32
      $region31: #{tpu_custom_call.1} parent=27 // pred_region
        %s4414 = smul.u32 84, %s13
      $region32: #{tpu_custom_call.1} parent=27 // pred_fallthru
        _
    $region28: #{tpu_custom_call.1} parent=5 // pred_fallthru
      _
    %p4415 = scmp.le.s32.totalorder 2, %s8
    // Predicated region
    $region33: #{tpu_custom_call.1} parent=5 // pred_check
      %p4416 = pneg %p4415
    $region34: #{tpu_custom_call.1} parent=5 // pred_check_branch
      %4418 = sbr.rel (%p4416) target = $region36
    $region35: #{tpu_custom_call.1} parent=5 // pred_region
      %s4419 = ssub.s32 %s8, 2
      // Predicated region
      $region37: #{tpu_custom_call.1} parent=35 // pred_check
        %p4420 = pneg %p84
      $region38: #{tpu_custom_call.1} parent=35 // pred_check_branch
        %4422 = sbr.rel (%p4420) target = $region40
      $region39: #{tpu_custom_call.1} parent=35 // pred_region
        %s4423 = smul.u32 84, %s14
        %p4424 = scmp.lt.s32.totalorder %s4423, 167
        %s4425 = scalar_select %p4424, %s4423, 167
        %s4426 = smul.addr %s4425, 2
        %s4427 = smul.addr %s4426, 8
        %s4428 = scalar_lea.vmem %s2, %s4427
      $region40: #{tpu_custom_call.1} parent=35 // pred_fallthru
        _
    $region36: #{tpu_custom_call.1} parent=5 // pred_fallthru
      _
  $region6: #{tpu_custom_call.1} parent=0 // loop_footer
    %s12 = sadd.s32 1, %s8
  $region7: #{tpu_custom_call.1} parent=0 // loop_footer_branch
    %7 = sbr.rel target = $region3
  $region8: #{tpu_custom_call.1} parent=0 // loop_exit
    _

</llo_original>
